<compile_context>
chip_gen: v6e
topology: v6e:2x2x1
jax: 0.10.0
libtpu: 0.0.40
codegen_flags: <defaults>
</compile_context>

<pallas_src>
import functools
import math

import jax
import jax.numpy as jnp
from jax.experimental import pallas as pl
from jax.experimental.pallas import tpu as pltpu


def _window_attention_kernel(x_ref, wqkv_ref, bqkv_ref, wproj_ref, bproj_ref,
                             o_ref, *, num_heads, scale, compute_dtype):
    bw, N, C = x_ref.shape
    hd = C // num_heads

    # ---- QKV projection: (bw*N, C) @ (C, 3C) on the MXU, f32 accumulation ----
    x2 = x_ref[...].reshape(bw * N, C)
    qkv = jnp.dot(x2, wqkv_ref[...], preferred_element_type=jnp.float32)
    qkv = qkv + bqkv_ref[...]                     # (bw*N, 3C) + (1, 3C)
    qkv = qkv.reshape(bw, N, 3 * C)

    wproj = wproj_ref[...]                        # (C, C) resident, compute dtype

    # ---- per-head attention; each head's output-projection contribution is
    #      accumulated in f32 (equivalent to concat(heads) @ Wproj) ----
    out_acc = jnp.zeros((bw * N, C), dtype=jnp.float32)
    for h in range(num_heads):
        q = (qkv[:, :, h * hd:(h + 1) * hd] * scale).astype(compute_dtype)
        k = qkv[:, :, C + h * hd:C + (h + 1) * hd].astype(compute_dtype)
        v = qkv[:, :, 2 * C + h * hd:2 * C + (h + 1) * hd].astype(compute_dtype)

        s = jnp.einsum('bnd,bmd->bnm', q, k,
                       preferred_element_type=jnp.float32)      # (bw, N, N)
        s = s - jnp.max(s, axis=-1, keepdims=True)
        p = jnp.exp(s)
        p = p / jnp.sum(p, axis=-1, keepdims=True)

        oh = jnp.einsum('bnm,bmd->bnd', p.astype(compute_dtype), v,
                        preferred_element_type=jnp.float32)     # (bw, N, hd)

        out_acc = out_acc + jnp.dot(
            oh.reshape(bw * N, hd).astype(compute_dtype),
            wproj[h * hd:(h + 1) * hd, :],
            preferred_element_type=jnp.float32)

    out = out_acc + bproj_ref[...]                # (bw*N, C) + (1, C)
    o_ref[...] = out.reshape(bw, N, C).astype(o_ref.dtype)


def window_attention_pallas(x, wqkv, bqkv, wproj, bproj, *, num_heads,
                            windows_per_step=None,
                            compute_dtype=jnp.bfloat16):
    """x: [B, N, C]; wqkv: [C, 3C]; bqkv: [3C]; wproj: [C, C]; bproj: [C]."""
    B, N, C = x.shape
    assert C % num_heads == 0
    assert wqkv.shape == (C, 3 * C) and wproj.shape == (C, C)
    orig_dtype = x.dtype
    scale = float(C) ** -0.5          # matches torch: dim ** (-0.5), full dim

    if windows_per_step is None:
        # Target >= 256 tokens per grid step (MXU occupancy, amortize the
        # ~0.35us per-step overhead) while keeping the grid evenly divisible.
        bw = min(B, max(1, 256 // N))
        while B % bw != 0:
            bw -= 1
    else:
        bw = windows_per_step
        assert B % bw == 0

    # bf16 matmul operands with f32 accumulation: full MXU rate on v6e/v7x and
    # half the resident weight footprint in VMEM; biases stay f32.
    xc = x.astype(compute_dtype)
    wqkv_c = wqkv.astype(compute_dtype)
    wproj_c = wproj.astype(compute_dtype)
    bqkv_2 = bqkv.reshape(1, 3 * C).astype(jnp.float32)
    bproj_2 = bproj.reshape(1, C).astype(jnp.float32)

    kernel = functools.partial(_window_attention_kernel,
                               num_heads=num_heads, scale=scale,
                               compute_dtype=compute_dtype)

    return pl.pallas_call(
        kernel,
        out_shape=jax.ShapeDtypeStruct((B, N, C), orig_dtype),
        grid_spec=pltpu.PrefetchScalarGridSpec(
            num_scalar_prefetch=0,
            grid=(B // bw,),
            in_specs=[
                pl.BlockSpec((bw, N, C), lambda i: (i, 0, 0)),   # x tile
                pl.BlockSpec((C, 3 * C), lambda i: (0, 0)),      # Wqkv (resident)
                pl.BlockSpec((1, 3 * C), lambda i: (0, 0)),      # bqkv
                pl.BlockSpec((C, C), lambda i: (0, 0)),          # Wproj (resident)
                pl.BlockSpec((1, C), lambda i: (0, 0)),          # bproj
            ],
            out_specs=pl.BlockSpec((bw, N, C), lambda i: (i, 0, 0)),
        ),
        compiler_params=pltpu.CompilerParams(
            # window axis is independent -> sharded across the 2 TCs on v7x
            dimension_semantics=("parallel",),
            # raise the scoped-VMEM ceiling (16 MiB default on v5e) while
            # keeping headroom under v7x's 64 MiB physical VMEM.
            vmem_limit_bytes=48 * 1024 * 1024,
        ),
        # TODO(synk): for very large C/3C the constant-index weight BlockSpecs
        # could use pipeline_mode=pl.Buffered(1) to avoid wasted double-buffer
        # VMEM; at these sizes the weights are tiny so defaults are kept.
    )(xc, wqkv_c, bqkv_2, wproj_c, bproj_2)


def _window_attention_ref(x, wqkv, bqkv, wproj, bproj, *, num_heads,
                          compute_dtype=jnp.bfloat16):
    """Plain-JAX reference mirroring the kernel's mixed-precision numerics."""
    B, N, C = x.shape
    hd = C // num_heads
    scale = float(C) ** -0.5

    xc = x.astype(compute_dtype)
    qkv = jnp.dot(xc.reshape(B * N, C), wqkv.astype(compute_dtype),
                  preferred_element_type=jnp.float32) + bqkv.astype(jnp.float32)
    qkv = qkv.reshape(B, N, 3, num_heads, hd).transpose(2, 0, 3, 1, 4)
    q = (qkv[0] * scale).astype(compute_dtype)
    k = qkv[1].astype(compute_dtype)
    v = qkv[2].astype(compute_dtype)

    s = jnp.einsum('bhnd,bhmd->bhnm', q, k, preferred_element_type=jnp.float32)
    s = s - jnp.max(s, axis=-1, keepdims=True)
    p = jnp.exp(s)
    p = p / jnp.sum(p, axis=-1, keepdims=True)

    o = jnp.einsum('bhnm,bhmd->bhnd', p.astype(compute_dtype), v,
                   preferred_element_type=jnp.float32)
    o = o.transpose(0, 2, 1, 3).reshape(B * N, C)
    o = jnp.dot(o.astype(compute_dtype), wproj.astype(compute_dtype),
                preferred_element_type=jnp.float32) + bproj.astype(jnp.float32)
    return o.reshape(B, N, C).astype(x.dtype)


def _init_params(key, dim):
    # Deterministic init mimicking nn.Linear (uniform +- 1/sqrt(fan_in)),
    # stored pre-transposed as [in, out] so the kernel computes x @ W.
    k1, k2, k3, k4 = jax.random.split(key, 4)
    lim = 1.0 / math.sqrt(dim)
    wqkv = jax.random.uniform(k1, (dim, 3 * dim), minval=-lim, maxval=lim,
                              dtype=jnp.float32)
    bqkv = jax.random.uniform(k2, (3 * dim,), minval=-lim, maxval=lim,
                              dtype=jnp.float32)
    wproj = jax.random.uniform(k3, (dim, dim), minval=-lim, maxval=lim,
                               dtype=jnp.float32)
    bproj = jax.random.uniform(k4, (dim,), minval=-lim, maxval=lim,
                               dtype=jnp.float32)
    return wqkv, bqkv, wproj, bproj


if __name__ == "__main__":
    key = jax.random.PRNGKey(0)
    kx, kp = jax.random.split(key)

    # 8 windows of an 8x8 window (N = 64 tokens each), dim = 128, 4 heads.
    B, N, C, num_heads = 8, 64, 128, 4
    x = jax.random.normal(kx, (B, N, C), dtype=jnp.float32)
    wqkv, bqkv, wproj, bproj = _init_params(kp, C)

    out = window_attention_pallas(x, wqkv, bqkv, wproj, bproj,
                                  num_heads=num_heads)
    out = jax.block_until_ready(out)

    ref = _window_attention_ref(x, wqkv, bqkv, wproj, bproj,
                                num_heads=num_heads)
    assert out.shape == ref.shape
    max_err = float(jnp.max(jnp.abs(out - ref)))
    assert jnp.allclose(out, ref, atol=2e-2, rtol=2e-2), \
        f"mismatch vs reference (max abs err {max_err})"

    print("KERNEL_OK")
</pallas_src>

<mosaic_0001>
module attributes {stable_mosaic.version = 11 : i64} {
  func.func @_window_attention_kernel(%arg0: i32, %arg1: memref<4x64x128xbf16, #tpu.memory_space<vmem>>, %arg2: memref<128x384xbf16, #tpu.memory_space<vmem>>, %arg3: memref<1x384xf32, #tpu.memory_space<vmem>>, %arg4: memref<128x128xbf16, #tpu.memory_space<vmem>>, %arg5: memref<1x128xf32, #tpu.memory_space<vmem>>, %arg6: memref<4x64x128xf32, #tpu.memory_space<vmem>>) attributes {dimension_semantics = [#tpu.dimension_semantics<parallel>], iteration_bounds = array<i64: 2>, scalar_prefetch = 0 : i64, scratch_operands = 0 : i64, tpu.core_type = #tpu.core_type<tc>, window_params = [{transform_indices = @transform_0, window_bounds = array<i64: 4, 64, 128>}, {pipeline_mode = #tpu.pipeline_mode<synchronous>, transform_indices = @transform_1, window_bounds = array<i64: 128, 384>}, {pipeline_mode = #tpu.pipeline_mode<synchronous>, transform_indices = @transform_2, window_bounds = array<i64: 1, 384>}, {pipeline_mode = #tpu.pipeline_mode<synchronous>, transform_indices = @transform_3, window_bounds = array<i64: 128, 128>}, {pipeline_mode = #tpu.pipeline_mode<synchronous>, transform_indices = @transform_4, window_bounds = array<i64: 1, 128>}, {transform_indices = @transform_5, window_bounds = array<i64: 4, 64, 128>}]} {
    %c0 = arith.constant 0 : index
    %c0_0 = arith.constant 0 : index
    %c0_1 = arith.constant 0 : index
    %0 = vector.load %arg1[%c0, %c0_0, %c0_1] : memref<4x64x128xbf16, #tpu.memory_space<vmem>>, vector<4x64x128xbf16>
    %1 = vector.shape_cast %0 : vector<4x64x128xbf16> to vector<256x128xbf16>
    %c0_2 = arith.constant 0 : index
    %c0_3 = arith.constant 0 : index
    %2 = vector.load %arg2[%c0_2, %c0_3] : memref<128x384xbf16, #tpu.memory_space<vmem>>, vector<128x384xbf16>
    %cst = arith.constant dense<0.000000e+00> : vector<256x384xf32>
    %3 = tpu.matmul %1, %2, %cst {dimension_numbers = #tpu.dot_dimension_numbers<[1], [0], [0], [1], [0, 0, 1, 1], [], []>} : vector<256x128xbf16>, vector<128x384xbf16>, vector<256x384xf32> -> vector<256x384xf32>
    %c0_4 = arith.constant 0 : index
    %c0_5 = arith.constant 0 : index
    %4 = vector.load %arg3[%c0_4, %c0_5] : memref<1x384xf32, #tpu.memory_space<vmem>>, vector<1x384xf32>
    %5 = vector.broadcast %4 : vector<1x384xf32> to vector<256x384xf32>
    %6 = arith.addf %3, %5 : vector<256x384xf32>
    %7 = vector.shape_cast %6 : vector<256x384xf32> to vector<4x64x384xf32>
    %c0_6 = arith.constant 0 : index
    %c0_7 = arith.constant 0 : index
    %8 = vector.load %arg4[%c0_6, %c0_7] : memref<128x128xbf16, #tpu.memory_space<vmem>>, vector<128x128xbf16>
    %cst_8 = arith.constant 0.000000e+00 : f32
    %9 = vector.broadcast %cst_8 : f32 to vector<256x128xf32>
    %10 = vector.extract_strided_slice %7 {offsets = [0, 0, 0], sizes = [4, 64, 32], strides = [1, 1, 1]} : vector<4x64x384xf32> to vector<4x64x32xf32>
    %cst_9 = arith.constant 0.0883883461 : f32
    %11 = vector.broadcast %cst_9 : f32 to vector<4x64x32xf32>
    %12 = arith.mulf %10, %11 : vector<4x64x32xf32>
    %13 = arith.truncf %12 : vector<4x64x32xf32> to vector<4x64x32xbf16>
    %14 = vector.extract_strided_slice %7 {offsets = [0, 0, 128], sizes = [4, 64, 32], strides = [1, 1, 1]} : vector<4x64x384xf32> to vector<4x64x32xf32>
    %15 = arith.truncf %14 : vector<4x64x32xf32> to vector<4x64x32xbf16>
    %16 = vector.extract_strided_slice %7 {offsets = [0, 0, 256], sizes = [4, 64, 32], strides = [1, 1, 1]} : vector<4x64x384xf32> to vector<4x64x32xf32>
    %17 = arith.truncf %16 : vector<4x64x32xf32> to vector<4x64x32xbf16>
    "tpu.trace_start"() <{level = 10 : i32, message = "bnd,bmd->bnm"}> : () -> ()
    %cst_10 = arith.constant dense<0.000000e+00> : vector<4x64x64xf32>
    %18 = tpu.matmul %13, %15, %cst_10 {dimension_numbers = #tpu.dot_dimension_numbers<[2], [2], [1], [1], [0, 0, 0, 1, 1, 1], [0], [0]>} : vector<4x64x32xbf16>, vector<4x64x32xbf16>, vector<4x64x64xf32> -> vector<4x64x64xf32>
    "tpu.trace_stop"() : () -> ()
    %cst_11 = arith.constant dense<0xFF800000> : vector<4x64xf32>
    %19 = vector.multi_reduction <maximumf>, %18, %cst_11 [2] : vector<4x64x64xf32> to vector<4x64xf32>
    %20 = vector.shape_cast %19 : vector<4x64xf32> to vector<4x64x1xf32>
    %21 = vector.broadcast %20 : vector<4x64x1xf32> to vector<4x64x64xf32>
    %22 = arith.subf %18, %21 : vector<4x64x64xf32>
    %23 = math.exp %22 : vector<4x64x64xf32>
    %cst_12 = arith.constant dense<0.000000e+00> : vector<4x64xf32>
    %24 = vector.multi_reduction <add>, %23, %cst_12 [2] : vector<4x64x64xf32> to vector<4x64xf32>
    %25 = vector.shape_cast %24 : vector<4x64xf32> to vector<4x64x1xf32>
    %26 = vector.broadcast %25 : vector<4x64x1xf32> to vector<4x64x64xf32>
    %27 = arith.divf %23, %26 : vector<4x64x64xf32>
    %28 = arith.truncf %27 : vector<4x64x64xf32> to vector<4x64x64xbf16>
    "tpu.trace_start"() <{level = 10 : i32, message = "bnm,bmd->bnd"}> : () -> ()
    %cst_13 = arith.constant dense<0.000000e+00> : vector<4x64x32xf32>
    %29 = tpu.matmul %28, %17, %cst_13 {dimension_numbers = #tpu.dot_dimension_numbers<[2], [1], [1], [2], [0, 0, 0, 1, 1, 2], [0], [0]>} : vector<4x64x64xbf16>, vector<4x64x32xbf16>, vector<4x64x32xf32> -> vector<4x64x32xf32>
    "tpu.trace_stop"() : () -> ()
    %30 = vector.shape_cast %29 : vector<4x64x32xf32> to vector<256x32xf32>
    %31 = arith.truncf %30 : vector<256x32xf32> to vector<256x32xbf16>
    %32 = vector.extract_strided_slice %8 {offsets = [0, 0], sizes = [32, 128], strides = [1, 1]} : vector<128x128xbf16> to vector<32x128xbf16>
    %cst_14 = arith.constant dense<0.000000e+00> : vector<256x128xf32>
    %33 = tpu.matmul %31, %32, %cst_14 {dimension_numbers = #tpu.dot_dimension_numbers<[1], [0], [0], [1], [0, 0, 1, 1], [], []>} : vector<256x32xbf16>, vector<32x128xbf16>, vector<256x128xf32> -> vector<256x128xf32>
    %34 = arith.addf %9, %33 : vector<256x128xf32>
    %35 = vector.extract_strided_slice %7 {offsets = [0, 0, 32], sizes = [4, 64, 32], strides = [1, 1, 1]} : vector<4x64x384xf32> to vector<4x64x32xf32>
    %cst_15 = arith.constant 0.0883883461 : f32
    %36 = vector.broadcast %cst_15 : f32 to vector<4x64x32xf32>
    %37 = arith.mulf %35, %36 : vector<4x64x32xf32>
    %38 = arith.truncf %37 : vector<4x64x32xf32> to vector<4x64x32xbf16>
    %39 = vector.extract_strided_slice %7 {offsets = [0, 0, 160], sizes = [4, 64, 32], strides = [1, 1, 1]} : vector<4x64x384xf32> to vector<4x64x32xf32>
    %40 = arith.truncf %39 : vector<4x64x32xf32> to vector<4x64x32xbf16>
    %41 = vector.extract_strided_slice %7 {offsets = [0, 0, 288], sizes = [4, 64, 32], strides = [1, 1, 1]} : vector<4x64x384xf32> to vector<4x64x32xf32>
    %42 = arith.truncf %41 : vector<4x64x32xf32> to vector<4x64x32xbf16>
    "tpu.trace_start"() <{level = 10 : i32, message = "bnd,bmd->bnm"}> : () -> ()
    %cst_16 = arith.constant dense<0.000000e+00> : vector<4x64x64xf32>
    %43 = tpu.matmul %38, %40, %cst_16 {dimension_numbers = #tpu.dot_dimension_numbers<[2], [2], [1], [1], [0, 0, 0, 1, 1, 1], [0], [0]>} : vector<4x64x32xbf16>, vector<4x64x32xbf16>, vector<4x64x64xf32> -> vector<4x64x64xf32>
    "tpu.trace_stop"() : () -> ()
    %cst_17 = arith.constant dense<0xFF800000> : vector<4x64xf32>
    %44 = vector.multi_reduction <maximumf>, %43, %cst_17 [2] : vector<4x64x64xf32> to vector<4x64xf32>
    %45 = vector.shape_cast %44 : vector<4x64xf32> to vector<4x64x1xf32>
    %46 = vector.broadcast %45 : vector<4x64x1xf32> to vector<4x64x64xf32>
    %47 = arith.subf %43, %46 : vector<4x64x64xf32>
    %48 = math.exp %47 : vector<4x64x64xf32>
    %cst_18 = arith.constant dense<0.000000e+00> : vector<4x64xf32>
    %49 = vector.multi_reduction <add>, %48, %cst_18 [2] : vector<4x64x64xf32> to vector<4x64xf32>
    %50 = vector.shape_cast %49 : vector<4x64xf32> to vector<4x64x1xf32>
    %51 = vector.broadcast %50 : vector<4x64x1xf32> to vector<4x64x64xf32>
    %52 = arith.divf %48, %51 : vector<4x64x64xf32>
    %53 = arith.truncf %52 : vector<4x64x64xf32> to vector<4x64x64xbf16>
    "tpu.trace_start"() <{level = 10 : i32, message = "bnm,bmd->bnd"}> : () -> ()
    %cst_19 = arith.constant dense<0.000000e+00> : vector<4x64x32xf32>
    %54 = tpu.matmul %53, %42, %cst_19 {dimension_numbers = #tpu.dot_dimension_numbers<[2], [1], [1], [2], [0, 0, 0, 1, 1, 2], [0], [0]>} : vector<4x64x64xbf16>, vector<4x64x32xbf16>, vector<4x64x32xf32> -> vector<4x64x32xf32>
    "tpu.trace_stop"() : () -> ()
    %55 = vector.shape_cast %54 : vector<4x64x32xf32> to vector<256x32xf32>
    %56 = arith.truncf %55 : vector<256x32xf32> to vector<256x32xbf16>
    %57 = vector.extract_strided_slice %8 {offsets = [32, 0], sizes = [32, 128], strides = [1, 1]} : vector<128x128xbf16> to vector<32x128xbf16>
    %cst_20 = arith.constant dense<0.000000e+00> : vector<256x128xf32>
    %58 = tpu.matmul %56, %57, %cst_20 {dimension_numbers = #tpu.dot_dimension_numbers<[1], [0], [0], [1], [0, 0, 1, 1], [], []>} : vector<256x32xbf16>, vector<32x128xbf16>, vector<256x128xf32> -> vector<256x128xf32>
    %59 = arith.addf %34, %58 : vector<256x128xf32>
    %60 = vector.extract_strided_slice %7 {offsets = [0, 0, 64], sizes = [4, 64, 32], strides = [1, 1, 1]} : vector<4x64x384xf32> to vector<4x64x32xf32>
    %cst_21 = arith.constant 0.0883883461 : f32
    %61 = vector.broadcast %cst_21 : f32 to vector<4x64x32xf32>
    %62 = arith.mulf %60, %61 : vector<4x64x32xf32>
    %63 = arith.truncf %62 : vector<4x64x32xf32> to vector<4x64x32xbf16>
    %64 = vector.extract_strided_slice %7 {offsets = [0, 0, 192], sizes = [4, 64, 32], strides = [1, 1, 1]} : vector<4x64x384xf32> to vector<4x64x32xf32>
    %65 = arith.truncf %64 : vector<4x64x32xf32> to vector<4x64x32xbf16>
    %66 = vector.extract_strided_slice %7 {offsets = [0, 0, 320], sizes = [4, 64, 32], strides = [1, 1, 1]} : vector<4x64x384xf32> to vector<4x64x32xf32>
    %67 = arith.truncf %66 : vector<4x64x32xf32> to vector<4x64x32xbf16>
    "tpu.trace_start"() <{level = 10 : i32, message = "bnd,bmd->bnm"}> : () -> ()
    %cst_22 = arith.constant dense<0.000000e+00> : vector<4x64x64xf32>
    %68 = tpu.matmul %63, %65, %cst_22 {dimension_numbers = #tpu.dot_dimension_numbers<[2], [2], [1], [1], [0, 0, 0, 1, 1, 1], [0], [0]>} : vector<4x64x32xbf16>, vector<4x64x32xbf16>, vector<4x64x64xf32> -> vector<4x64x64xf32>
    "tpu.trace_stop"() : () -> ()
    %cst_23 = arith.constant dense<0xFF800000> : vector<4x64xf32>
    %69 = vector.multi_reduction <maximumf>, %68, %cst_23 [2] : vector<4x64x64xf32> to vector<4x64xf32>
    %70 = vector.shape_cast %69 : vector<4x64xf32> to vector<4x64x1xf32>
    %71 = vector.broadcast %70 : vector<4x64x1xf32> to vector<4x64x64xf32>
    %72 = arith.subf %68, %71 : vector<4x64x64xf32>
    %73 = math.exp %72 : vector<4x64x64xf32>
    %cst_24 = arith.constant dense<0.000000e+00> : vector<4x64xf32>
    %74 = vector.multi_reduction <add>, %73, %cst_24 [2] : vector<4x64x64xf32> to vector<4x64xf32>
    %75 = vector.shape_cast %74 : vector<4x64xf32> to vector<4x64x1xf32>
    %76 = vector.broadcast %75 : vector<4x64x1xf32> to vector<4x64x64xf32>
    %77 = arith.divf %73, %76 : vector<4x64x64xf32>
    %78 = arith.truncf %77 : vector<4x64x64xf32> to vector<4x64x64xbf16>
    "tpu.trace_start"() <{level = 10 : i32, message = "bnm,bmd->bnd"}> : () -> ()
    %cst_25 = arith.constant dense<0.000000e+00> : vector<4x64x32xf32>
    %79 = tpu.matmul %78, %67, %cst_25 {dimension_numbers = #tpu.dot_dimension_numbers<[2], [1], [1], [2], [0, 0, 0, 1, 1, 2], [0], [0]>} : vector<4x64x64xbf16>, vector<4x64x32xbf16>, vector<4x64x32xf32> -> vector<4x64x32xf32>
    "tpu.trace_stop"() : () -> ()
    %80 = vector.shape_cast %79 : vector<4x64x32xf32> to vector<256x32xf32>
    %81 = arith.truncf %80 : vector<256x32xf32> to vector<256x32xbf16>
    %82 = vector.extract_strided_slice %8 {offsets = [64, 0], sizes = [32, 128], strides = [1, 1]} : vector<128x128xbf16> to vector<32x128xbf16>
    %cst_26 = arith.constant dense<0.000000e+00> : vector<256x128xf32>
    %83 = tpu.matmul %81, %82, %cst_26 {dimension_numbers = #tpu.dot_dimension_numbers<[1], [0], [0], [1], [0, 0, 1, 1], [], []>} : vector<256x32xbf16>, vector<32x128xbf16>, vector<256x128xf32> -> vector<256x128xf32>
    %84 = arith.addf %59, %83 : vector<256x128xf32>
    %85 = vector.extract_strided_slice %7 {offsets = [0, 0, 96], sizes = [4, 64, 32], strides = [1, 1, 1]} : vector<4x64x384xf32> to vector<4x64x32xf32>
    %cst_27 = arith.constant 0.0883883461 : f32
    %86 = vector.broadcast %cst_27 : f32 to vector<4x64x32xf32>
    %87 = arith.mulf %85, %86 : vector<4x64x32xf32>
    %88 = arith.truncf %87 : vector<4x64x32xf32> to vector<4x64x32xbf16>
    %89 = vector.extract_strided_slice %7 {offsets = [0, 0, 224], sizes = [4, 64, 32], strides = [1, 1, 1]} : vector<4x64x384xf32> to vector<4x64x32xf32>
    %90 = arith.truncf %89 : vector<4x64x32xf32> to vector<4x64x32xbf16>
    %91 = vector.extract_strided_slice %7 {offsets = [0, 0, 352], sizes = [4, 64, 32], strides = [1, 1, 1]} : vector<4x64x384xf32> to vector<4x64x32xf32>
    %92 = arith.truncf %91 : vector<4x64x32xf32> to vector<4x64x32xbf16>
    "tpu.trace_start"() <{level = 10 : i32, message = "bnd,bmd->bnm"}> : () -> ()
    %cst_28 = arith.constant dense<0.000000e+00> : vector<4x64x64xf32>
    %93 = tpu.matmul %88, %90, %cst_28 {dimension_numbers = #tpu.dot_dimension_numbers<[2], [2], [1], [1], [0, 0, 0, 1, 1, 1], [0], [0]>} : vector<4x64x32xbf16>, vector<4x64x32xbf16>, vector<4x64x64xf32> -> vector<4x64x64xf32>
    "tpu.trace_stop"() : () -> ()
    %cst_29 = arith.constant dense<0xFF800000> : vector<4x64xf32>
    %94 = vector.multi_reduction <maximumf>, %93, %cst_29 [2] : vector<4x64x64xf32> to vector<4x64xf32>
    %95 = vector.shape_cast %94 : vector<4x64xf32> to vector<4x64x1xf32>
    %96 = vector.broadcast %95 : vector<4x64x1xf32> to vector<4x64x64xf32>
    %97 = arith.subf %93, %96 : vector<4x64x64xf32>
    %98 = math.exp %97 : vector<4x64x64xf32>
    %cst_30 = arith.constant dense<0.000000e+00> : vector<4x64xf32>
    %99 = vector.multi_reduction <add>, %98, %cst_30 [2] : vector<4x64x64xf32> to vector<4x64xf32>
    %100 = vector.shape_cast %99 : vector<4x64xf32> to vector<4x64x1xf32>
    %101 = vector.broadcast %100 : vector<4x64x1xf32> to vector<4x64x64xf32>
    %102 = arith.divf %98, %101 : vector<4x64x64xf32>
    %103 = arith.truncf %102 : vector<4x64x64xf32> to vector<4x64x64xbf16>
    "tpu.trace_start"() <{level = 10 : i32, message = "bnm,bmd->bnd"}> : () -> ()
    %cst_31 = arith.constant dense<0.000000e+00> : vector<4x64x32xf32>
    %104 = tpu.matmul %103, %92, %cst_31 {dimension_numbers = #tpu.dot_dimension_numbers<[2], [1], [1], [2], [0, 0, 0, 1, 1, 2], [0], [0]>} : vector<4x64x64xbf16>, vector<4x64x32xbf16>, vector<4x64x32xf32> -> vector<4x64x32xf32>
    "tpu.trace_stop"() : () -> ()
    %105 = vector.shape_cast %104 : vector<4x64x32xf32> to vector<256x32xf32>
    %106 = arith.truncf %105 : vector<256x32xf32> to vector<256x32xbf16>
    %107 = vector.extract_strided_slice %8 {offsets = [96, 0], sizes = [32, 128], strides = [1, 1]} : vector<128x128xbf16> to vector<32x128xbf16>
    %cst_32 = arith.constant dense<0.000000e+00> : vector<256x128xf32>
    %108 = tpu.matmul %106, %107, %cst_32 {dimension_numbers = #tpu.dot_dimension_numbers<[1], [0], [0], [1], [0, 0, 1, 1], [], []>} : vector<256x32xbf16>, vector<32x128xbf16>, vector<256x128xf32> -> vector<256x128xf32>
    %109 = arith.addf %84, %108 : vector<256x128xf32>
    %c0_33 = arith.constant 0 : index
    %c0_34 = arith.constant 0 : index
    %110 = vector.load %arg5[%c0_33, %c0_34] : memref<1x128xf32, #tpu.memory_space<vmem>>, vector<1x128xf32>
    %111 = vector.broadcast %110 : vector<1x128xf32> to vector<256x128xf32>
    %112 = arith.addf %109, %111 : vector<256x128xf32>
    %113 = vector.shape_cast %112 : vector<256x128xf32> to vector<4x64x128xf32>
    %c0_35 = arith.constant 0 : index
    %c0_36 = arith.constant 0 : index
    %c0_37 = arith.constant 0 : index
    %114 = vector.load %arg6[%c0_35, %c0_36, %c0_37] : memref<4x64x128xf32, #tpu.memory_space<vmem>>, vector<4x64x128xf32>
    tpu.vector_store %arg6[%c0_35, %c0_36, %c0_37], %113 {strides = array<i32>} : memref<4x64x128xf32, #tpu.memory_space<vmem>>, vector<4x64x128xf32>,
    return
  }
  func.func @transform_0(%arg0: i32) -> (i32, i32, i32) {
    %c0_i32 = arith.constant 0 : i32
    %c0_i32_0 = arith.constant 0 : i32
    %c0_i32_1 = arith.constant 0 : i32
    return %arg0, %c0_i32, %c0_i32_0 : i32, i32, i32
  }
  func.func @transform_1(%arg0: i32) -> (i32, i32) {
    %c0_i32 = arith.constant 0 : i32
    %c0_i32_0 = arith.constant 0 : i32
    %c0_i32_1 = arith.constant 0 : i32
    return %c0_i32, %c0_i32_0 : i32, i32
  }
  func.func @transform_2(%arg0: i32) -> (i32, i32) {
    %c0_i32 = arith.constant 0 : i32
    %c0_i32_0 = arith.constant 0 : i32
    %c0_i32_1 = arith.constant 0 : i32
    return %c0_i32, %c0_i32_0 : i32, i32
  }
  func.func @transform_3(%arg0: i32) -> (i32, i32) {
    %c0_i32 = arith.constant 0 : i32
    %c0_i32_0 = arith.constant 0 : i32
    %c0_i32_1 = arith.constant 0 : i32
    return %c0_i32, %c0_i32_0 : i32, i32
  }
  func.func @transform_4(%arg0: i32) -> (i32, i32) {
    %c0_i32 = arith.constant 0 : i32
    %c0_i32_0 = arith.constant 0 : i32
    %c0_i32_1 = arith.constant 0 : i32
    return %c0_i32, %c0_i32_0 : i32, i32
  }
  func.func @transform_5(%arg0: i32) -> (i32, i32, i32) {
    %c0_i32 = arith.constant 0 : i32
    %c0_i32_0 = arith.constant 0 : i32
    %c0_i32_1 = arith.constant 0 : i32
    return %arg0, %c0_i32, %c0_i32_0 : i32, i32, i32
  }
}

</mosaic_0001>

<llo_original>
// kernel: tpu_custom_call.1
$region0: #{tpu_custom_call.1}
  #allocation0 [shape = 'u32[]', space=smem, size = 0x4, offset = 0x4, fixed_abs, tag = 'smem constant byte address 0x4 - core index']
  #allocation1 [shape = 'u32[144,128]{1,0:T(1,128)}', space=vmem, size = 0x12000, scoped, tag = 'internal scratch']
  %s0 = inlined_call_operand.hbm [shape: bf16[8,64,128], index: 0, kind: input, shape index: {}]
  %s1 = inlined_call_operand.hbm [shape: bf16[128,384], index: 1, kind: input, shape index: {}]
  %s2 = inlined_call_operand.vmem [shape: f32[1,384], index: 2, kind: input, shape index: {}]
  %s3 = inlined_call_operand.hbm [shape: bf16[128,128], index: 3, kind: input, shape index: {}]
  %s4 = inlined_call_operand.vmem [shape: f32[1,128], index: 4, kind: input, shape index: {}]
  %s5 = inlined_call_operand.hbm [shape: f32[8,64,128], index: 5, kind: output, shape index: {}]
  %s6 = sld [smem:[#allocation0]]
  $region65: #{tpu_custom_call.1} parent=0
    _
  %s8 = ssub.s32 1, %s6
  %s9 = scalar_select 0, %s8, %s6
  $region1: #{tpu_custom_call.1} parent=0
    #allocation2 [shape = 'u8[131072]{0}', space=vmem, size = 0x20000, scoped, tag = 'input window, operand 0']
    #allocation3 [shape = 's32[2]{0}', space=sflag, size = 0x8, scoped, tag = 'scoped memory for tpu_custom_call.1']
    #allocation4 [shape = 's32[2]{0}', space=sflag, size = 0x8, scoped, tag = 'scoped memory for tpu_custom_call.1']
    #allocation5 [shape = 'u8[98304]{0}', space=vmem, size = 0x18000, scoped, tag = 'input window, operand 1, single buffered']
    #allocation6 [shape = 's32[1]{0}', space=sflag, size = 0x4, scoped, tag = 'scoped memory for tpu_custom_call.1']
    #allocation7 [shape = 'u8[32768]{0}', space=vmem, size = 0x8000, scoped, tag = 'input window, operand 3, single buffered']
    #allocation8 [shape = 'u8[262144]{0}', space=vmem, size = 0x40000, scoped, tag = 'output window, operand 0']
    %10 = vsyncpa [#allocation3], 0
    %s11 = scalar_lea.sflag [#allocation3], 1
    %12 = vsyncpa %s11, 0
    %13 = vsyncpa [#allocation6], 0
    %14 = vsyncpa [#allocation4], 0
    %s15 = scalar_lea.sflag [#allocation4], 1
    %16 = vsyncpa %s15, 0
    loop: start=0, step=1, limit=4
    $region2: #{tpu_custom_call.1} parent=1 // loop_pre_header
      _
    $region3: #{tpu_custom_call.1} parent=1 // loop_header
      %s18 = sphi 0, %s22
      %p19 = scmp.ge.s32.totalorder %s18, 4
      %s28 = sphi 0, %s30
      %s31 = sphi 0, %s28
      %s32 = sphi 0, %s31
      %s48 = sphi 0, %s32
      %s52 = sphi 0, %s52
      %s54 = sphi 0, %s52
      %s55 = sphi 0, %s54
      %s69 = sphi 0, %s55
      %s73 = sphi 0, %s73
      %s75 = sphi 0, %s73
      %s76 = sphi 0, %s75
      %s90 = sphi 0, %s76
      %s94 = sphi 0, %s94
      %s96 = sphi 0, %s94
      %s97 = sphi 0, %s96
      %s111 = sphi 0, %s97
      %s115 = sphi 0, %s115
      %s117 = sphi 0, %s115
      %s118 = sphi 0, %s117
      %s132 = sphi 0, %s118
      %s138 = sphi 0, %s140
      %s141 = sphi 0, %s138
      %s142 = sphi 0, %s141
      %s158 = sphi 0, %s142
    $region4: #{tpu_custom_call.1} parent=1 // loop_header_branch
      %21 = sbr.rel (%p19) target = $region8
    $region5: #{tpu_custom_call.1} parent=1 // loop_body
      %s23 = ssub.s32 %s18, 1
      %s24 = ssub.s32 %s18, 2
      %s25 = sadd.s32 %s18, 1
      %s26 = ssub.s32 %s18, %s25
      %p27 = scmp.eq.s32.totalorder %s26, 0
      %s29 = sadd.s32 %s28, 1
      %s30 = scalar_select %p27, %s28, %s29
      %p33 = pneg %p27
      %p34 = scmp.eq.s32.totalorder %s18, 1
      %p35 = por %p33, %p34
      %p36 = scmp.ne.s32.totalorder %s28, %s31
      %p37 = scmp.eq.s32.totalorder %s18, 0
      %p38 = por %p36, %p37
      %p39 = scmp.ne.s32.totalorder %s28, %s31
      %p40 = scmp.eq.s32.totalorder %s23, 1
      %p41 = por %p39, %p40
      %p42 = scmp.ne.s32.totalorder %s31, %s32
      %p43 = scmp.eq.s32.totalorder %s23, 0
      %p44 = por %p42, %p43
      %p45 = scmp.ne.s32.totalorder %s31, %s32
      %p46 = scmp.eq.s32.totalorder %s24, 1
      %p47 = por %p45, %p46
      %p49 = scmp.ne.s32.totalorder %s32, %s48
      %p50 = scmp.eq.s32.totalorder %s24, 0
      %p51 = por %p49, %p50
      %s53 = sadd.s32 %s52, 1
      %p56 = scmp.eq.s32.totalorder %s18, 1
      %p57 = scmp.ne.s32.totalorder %s52, %s54
      %p58 = scmp.eq.s32.totalorder %s18, 0
      %p59 = por %p57, %p58
      %p60 = scmp.ne.s32.totalorder %s52, %s54
      %p61 = scmp.eq.s32.totalorder %s23, 1
      %p62 = por %p60, %p61
      %p63 = scmp.ne.s32.totalorder %s54, %s55
      %p64 = scmp.eq.s32.totalorder %s23, 0
      %p65 = por %p63, %p64
      %p66 = scmp.ne.s32.totalorder %s54, %s55
      %p67 = scmp.eq.s32.totalorder %s24, 1
      %p68 = por %p66, %p67
      %p70 = scmp.ne.s32.totalorder %s55, %s69
      %p71 = scmp.eq.s32.totalorder %s24, 0
      %p72 = por %p70, %p71
      %s74 = sadd.s32 %s73, 1
      %p77 = scmp.eq.s32.totalorder %s18, 1
      %p78 = scmp.ne.s32.totalorder %s73, %s75
      %p79 = scmp.eq.s32.totalorder %s18, 0
      %p80 = por %p78, %p79
      %p81 = scmp.ne.s32.totalorder %s73, %s75
      %p82 = scmp.eq.s32.totalorder %s23, 1
      %p83 = por %p81, %p82
      %p84 = scmp.ne.s32.totalorder %s75, %s76
      %p85 = scmp.eq.s32.totalorder %s23, 0
      %p86 = por %p84, %p85
      %p87 = scmp.ne.s32.totalorder %s75, %s76
      %p88 = scmp.eq.s32.totalorder %s24, 1
      %p89 = por %p87, %p88
      %p91 = scmp.ne.s32.totalorder %s76, %s90
      %p92 = scmp.eq.s32.totalorder %s24, 0
      %p93 = por %p91, %p92
      %s95 = sadd.s32 %s94, 1
      %p98 = scmp.eq.s32.totalorder %s18, 1
      %p99 = scmp.ne.s32.totalorder %s94, %s96
      %p100 = scmp.eq.s32.totalorder %s18, 0
      %p101 = por %p99, %p100
      %p102 = scmp.ne.s32.totalorder %s94, %s96
      %p103 = scmp.eq.s32.totalorder %s23, 1
      %p104 = por %p102, %p103
      %p105 = scmp.ne.s32.totalorder %s96, %s97
      %p106 = scmp.eq.s32.totalorder %s23, 0
      %p107 = por %p105, %p106
      %p108 = scmp.ne.s32.totalorder %s96, %s97
      %p109 = scmp.eq.s32.totalorder %s24, 1
      %p110 = por %p108, %p109
      %p112 = scmp.ne.s32.totalorder %s97, %s111
      %p113 = scmp.eq.s32.totalorder %s24, 0
      %p114 = por %p112, %p113
      %s116 = sadd.s32 %s115, 1
      %p119 = scmp.eq.s32.totalorder %s18, 1
      %p120 = scmp.ne.s32.totalorder %s115, %s117
      %p121 = scmp.eq.s32.totalorder %s18, 0
      %p122 = por %p120, %p121
      %p123 = scmp.ne.s32.totalorder %s115, %s117
      %p124 = scmp.eq.s32.totalorder %s23, 1
      %p125 = por %p123, %p124
      %p126 = scmp.ne.s32.totalorder %s117, %s118
      %p127 = scmp.eq.s32.totalorder %s23, 0
      %p128 = por %p126, %p127
      %p129 = scmp.ne.s32.totalorder %s117, %s118
      %p130 = scmp.eq.s32.totalorder %s24, 1
      %p131 = por %p129, %p130
      %p133 = scmp.ne.s32.totalorder %s118, %s132
      %p134 = scmp.eq.s32.totalorder %s24, 0
      %p135 = por %p133, %p134
      %s136 = ssub.s32 %s18, %s25
      %p137 = scmp.eq.s32.totalorder %s136, 0
      %s139 = sadd.s32 %s138, 1
      %s140 = scalar_select %p137, %s138, %s139
      %p143 = pneg %p137
      %p144 = scmp.eq.s32.totalorder %s18, 1
      %p145 = por %p143, %p144
      %p146 = scmp.ne.s32.totalorder %s138, %s141
      %p147 = scmp.eq.s32.totalorder %s18, 0
      %p148 = por %p146, %p147
      %p149 = scmp.ne.s32.totalorder %s138, %s141
      %p150 = scmp.eq.s32.totalorder %s23, 1
      %p151 = por %p149, %p150
      %p152 = scmp.ne.s32.totalorder %s141, %s142
      %p153 = scmp.eq.s32.totalorder %s23, 0
      %p154 = por %p152, %p153
      %p155 = scmp.ne.s32.totalorder %s141, %s142
      %p156 = scmp.eq.s32.totalorder %s24, 1
      %p157 = por %p155, %p156
      %p159 = scmp.ne.s32.totalorder %s142, %s158
      %p160 = scmp.eq.s32.totalorder %s24, 0
      %p161 = por %p159, %p160
      %p162 = scmp.le.s32.totalorder 1, %s18
      %p163 = scmp.lt.s32.totalorder %s18, 3
      %p164 = pnand %p162, %p163
      %p165 = pneg %p164
      // Predicated region
      $region9: #{tpu_custom_call.1} parent=5 // pred_check
        _
      $region10: #{tpu_custom_call.1} parent=5 // pred_check_branch
        %167 = sbr.rel (%p164) target = $region12
      $region11: #{tpu_custom_call.1} parent=5 // pred_region
        %s168 = ssub.s32 %s18, 1
        // Predicated region
        $region13: #{tpu_custom_call.1} parent=11 // pred_check
          %p169 = pneg %p65
        $region14: #{tpu_custom_call.1} parent=11 // pred_check_branch
          %171 = sbr.rel (%p169) target = $region16
        $region15: #{tpu_custom_call.1} parent=11 // pred_region
          %s173 = ssub.s32 3072, 3072
          %174 = vsyncadd [#allocation6], %s173
          %s175 = sshll.u32 [#allocation5], 4
          %s176 = int_to_ptr.vmem [resolvable:$true] %s175
          %181 = dma.hbm_to_vmem [thread:$0]  %s1, 3072, %s176, [#allocation6], 192, 192, 12
        $region16: #{tpu_custom_call.1} parent=11 // pred_fallthru
          _
        // Predicated region
        $region17: #{tpu_custom_call.1} parent=11 // pred_check
          %p182 = pneg %p86
        $region18: #{tpu_custom_call.1} parent=11 // pred_check_branch
          %184 = sbr.rel (%p182) target = $region20
        $region19: #{tpu_custom_call.1} parent=11 // pred_region
          _
        $region20: #{tpu_custom_call.1} parent=11 // pred_fallthru
          _
        // Predicated region
        $region21: #{tpu_custom_call.1} parent=11 // pred_check
          %p185 = pneg %p107
        $region22: #{tpu_custom_call.1} parent=11 // pred_check_branch
          %187 = sbr.rel (%p185) target = $region24
        $region23: #{tpu_custom_call.1} parent=11 // pred_region
          %s189 = ssub.s32 1024, 1024
          %190 = vsyncadd [#allocation6], %s189
          %s191 = sshll.u32 [#allocation7], 4
          %s192 = int_to_ptr.vmem [resolvable:$true] %s191
          %197 = dma.hbm_to_vmem [thread:$0]  %s3, 1024, %s192, [#allocation6], 64, 64, 4
        $region24: #{tpu_custom_call.1} parent=11 // pred_fallthru
          _
        // Predicated region
        $region25: #{tpu_custom_call.1} parent=11 // pred_check
          %p198 = pneg %p128
        $region26: #{tpu_custom_call.1} parent=11 // pred_check_branch
          %200 = sbr.rel (%p198) target = $region28
        $region27: #{tpu_custom_call.1} parent=11 // pred_region
          _
        $region28: #{tpu_custom_call.1} parent=11 // pred_fallthru
          _
      $region12: #{tpu_custom_call.1} parent=5 // pred_fallthru
        _
      %p201 = scmp.lt.s32.totalorder %s18, 2
      // Predicated region
      $region29: #{tpu_custom_call.1} parent=5 // pred_check
        %p202 = pneg %p201
      $region30: #{tpu_custom_call.1} parent=5 // pred_check_branch
        %204 = sbr.rel (%p202) target = $region32
      $region31: #{tpu_custom_call.1} parent=5 // pred_region
        // Predicated region
        $region33: #{tpu_custom_call.1} parent=31 // pred_check
          %p205 = pneg %p38
        $region34: #{tpu_custom_call.1} parent=31 // pred_check_branch
          %207 = sbr.rel (%p205) target = $region36
        $region35: #{tpu_custom_call.1} parent=31 // pred_region
          %s208 = sand.u32 %s28, 1
          %s209 = scalar_lea.sflag [#allocation3], %s208
          %s210 = sand.u32 %s28, 1
          %s211 = smul.addr %s210, 128
          %s212 = scalar_lea.vmem [#allocation2], %s211
          %s213 = smul.u32 4, %s18
          %s215 = ssub.s32 2048, 2048
          %216 = vsyncadd %s209, %s215
          %s217 = smul.addr %s213, 8
          %s218 = smul.addr %s217, 64
          %s219 = scalar_lea.hbm %s0, %s218
          %s220 = sshll.u32 %s212, 4
          %s221 = int_to_ptr.vmem [resolvable:$true] %s220
          %226 = dma.hbm_to_vmem [thread:$0]  %s219, 2048, %s221, %s209, 64, 64, 4
        $region36: #{tpu_custom_call.1} parent=31 // pred_fallthru
          _
      $region32: #{tpu_custom_call.1} parent=5 // pred_fallthru
        _
      %p227 = scmp.le.s32.totalorder 1, %s18
      %p228 = scmp.lt.s32.totalorder %s18, 3
      %p229 = pnand %p227, %p228
      %p230 = pneg %p229
      // Predicated region
      $region37: #{tpu_custom_call.1} parent=5 // pred_check
        _
      $region38: #{tpu_custom_call.1} parent=5 // pred_check_branch
        %232 = sbr.rel (%p229) target = $region40
      $region39: #{tpu_custom_call.1} parent=5 // pred_region
        %s233 = ssub.s32 %s18, 1
        %s234 = sand.u32 %s31, 1
        %s235 = scalar_lea.sflag [#allocation3], %s234
        %s236 = sand.u32 %s31, 1
        %s237 = smul.addr %s236, 128
        %s238 = scalar_lea.vmem [#allocation2], %s237
        // Predicated region
        $region41: #{tpu_custom_call.1} parent=39 // pred_check
          %p239 = pneg %p44
        $region42: #{tpu_custom_call.1} parent=39 // pred_check_branch
          %241 = sbr.rel (%p239) target = $region44
        $region43: #{tpu_custom_call.1} parent=39 // pred_region
          %242 = dma.done %s235, 2048
        $region44: #{tpu_custom_call.1} parent=39 // pred_fallthru
          _
        // Predicated region
        $region45: #{tpu_custom_call.1} parent=39 // pred_check
          %p243 = pneg %p65
        $region46: #{tpu_custom_call.1} parent=39 // pred_check_branch
          %245 = sbr.rel (%p243) target = $region48
        $region47: #{tpu_custom_call.1} parent=39 // pred_region
          %246 = dma.done [#allocation6], 3072
        $region48: #{tpu_custom_call.1} parent=39 // pred_fallthru
          _
        // Predicated region
        $region49: #{tpu_custom_call.1} parent=39 // pred_check
          %p247 = pneg %p107
        $region50: #{tpu_custom_call.1} parent=39 // pred_check_branch
          %249 = sbr.rel (%p247) target = $region52
        $region51: #{tpu_custom_call.1} parent=39 // pred_region
          %250 = dma.done [#allocation6], 1024
        $region52: #{tpu_custom_call.1} parent=39 // pred_fallthru
          _
        %s251 = sand.u32 %s31, 1
        %s252 = scalar_lea.sflag [#allocation3], %s251
        %s253 = sand.u32 %s31, 1
        %s254 = smul.addr %s253, 128
        %s255 = scalar_lea.vmem [#allocation2], %s254
        %p256 = pneg %p44
        %p257 = pneg %p41
        %p258 = pneg %p65
        %p259 = pneg %p62
        %p260 = pneg %p86
        %p261 = pneg %p83
        %p262 = pneg %p107
        %p263 = pneg %p104
        %p264 = pneg %p128
        %p265 = pneg %p125
        %p266 = pneg %p154
        %p267 = pneg %p151
        %s268 = sand.u32 %s141, 1
        %s269 = scalar_lea.sflag [#allocation4], %s268
        %s270 = sand.u32 %s141, 1
        %s271 = smul.addr %s270, 256
        %s272 = scalar_lea.vmem [#allocation8], %s271
        %s273 = smul.u32 4, %s23
        %s274 = smul.u32 4, %s23
        %v276 = vld [vmem:[%s238] sm:$0xf]
        %v277 = vld [vmem:[%s238 + $0x4] sm:$0xf]
        %v278 = vld [vmem:[%s238 + $0x8] sm:$0xf]
        %v279 = vld [vmem:[%s238 + $0xc] sm:$0xf]
        %v280 = vld [vmem:[%s238 + $0x10] sm:$0xf]
        %v281 = vld [vmem:[%s238 + $0x14] sm:$0xf]
        %v282 = vld [vmem:[%s238 + $0x18] sm:$0xf]
        %v283 = vld [vmem:[%s238 + $0x1c] sm:$0xf]
        %v284 = vld [vmem:[%s238 + $0x20] sm:$0xf]
        %v285 = vld [vmem:[%s238 + $0x24] sm:$0xf]
        %v286 = vld [vmem:[%s238 + $0x28] sm:$0xf]
        %v287 = vld [vmem:[%s238 + $0x2c] sm:$0xf]
        %v288 = vld [vmem:[%s238 + $0x30] sm:$0xf]
        %v289 = vld [vmem:[%s238 + $0x34] sm:$0xf]
        %v290 = vld [vmem:[%s238 + $0x38] sm:$0xf]
        %v291 = vld [vmem:[%s238 + $0x3c] sm:$0xf]
        %v292 = vld [vmem:[%s238 + $0x40] sm:$0xf]
        %v293 = vld [vmem:[%s238 + $0x44] sm:$0xf]
        %v294 = vld [vmem:[%s238 + $0x48] sm:$0xf]
        %v295 = vld [vmem:[%s238 + $0x4c] sm:$0xf]
        %v296 = vld [vmem:[%s238 + $0x50] sm:$0xf]
        %v297 = vld [vmem:[%s238 + $0x54] sm:$0xf]
        %v298 = vld [vmem:[%s238 + $0x58] sm:$0xf]
        %v299 = vld [vmem:[%s238 + $0x5c] sm:$0xf]
        %v300 = vld [vmem:[%s238 + $0x60] sm:$0xf]
        %v301 = vld [vmem:[%s238 + $0x64] sm:$0xf]
        %v302 = vld [vmem:[%s238 + $0x68] sm:$0xf]
        %v303 = vld [vmem:[%s238 + $0x6c] sm:$0xf]
        %v304 = vld [vmem:[%s238 + $0x70] sm:$0xf]
        %v305 = vld [vmem:[%s238 + $0x74] sm:$0xf]
        %v306 = vld [vmem:[%s238 + $0x78] sm:$0xf]
        %v307 = vld [vmem:[%s238 + $0x7c] sm:$0xf]
        %v308 = vld [vmem:[#allocation5] sm:$0xff]
        %v309 = vld [vmem:[#allocation5 + $0x8] sm:$0xf]
        %v310 = vld [vmem:[#allocation5 + $0xc] sm:$0xff]
        %v311 = vld [vmem:[#allocation5 + $0x14] sm:$0xf]
        %v312 = vld [vmem:[#allocation5 + $0x18] sm:$0xff]
        %v313 = vld [vmem:[#allocation5 + $0x20] sm:$0xf]
        %v314 = vld [vmem:[#allocation5 + $0x24] sm:$0xff]
        %v315 = vld [vmem:[#allocation5 + $0x2c] sm:$0xf]
        %v316 = vld [vmem:[#allocation5 + $0x30] sm:$0xff]
        %v317 = vld [vmem:[#allocation5 + $0x38] sm:$0xf]
        %v318 = vld [vmem:[#allocation5 + $0x3c] sm:$0xff]
        %v319 = vld [vmem:[#allocation5 + $0x44] sm:$0xf]
        %v320 = vld [vmem:[#allocation5 + $0x48] sm:$0xff]
        %v321 = vld [vmem:[#allocation5 + $0x50] sm:$0xf]
        %v322 = vld [vmem:[#allocation5 + $0x54] sm:$0xff]
        %v323 = vld [vmem:[#allocation5 + $0x5c] sm:$0xf]
        %v324 = vld [vmem:[#allocation5 + $0x60] sm:$0xff]
        %v325 = vld [vmem:[#allocation5 + $0x68] sm:$0xf]
        %v326 = vld [vmem:[#allocation5 + $0x6c] sm:$0xff]
        %v327 = vld [vmem:[#allocation5 + $0x74] sm:$0xf]
        %v328 = vld [vmem:[#allocation5 + $0x78] sm:$0xff]
        %v329 = vld [vmem:[#allocation5 + $0x80] sm:$0xf]
        %v330 = vld [vmem:[#allocation5 + $0x84] sm:$0xff]
        %v331 = vld [vmem:[#allocation5 + $0x8c] sm:$0xf]
        %v332 = vld [vmem:[#allocation5 + $0x90] sm:$0xff]
        %v333 = vld [vmem:[#allocation5 + $0x98] sm:$0xf]
        %v334 = vld [vmem:[#allocation5 + $0x9c] sm:$0xff]
        %v335 = vld [vmem:[#allocation5 + $0xa4] sm:$0xf]
        %v336 = vld [vmem:[#allocation5 + $0xa8] sm:$0xff]
        %v337 = vld [vmem:[#allocation5 + $0xb0] sm:$0xf]
        %v338 = vld [vmem:[#allocation5 + $0xb4] sm:$0xff]
        %v339 = vld [vmem:[#allocation5 + $0xbc] sm:$0xf]
        %v340 = vld [vmem:[%s2] sm:$0x7]
        %v342 = vlaneseq
        %v343 = vshrl.u32 %v342, 7
        %v344 = vsub.s32 0, %v343
        %v345 = vrot.slane %v340, %v344
        %v346 = vlaneseq
        %v347 = vshrl.u32 %v346, 7
        %v348 = vsub.s32 1, %v347
        %v349 = vrot.slane %v340, %v348
        %v350 = vlaneseq
        %v351 = vshrl.u32 %v350, 7
        %v352 = vsub.s32 2, %v351
        %v353 = vrot.slane %v340, %v352
        %v389 = vunpack.c.l.b16 %v276
        %v390 = vunpack.c.l.b16 %v277
        %v391 = vunpack.c.l.b16 %v278
        %v392 = vunpack.c.l.b16 %v279
        %v393 = vunpack.c.l.b16 %v280
        %v394 = vunpack.c.l.b16 %v281
        %v395 = vunpack.c.l.b16 %v282
        %v396 = vunpack.c.l.b16 %v283
        %v397 = vunpack.c.l.b16 %v284
        %v398 = vunpack.c.l.b16 %v285
        %v399 = vunpack.c.l.b16 %v286
        %v400 = vunpack.c.l.b16 %v287
        %v401 = vunpack.c.l.b16 %v288
        %v402 = vunpack.c.l.b16 %v289
        %v403 = vunpack.c.l.b16 %v290
        %v404 = vunpack.c.l.b16 %v291
        %v405 = vunpack.c.l.b16 %v292
        %v406 = vunpack.c.l.b16 %v293
        %v407 = vunpack.c.l.b16 %v294
        %v408 = vunpack.c.l.b16 %v295
        %v409 = vunpack.c.l.b16 %v296
        %v410 = vunpack.c.l.b16 %v297
        %v411 = vunpack.c.l.b16 %v298
        %v412 = vunpack.c.l.b16 %v299
        %v413 = vunpack.c.l.b16 %v300
        %v414 = vunpack.c.l.b16 %v301
        %v415 = vunpack.c.l.b16 %v302
        %v416 = vunpack.c.l.b16 %v303
        %v417 = vunpack.c.l.b16 %v304
        %v418 = vunpack.c.l.b16 %v305
        %v419 = vunpack.c.l.b16 %v306
        %v420 = vunpack.c.l.b16 %v307
        %v421 = vpack.c.b16 %v390, %v389
        %v422 = vpack.c.b16 %v392, %v391
        %v423 = vpack.c.b16 %v394, %v393
        %v424 = vpack.c.b16 %v396, %v395
        %v425 = vpack.c.b16 %v398, %v397
        %v426 = vpack.c.b16 %v400, %v399
        %v427 = vpack.c.b16 %v402, %v401
        %v428 = vpack.c.b16 %v404, %v403
        %v429 = vpack.c.b16 %v406, %v405
        %v430 = vpack.c.b16 %v408, %v407
        %v431 = vpack.c.b16 %v410, %v409
        %v432 = vpack.c.b16 %v412, %v411
        %v433 = vpack.c.b16 %v414, %v413
        %v434 = vpack.c.b16 %v416, %v415
        %v435 = vpack.c.b16 %v418, %v417
        %v436 = vpack.c.b16 %v420, %v419
        %v485 = vunpack.c.l.b16 %v308
        %v486 = vunpack.c.h.b16 %v308
        %v487 = vunpack.c.l.b16 %v309
        %v488 = vunpack.c.l.b16 %v310
        %v489 = vunpack.c.h.b16 %v310
        %v490 = vunpack.c.l.b16 %v311
        %v491 = vunpack.c.l.b16 %v312
        %v492 = vunpack.c.h.b16 %v312
        %v493 = vunpack.c.l.b16 %v313
        %v494 = vunpack.c.l.b16 %v314
        %v495 = vunpack.c.h.b16 %v314
        %v496 = vunpack.c.l.b16 %v315
        %v497 = vunpack.c.l.b16 %v316
        %v498 = vunpack.c.h.b16 %v316
        %v499 = vunpack.c.l.b16 %v317
        %v500 = vunpack.c.l.b16 %v318
        %v501 = vunpack.c.h.b16 %v318
        %v502 = vunpack.c.l.b16 %v319
        %v503 = vunpack.c.l.b16 %v320
        %v504 = vunpack.c.h.b16 %v320
        %v505 = vunpack.c.l.b16 %v321
        %v506 = vunpack.c.l.b16 %v322
        %v507 = vunpack.c.h.b16 %v322
        %v508 = vunpack.c.l.b16 %v323
        %v509 = vunpack.c.l.b16 %v324
        %v510 = vunpack.c.h.b16 %v324
        %v511 = vunpack.c.l.b16 %v325
        %v512 = vunpack.c.l.b16 %v326
        %v513 = vunpack.c.h.b16 %v326
        %v514 = vunpack.c.l.b16 %v327
        %v515 = vunpack.c.l.b16 %v328
        %v516 = vunpack.c.h.b16 %v328
        %v517 = vunpack.c.l.b16 %v329
        %v518 = vunpack.c.l.b16 %v330
        %v519 = vunpack.c.h.b16 %v330
        %v520 = vunpack.c.l.b16 %v331
        %v521 = vunpack.c.l.b16 %v332
        %v522 = vunpack.c.h.b16 %v332
        %v523 = vunpack.c.l.b16 %v333
        %v524 = vunpack.c.l.b16 %v334
        %v525 = vunpack.c.h.b16 %v334
        %v526 = vunpack.c.l.b16 %v335
        %v527 = vunpack.c.l.b16 %v336
        %v528 = vunpack.c.h.b16 %v336
        %v529 = vunpack.c.l.b16 %v337
        %v530 = vunpack.c.l.b16 %v338
        %v531 = vunpack.c.h.b16 %v338
        %v532 = vunpack.c.l.b16 %v339
        %v533 = vpack.c.b16 %v488, %v485
        %v534 = vpack.c.b16 %v489, %v486
        %v535 = vpack.c.b16 %v490, %v487
        %v536 = vpack.c.b16 %v494, %v491
        %v537 = vpack.c.b16 %v495, %v492
        %v538 = vpack.c.b16 %v496, %v493
        %v539 = vpack.c.b16 %v500, %v497
        %v540 = vpack.c.b16 %v501, %v498
        %v541 = vpack.c.b16 %v502, %v499
        %v542 = vpack.c.b16 %v506, %v503
        %v543 = vpack.c.b16 %v507, %v504
        %v544 = vpack.c.b16 %v508, %v505
        %v545 = vpack.c.b16 %v512, %v509
        %v546 = vpack.c.b16 %v513, %v510
        %v547 = vpack.c.b16 %v514, %v511
        %v548 = vpack.c.b16 %v518, %v515
        %v549 = vpack.c.b16 %v519, %v516
        %v550 = vpack.c.b16 %v520, %v517
        %v551 = vpack.c.b16 %v524, %v521
        %v552 = vpack.c.b16 %v525, %v522
        %v553 = vpack.c.b16 %v526, %v523
        %v554 = vpack.c.b16 %v530, %v527
        %v555 = vpack.c.b16 %v531, %v528
        %v556 = vpack.c.b16 %v532, %v529
        %581 = vmatprep.subr.bf16.mxu0 %v555
        %582 = vmatpush1.bf16.msra.mxu0 %v554
        %583 = vmatprep.subr.bf16.mxu0 %v552
        %584 = vmatpush1.bf16.msra.mxu0 %v551
        %585 = vmatprep.subr.bf16.mxu0 %v549
        %586 = vmatpush1.bf16.msra.mxu0 %v548
        %587 = vmatprep.subr.bf16.mxu0 %v546
        %588 = vmatpush1.bf16.msra.mxu0 %v545
        %589 = vmatprep.subr.bf16.mxu0 %v543
        %590 = vmatpush1.bf16.msra.mxu0 %v542
        %591 = vmatprep.subr.bf16.mxu0 %v540
        %592 = vmatpush1.bf16.msra.mxu0 %v539
        %593 = vmatprep.subr.bf16.mxu0 %v537
        %594 = vmatpush1.bf16.msra.mxu0 %v536
        %595 = vmatprep.subr.bf16.mxu0 %v534
        %596 = vmatpush1.bf16.msra.mxu0 %v533
        %597 = vmatprep.subr.bf16.mxu0 0
        %598 = vmatpush2.bf16.msra.mxu0 0
        %599 = vmatprep.subr.bf16.mxu0 0
        %600 = vmatpush2.bf16.msra.mxu0 0
        %601 = vmatprep.subr.bf16.mxu0 0
        %602 = vmatpush2.bf16.msra.mxu0 0
        %603 = vmatprep.subr.bf16.mxu0 0
        %604 = vmatpush2.bf16.msra.mxu0 0
        %605 = vmatprep.subr.bf16.mxu0 0
        %606 = vmatpush2.bf16.msra.mxu0 0
        %607 = vmatprep.subr.bf16.mxu0 0
        %608 = vmatpush2.bf16.msra.mxu0 0
        %609 = vmatprep.subr.bf16.mxu0 0
        %610 = vmatpush2.bf16.msra.mxu0 0
        %611 = vmatprep.subr.bf16.mxu0 0
        %612 = vmatpush2.bf16.msra.mxu0 0
        %613 = vmatprep.mubr.bf16.mxu0 0
        %614 = vmatmul.mubr.bf16.gmra.mxu0 %v421
        %v615 = vpop.f32.mrf.mxu0
        %v616 = vadd.f32 %v345, %v615
        %v617 = vpop.f32.mrf.mxu0
        %v618 = vadd.f32 %v349, %v617
        %v619 = vpop.f32.mrf.mxu0
        %v620 = vadd.f32 %v345, %v619
        %v621 = vpop.f32.mrf.mxu0
        %v622 = vadd.f32 %v349, %v621
        %623 = vmatprep.mubr.bf16.mxu0 0
        %624 = vmatmul.mubr.bf16.gmra.mxu0 %v422
        %v625 = vpop.f32.mrf.mxu0
        %v626 = vadd.f32 %v345, %v625
        %v627 = vpop.f32.mrf.mxu0
        %v628 = vadd.f32 %v349, %v627
        %v629 = vpop.f32.mrf.mxu0
        %v630 = vadd.f32 %v345, %v629
        %v631 = vpop.f32.mrf.mxu0
        %v632 = vadd.f32 %v349, %v631
        %633 = vmatprep.mubr.bf16.mxu0 0
        %634 = vmatmul.mubr.bf16.gmra.mxu0 %v423
        %v635 = vpop.f32.mrf.mxu0
        %v636 = vadd.f32 %v345, %v635
        %v637 = vpop.f32.mrf.mxu0
        %v638 = vadd.f32 %v349, %v637
        %v639 = vpop.f32.mrf.mxu0
        %v640 = vadd.f32 %v345, %v639
        %v641 = vpop.f32.mrf.mxu0
        %v642 = vadd.f32 %v349, %v641
        %643 = vmatprep.mubr.bf16.mxu0 0
        %644 = vmatmul.mubr.bf16.gmra.mxu0 %v424
        %v645 = vpop.f32.mrf.mxu0
        %v646 = vadd.f32 %v345, %v645
        %v647 = vpop.f32.mrf.mxu0
        %v648 = vadd.f32 %v349, %v647
        %v649 = vpop.f32.mrf.mxu0
        %v650 = vadd.f32 %v345, %v649
        %v651 = vpop.f32.mrf.mxu0
        %v652 = vadd.f32 %v349, %v651
        %653 = vmatprep.mubr.bf16.mxu0 0
        %654 = vmatmul.mubr.bf16.gmra.mxu0 %v425
        %v655 = vpop.f32.mrf.mxu0
        %v656 = vadd.f32 %v345, %v655
        %v657 = vpop.f32.mrf.mxu0
        %v658 = vadd.f32 %v349, %v657
        %v659 = vpop.f32.mrf.mxu0
        %v660 = vadd.f32 %v345, %v659
        %v661 = vpop.f32.mrf.mxu0
        %v662 = vadd.f32 %v349, %v661
        %663 = vmatprep.mubr.bf16.mxu0 0
        %664 = vmatmul.mubr.bf16.gmra.mxu0 %v426
        %v665 = vpop.f32.mrf.mxu0
        %v666 = vadd.f32 %v345, %v665
        %v667 = vpop.f32.mrf.mxu0
        %v668 = vadd.f32 %v349, %v667
        %v669 = vpop.f32.mrf.mxu0
        %v670 = vadd.f32 %v345, %v669
        %v671 = vpop.f32.mrf.mxu0
        %v672 = vadd.f32 %v349, %v671
        %673 = vmatprep.mubr.bf16.mxu0 0
        %674 = vmatmul.mubr.bf16.gmra.mxu0 %v427
        %v675 = vpop.f32.mrf.mxu0
        %v676 = vadd.f32 %v345, %v675
        %v677 = vpop.f32.mrf.mxu0
        %v678 = vadd.f32 %v349, %v677
        %v679 = vpop.f32.mrf.mxu0
        %v680 = vadd.f32 %v345, %v679
        %v681 = vpop.f32.mrf.mxu0
        %v682 = vadd.f32 %v349, %v681
        %683 = vmatprep.mubr.bf16.mxu0 0
        %684 = vmatmul.mubr.bf16.gmra.mxu0 %v428
        %v685 = vpop.f32.mrf.mxu0
        %v686 = vadd.f32 %v345, %v685
        %v687 = vpop.f32.mrf.mxu0
        %v688 = vadd.f32 %v349, %v687
        %v689 = vpop.f32.mrf.mxu0
        %v690 = vadd.f32 %v345, %v689
        %v691 = vpop.f32.mrf.mxu0
        %v692 = vadd.f32 %v349, %v691
        %693 = vmatprep.mubr.bf16.mxu0 0
        %694 = vmatmul.mubr.bf16.gmra.mxu0 %v429
        %v695 = vpop.f32.mrf.mxu0
        %v696 = vadd.f32 %v345, %v695
        %v697 = vpop.f32.mrf.mxu0
        %v698 = vadd.f32 %v349, %v697
        %v699 = vpop.f32.mrf.mxu0
        %v700 = vadd.f32 %v345, %v699
        %v701 = vpop.f32.mrf.mxu0
        %v702 = vadd.f32 %v349, %v701
        %703 = vmatprep.mubr.bf16.mxu0 0
        %704 = vmatmul.mubr.bf16.gmra.mxu0 %v430
        %v705 = vpop.f32.mrf.mxu0
        %v706 = vadd.f32 %v345, %v705
        %v707 = vpop.f32.mrf.mxu0
        %v708 = vadd.f32 %v349, %v707
        %v709 = vpop.f32.mrf.mxu0
        %v710 = vadd.f32 %v345, %v709
        %v711 = vpop.f32.mrf.mxu0
        %v712 = vadd.f32 %v349, %v711
        %713 = vmatprep.mubr.bf16.mxu0 0
        %714 = vmatmul.mubr.bf16.gmra.mxu0 %v431
        %v715 = vpop.f32.mrf.mxu0
        %v716 = vadd.f32 %v345, %v715
        %v717 = vpop.f32.mrf.mxu0
        %v718 = vadd.f32 %v349, %v717
        %v719 = vpop.f32.mrf.mxu0
        %v720 = vadd.f32 %v345, %v719
        %v721 = vpop.f32.mrf.mxu0
        %v722 = vadd.f32 %v349, %v721
        %723 = vmatprep.mubr.bf16.mxu0 0
        %724 = vmatmul.mubr.bf16.gmra.mxu0 %v432
        %v725 = vpop.f32.mrf.mxu0
        %v726 = vadd.f32 %v345, %v725
        %v727 = vpop.f32.mrf.mxu0
        %v728 = vadd.f32 %v349, %v727
        %v729 = vpop.f32.mrf.mxu0
        %v730 = vadd.f32 %v345, %v729
        %v731 = vpop.f32.mrf.mxu0
        %v732 = vadd.f32 %v349, %v731
        %733 = vmatprep.mubr.bf16.mxu0 0
        %734 = vmatmul.mubr.bf16.gmra.mxu0 %v433
        %v735 = vpop.f32.mrf.mxu0
        %v736 = vadd.f32 %v345, %v735
        %v737 = vpop.f32.mrf.mxu0
        %v738 = vadd.f32 %v349, %v737
        %v739 = vpop.f32.mrf.mxu0
        %v740 = vadd.f32 %v345, %v739
        %v741 = vpop.f32.mrf.mxu0
        %v742 = vadd.f32 %v349, %v741
        %743 = vmatprep.mubr.bf16.mxu0 0
        %744 = vmatmul.mubr.bf16.gmra.mxu0 %v434
        %v745 = vpop.f32.mrf.mxu0
        %v746 = vadd.f32 %v345, %v745
        %v747 = vpop.f32.mrf.mxu0
        %v748 = vadd.f32 %v349, %v747
        %v749 = vpop.f32.mrf.mxu0
        %v750 = vadd.f32 %v345, %v749
        %v751 = vpop.f32.mrf.mxu0
        %v752 = vadd.f32 %v349, %v751
        %753 = vmatprep.mubr.bf16.mxu0 0
        %754 = vmatmul.mubr.bf16.gmra.mxu0 %v435
        %v755 = vpop.f32.mrf.mxu0
        %v756 = vadd.f32 %v345, %v755
        %v757 = vpop.f32.mrf.mxu0
        %v758 = vadd.f32 %v349, %v757
        %v759 = vpop.f32.mrf.mxu0
        %v760 = vadd.f32 %v345, %v759
        %v761 = vpop.f32.mrf.mxu0
        %v762 = vadd.f32 %v349, %v761
        %763 = vmatprep.mubr.bf16.mxu0 0
        %764 = vmatmul.mubr.bf16.gmra.mxu0 %v436
        %v765 = vpop.f32.mrf.mxu0
        %v766 = vadd.f32 %v345, %v765
        %v767 = vpop.f32.mrf.mxu0
        %v768 = vadd.f32 %v349, %v767
        %v769 = vpop.f32.mrf.mxu0
        %v770 = vadd.f32 %v345, %v769
        %v771 = vpop.f32.mrf.mxu0
        %v772 = vadd.f32 %v349, %v771
        %773 = vdwg.mxu0
        %774 = vmatprep.subr.bf16.mxu0 0
        %775 = vmatpush1.bf16.msra.mxu0 %v556
        %776 = vmatprep.subr.bf16.mxu0 0
        %777 = vmatpush1.bf16.msra.mxu0 %v553
        %778 = vmatprep.subr.bf16.mxu0 0
        %779 = vmatpush1.bf16.msra.mxu0 %v550
        %780 = vmatprep.subr.bf16.mxu0 0
        %781 = vmatpush1.bf16.msra.mxu0 %v547
        %782 = vmatprep.subr.bf16.mxu0 0
        %783 = vmatpush1.bf16.msra.mxu0 %v544
        %784 = vmatprep.subr.bf16.mxu0 0
        %785 = vmatpush1.bf16.msra.mxu0 %v541
        %786 = vmatprep.subr.bf16.mxu0 0
        %787 = vmatpush1.bf16.msra.mxu0 %v538
        %788 = vmatprep.subr.bf16.mxu0 0
        %789 = vmatpush1.bf16.msra.mxu0 %v535
        %790 = vmatprep.subr.bf16.mxu0 0
        %791 = vmatpush2.bf16.msra.mxu0 0
        %792 = vmatprep.subr.bf16.mxu0 0
        %793 = vmatpush2.bf16.msra.mxu0 0
        %794 = vmatprep.subr.bf16.mxu0 0
        %795 = vmatpush2.bf16.msra.mxu0 0
        %796 = vmatprep.subr.bf16.mxu0 0
        %797 = vmatpush2.bf16.msra.mxu0 0
        %798 = vmatprep.subr.bf16.mxu0 0
        %799 = vmatpush2.bf16.msra.mxu0 0
        %800 = vmatprep.subr.bf16.mxu0 0
        %801 = vmatpush2.bf16.msra.mxu0 0
        %802 = vmatprep.subr.bf16.mxu0 0
        %803 = vmatpush2.bf16.msra.mxu0 0
        %804 = vmatprep.subr.bf16.mxu0 0
        %805 = vmatpush2.bf16.msra.mxu0 0
        %806 = vmatprep.mubr.bf16.mxu0 0
        %807 = vmatmul.mubr.bf16.gmra.mxu0 %v421
        %v808 = vpop.f32.mrf.mxu0
        %v809 = vadd.f32 %v353, %v808
        %v810 = vpop.f32.mrf.mxu0
        %v811 = vpop.f32.mrf.mxu0
        %v812 = vadd.f32 %v353, %v811
        %v813 = vpop.f32.mrf.mxu0
        %814 = vmatprep.mubr.bf16.mxu0 0
        %815 = vmatmul.mubr.bf16.gmra.mxu0 %v422
        %v816 = vpop.f32.mrf.mxu0
        %v817 = vadd.f32 %v353, %v816
        %v818 = vpop.f32.mrf.mxu0
        %v819 = vpop.f32.mrf.mxu0
        %v820 = vadd.f32 %v353, %v819
        %v821 = vpop.f32.mrf.mxu0
        %822 = vmatprep.mubr.bf16.mxu0 0
        %823 = vmatmul.mubr.bf16.gmra.mxu0 %v423
        %v824 = vpop.f32.mrf.mxu0
        %v825 = vadd.f32 %v353, %v824
        %v826 = vpop.f32.mrf.mxu0
        %v827 = vpop.f32.mrf.mxu0
        %v828 = vadd.f32 %v353, %v827
        %v829 = vpop.f32.mrf.mxu0
        %830 = vmatprep.mubr.bf16.mxu0 0
        %831 = vmatmul.mubr.bf16.gmra.mxu0 %v424
        %v832 = vpop.f32.mrf.mxu0
        %v833 = vadd.f32 %v353, %v832
        %v834 = vpop.f32.mrf.mxu0
        %v835 = vpop.f32.mrf.mxu0
        %v836 = vadd.f32 %v353, %v835
        %v837 = vpop.f32.mrf.mxu0
        %838 = vmatprep.mubr.bf16.mxu0 0
        %839 = vmatmul.mubr.bf16.gmra.mxu0 %v425
        %v840 = vpop.f32.mrf.mxu0
        %v841 = vadd.f32 %v353, %v840
        %v842 = vpop.f32.mrf.mxu0
        %v843 = vpop.f32.mrf.mxu0
        %v844 = vadd.f32 %v353, %v843
        %v845 = vpop.f32.mrf.mxu0
        %846 = vmatprep.mubr.bf16.mxu0 0
        %847 = vmatmul.mubr.bf16.gmra.mxu0 %v426
        %v848 = vpop.f32.mrf.mxu0
        %v849 = vadd.f32 %v353, %v848
        %v850 = vpop.f32.mrf.mxu0
        %v851 = vpop.f32.mrf.mxu0
        %v852 = vadd.f32 %v353, %v851
        %v853 = vpop.f32.mrf.mxu0
        %854 = vmatprep.mubr.bf16.mxu0 0
        %855 = vmatmul.mubr.bf16.gmra.mxu0 %v427
        %v856 = vpop.f32.mrf.mxu0
        %v857 = vadd.f32 %v353, %v856
        %v858 = vpop.f32.mrf.mxu0
        %v859 = vpop.f32.mrf.mxu0
        %v860 = vadd.f32 %v353, %v859
        %v861 = vpop.f32.mrf.mxu0
        %862 = vmatprep.mubr.bf16.mxu0 0
        %863 = vmatmul.mubr.bf16.gmra.mxu0 %v428
        %v864 = vpop.f32.mrf.mxu0
        %v865 = vadd.f32 %v353, %v864
        %v866 = vpop.f32.mrf.mxu0
        %v867 = vpop.f32.mrf.mxu0
        %v868 = vadd.f32 %v353, %v867
        %v869 = vpop.f32.mrf.mxu0
        %870 = vmatprep.mubr.bf16.mxu0 0
        %871 = vmatmul.mubr.bf16.gmra.mxu0 %v429
        %v872 = vpop.f32.mrf.mxu0
        %v873 = vadd.f32 %v353, %v872
        %v874 = vpop.f32.mrf.mxu0
        %v875 = vpop.f32.mrf.mxu0
        %v876 = vadd.f32 %v353, %v875
        %v877 = vpop.f32.mrf.mxu0
        %878 = vmatprep.mubr.bf16.mxu0 0
        %879 = vmatmul.mubr.bf16.gmra.mxu0 %v430
        %v880 = vpop.f32.mrf.mxu0
        %v881 = vadd.f32 %v353, %v880
        %v882 = vpop.f32.mrf.mxu0
        %v883 = vpop.f32.mrf.mxu0
        %v884 = vadd.f32 %v353, %v883
        %v885 = vpop.f32.mrf.mxu0
        %886 = vmatprep.mubr.bf16.mxu0 0
        %887 = vmatmul.mubr.bf16.gmra.mxu0 %v431
        %v888 = vpop.f32.mrf.mxu0
        %v889 = vadd.f32 %v353, %v888
        %v890 = vpop.f32.mrf.mxu0
        %v891 = vpop.f32.mrf.mxu0
        %v892 = vadd.f32 %v353, %v891
        %v893 = vpop.f32.mrf.mxu0
        %894 = vmatprep.mubr.bf16.mxu0 0
        %895 = vmatmul.mubr.bf16.gmra.mxu0 %v432
        %v896 = vpop.f32.mrf.mxu0
        %v897 = vadd.f32 %v353, %v896
        %v898 = vpop.f32.mrf.mxu0
        %v899 = vpop.f32.mrf.mxu0
        %v900 = vadd.f32 %v353, %v899
        %v901 = vpop.f32.mrf.mxu0
        %902 = vmatprep.mubr.bf16.mxu0 0
        %903 = vmatmul.mubr.bf16.gmra.mxu0 %v433
        %v904 = vpop.f32.mrf.mxu0
        %v905 = vadd.f32 %v353, %v904
        %v906 = vpop.f32.mrf.mxu0
        %v907 = vpop.f32.mrf.mxu0
        %v908 = vadd.f32 %v353, %v907
        %v909 = vpop.f32.mrf.mxu0
        %910 = vmatprep.mubr.bf16.mxu0 0
        %911 = vmatmul.mubr.bf16.gmra.mxu0 %v434
        %v912 = vpop.f32.mrf.mxu0
        %v913 = vadd.f32 %v353, %v912
        %v914 = vpop.f32.mrf.mxu0
        %v915 = vpop.f32.mrf.mxu0
        %v916 = vadd.f32 %v353, %v915
        %v917 = vpop.f32.mrf.mxu0
        %918 = vmatprep.mubr.bf16.mxu0 0
        %919 = vmatmul.mubr.bf16.gmra.mxu0 %v435
        %v920 = vpop.f32.mrf.mxu0
        %v921 = vadd.f32 %v353, %v920
        %v922 = vpop.f32.mrf.mxu0
        %v923 = vpop.f32.mrf.mxu0
        %v924 = vadd.f32 %v353, %v923
        %v925 = vpop.f32.mrf.mxu0
        %926 = vmatprep.mubr.bf16.mxu0 0
        %927 = vmatmul.mubr.bf16.gmra.mxu0 %v436
        %v928 = vpop.f32.mrf.mxu0
        %v929 = vadd.f32 %v353, %v928
        %v930 = vpop.f32.mrf.mxu0
        %v931 = vpop.f32.mrf.mxu0
        %v932 = vadd.f32 %v353, %v931
        %v933 = vpop.f32.mrf.mxu0
        %934 = vdwg.mxu0
        %v935 = vld [vmem:[#allocation7] sm:$0xf]
        %v936 = vld [vmem:[#allocation7 + $0x4] sm:$0xf]
        %v937 = vld [vmem:[#allocation7 + $0x8] sm:$0xf]
        %v938 = vld [vmem:[#allocation7 + $0xc] sm:$0xf]
        %v939 = vld [vmem:[#allocation7 + $0x10] sm:$0xf]
        %v940 = vld [vmem:[#allocation7 + $0x14] sm:$0xf]
        %v941 = vld [vmem:[#allocation7 + $0x18] sm:$0xf]
        %v942 = vld [vmem:[#allocation7 + $0x1c] sm:$0xf]
        %v943 = vld [vmem:[#allocation7 + $0x20] sm:$0xf]
        %v944 = vld [vmem:[#allocation7 + $0x24] sm:$0xf]
        %v945 = vld [vmem:[#allocation7 + $0x28] sm:$0xf]
        %v946 = vld [vmem:[#allocation7 + $0x2c] sm:$0xf]
        %v947 = vld [vmem:[#allocation7 + $0x30] sm:$0xf]
        %v948 = vld [vmem:[#allocation7 + $0x34] sm:$0xf]
        %v949 = vld [vmem:[#allocation7 + $0x38] sm:$0xf]
        %v950 = vld [vmem:[#allocation7 + $0x3c] sm:$0xf]
        %v951 = vmul.f32 %v616, 0.088388346
        %v952 = vmul.f32 %v620, 0.088388346
        %v953 = vmul.f32 %v626, 0.088388346
        %v954 = vmul.f32 %v630, 0.088388346
        %v955 = vmul.f32 %v636, 0.088388346
        %v956 = vmul.f32 %v640, 0.088388346
        %v957 = vmul.f32 %v646, 0.088388346
        %v958 = vmul.f32 %v650, 0.088388346
        %v959 = vmul.f32 %v656, 0.088388346
        %v960 = vmul.f32 %v660, 0.088388346
        %v961 = vmul.f32 %v666, 0.088388346
        %v962 = vmul.f32 %v670, 0.088388346
        %v963 = vmul.f32 %v676, 0.088388346
        %v964 = vmul.f32 %v680, 0.088388346
        %v965 = vmul.f32 %v686, 0.088388346
        %v966 = vmul.f32 %v690, 0.088388346
        %v967 = vmul.f32 %v696, 0.088388346
        %v968 = vmul.f32 %v700, 0.088388346
        %v969 = vmul.f32 %v706, 0.088388346
        %v970 = vmul.f32 %v710, 0.088388346
        %v971 = vmul.f32 %v716, 0.088388346
        %v972 = vmul.f32 %v720, 0.088388346
        %v973 = vmul.f32 %v726, 0.088388346
        %v974 = vmul.f32 %v730, 0.088388346
        %v975 = vmul.f32 %v736, 0.088388346
        %v976 = vmul.f32 %v740, 0.088388346
        %v977 = vmul.f32 %v746, 0.088388346
        %v978 = vmul.f32 %v750, 0.088388346
        %v979 = vmul.f32 %v756, 0.088388346
        %v980 = vmul.f32 %v760, 0.088388346
        %v981 = vmul.f32 %v766, 0.088388346
        %v982 = vmul.f32 %v770, 0.088388346
        %v983 = vpack.c.bf16 %v952, %v951
        %v984 = vpack.c.bf16 %v954, %v953
        %v985 = vpack.c.bf16 %v956, %v955
        %v986 = vpack.c.bf16 %v958, %v957
        %v987 = vpack.c.bf16 %v960, %v959
        %v988 = vpack.c.bf16 %v962, %v961
        %v989 = vpack.c.bf16 %v964, %v963
        %v990 = vpack.c.bf16 %v966, %v965
        %v991 = vpack.c.bf16 %v968, %v967
        %v992 = vpack.c.bf16 %v970, %v969
        %v993 = vpack.c.bf16 %v972, %v971
        %v994 = vpack.c.bf16 %v974, %v973
        %v995 = vpack.c.bf16 %v976, %v975
        %v996 = vpack.c.bf16 %v978, %v977
        %v997 = vpack.c.bf16 %v980, %v979
        %v998 = vpack.c.bf16 %v982, %v981
        %v999 = vpack.c.bf16 %v622, %v618
        %v1000 = vpack.c.bf16 %v632, %v628
        %v1001 = vpack.c.bf16 %v642, %v638
        %v1002 = vpack.c.bf16 %v652, %v648
        %v1003 = vpack.c.bf16 %v662, %v658
        %v1004 = vpack.c.bf16 %v672, %v668
        %v1005 = vpack.c.bf16 %v682, %v678
        %v1006 = vpack.c.bf16 %v692, %v688
        %v1007 = vpack.c.bf16 %v702, %v698
        %v1008 = vpack.c.bf16 %v712, %v708
        %v1009 = vpack.c.bf16 %v722, %v718
        %v1010 = vpack.c.bf16 %v732, %v728
        %v1011 = vpack.c.bf16 %v742, %v738
        %v1012 = vpack.c.bf16 %v752, %v748
        %v1013 = vpack.c.bf16 %v762, %v758
        %v1014 = vpack.c.bf16 %v772, %v768
        %v1015 = vpack.c.bf16 %v812, %v809
        %v1016 = vpack.c.bf16 %v820, %v817
        %v1017 = vpack.c.bf16 %v828, %v825
        %v1018 = vpack.c.bf16 %v836, %v833
        %v1019 = vpack.c.bf16 %v844, %v841
        %v1020 = vpack.c.bf16 %v852, %v849
        %v1021 = vpack.c.bf16 %v860, %v857
        %v1022 = vpack.c.bf16 %v868, %v865
        %v1023 = vpack.c.bf16 %v876, %v873
        %v1024 = vpack.c.bf16 %v884, %v881
        %v1025 = vpack.c.bf16 %v892, %v889
        %v1026 = vpack.c.bf16 %v900, %v897
        %v1027 = vpack.c.bf16 %v908, %v905
        %v1028 = vpack.c.bf16 %v916, %v913
        %v1029 = vpack.c.bf16 %v924, %v921
        %v1030 = vpack.c.bf16 %v932, %v929
        %vm1031 = vcmask 261120
        %v1033 = vsel %vm1031, %v983, 0
        %v1036 = vsel %vm1031, %v984, 0
        %v1039 = vsel %vm1031, %v985, 0
        %v1042 = vsel %vm1031, %v986, 0
        %v1045 = vsel %vm1031, %v999, 0
        %v1048 = vsel %vm1031, %v1000, 0
        %v1051 = vsel %vm1031, %v1001, 0
        %v1054 = vsel %vm1031, %v1002, 0
        %1056 = vmatprep.subr.bf16.mxu0 0
        %1057 = vmatpush1.bf16.xpose.msra.mxu0 0
        %1058 = vmatprep.subr.bf16.mxu0 0
        %1059 = vmatpush1.bf16.xpose.msra.mxu0 0
        %1060 = vmatprep.subr.bf16.mxu0 0
        %1061 = vmatpush1.bf16.xpose.msra.mxu0 0
        %1062 = vmatprep.subr.bf16.mxu0 0
        %1063 = vmatpush1.bf16.xpose.msra.mxu0 0
        %1064 = vmatprep.subr.bf16.mxu0 0
        %1065 = vmatpush1.bf16.xpose.msra.mxu0 %v1054
        %1066 = vmatprep.subr.bf16.mxu0 0
        %1067 = vmatpush1.bf16.xpose.msra.mxu0 %v1051
        %1068 = vmatprep.subr.bf16.mxu0 0
        %1069 = vmatpush1.bf16.xpose.msra.mxu0 %v1048
        %1070 = vmatprep.subr.bf16.mxu0 0
        %1071 = vmatpush1.bf16.xpose.msra.mxu0 %v1045
        %1072 = vmatprep.subr.bf16.mxu0 0
        %1073 = vmatpush2.bf16.xpose.msra.mxu0 0
        %1074 = vmatprep.subr.bf16.mxu0 0
        %1075 = vmatpush2.bf16.xpose.msra.mxu0 0
        %1076 = vmatprep.subr.bf16.mxu0 0
        %1077 = vmatpush2.bf16.xpose.msra.mxu0 0
        %1078 = vmatprep.subr.bf16.mxu0 0
        %1079 = vmatpush2.bf16.xpose.msra.mxu0 0
        %1080 = vmatprep.subr.bf16.mxu0 0
        %1081 = vmatpush2.bf16.xpose.msra.mxu0 0
        %1082 = vmatprep.subr.bf16.mxu0 0
        %1083 = vmatpush2.bf16.xpose.msra.mxu0 0
        %1084 = vmatprep.subr.bf16.mxu0 0
        %1085 = vmatpush2.bf16.xpose.msra.mxu0 0
        %1086 = vmatprep.subr.bf16.mxu0 0
        %1087 = vmatpush2.bf16.xpose.msra.mxu0 0
        %1088 = vmatprep.mubr.bf16.mxu0 0
        %1089 = vmatmul.mubr.bf16.gmra.mxu0 %v1033
        %v1090 = vpop.f32.mrf.mxu0
        %v1091 = vadd.f32 0.0, %v1090
        %v1092 = vpop.f32.mrf.mxu0
        %v1093 = vpop.f32.mrf.mxu0
        %v1094 = vadd.f32 0.0, %v1093
        %v1095 = vpop.f32.mrf.mxu0
        %1096 = vmatprep.mubr.bf16.mxu0 0
        %1097 = vmatmul.mubr.bf16.gmra.mxu0 %v1036
        %v1098 = vpop.f32.mrf.mxu0
        %v1099 = vadd.f32 0.0, %v1098
        %v1100 = vpop.f32.mrf.mxu0
        %v1101 = vpop.f32.mrf.mxu0
        %v1102 = vadd.f32 0.0, %v1101
        %v1103 = vpop.f32.mrf.mxu0
        %1104 = vmatprep.mubr.bf16.mxu0 0
        %1105 = vmatmul.mubr.bf16.gmra.mxu0 %v1039
        %v1106 = vpop.f32.mrf.mxu0
        %v1107 = vadd.f32 0.0, %v1106
        %v1108 = vpop.f32.mrf.mxu0
        %v1109 = vpop.f32.mrf.mxu0
        %v1110 = vadd.f32 0.0, %v1109
        %v1111 = vpop.f32.mrf.mxu0
        %1112 = vmatprep.mubr.bf16.mxu0 0
        %1113 = vmatmul.mubr.bf16.gmra.mxu0 %v1042
        %v1114 = vpop.f32.mrf.mxu0
        %v1115 = vadd.f32 0.0, %v1114
        %v1116 = vpop.f32.mrf.mxu0
        %v1117 = vpop.f32.mrf.mxu0
        %v1118 = vadd.f32 0.0, %v1117
        %v1119 = vpop.f32.mrf.mxu0
        %1120 = vdwg.mxu0
        %v1122 = vsel %vm1031, %v987, 0
        %v1125 = vsel %vm1031, %v988, 0
        %v1128 = vsel %vm1031, %v989, 0
        %v1131 = vsel %vm1031, %v990, 0
        %v1134 = vsel %vm1031, %v1003, 0
        %v1137 = vsel %vm1031, %v1004, 0
        %v1140 = vsel %vm1031, %v1005, 0
        %v1143 = vsel %vm1031, %v1006, 0
        %1145 = vmatprep.subr.bf16.mxu0 0
        %1146 = vmatpush1.bf16.xpose.msra.mxu0 0
        %1147 = vmatprep.subr.bf16.mxu0 0
        %1148 = vmatpush1.bf16.xpose.msra.mxu0 0
        %1149 = vmatprep.subr.bf16.mxu0 0
        %1150 = vmatpush1.bf16.xpose.msra.mxu0 0
        %1151 = vmatprep.subr.bf16.mxu0 0
        %1152 = vmatpush1.bf16.xpose.msra.mxu0 0
        %1153 = vmatprep.subr.bf16.mxu0 0
        %1154 = vmatpush1.bf16.xpose.msra.mxu0 %v1143
        %1155 = vmatprep.subr.bf16.mxu0 0
        %1156 = vmatpush1.bf16.xpose.msra.mxu0 %v1140
        %1157 = vmatprep.subr.bf16.mxu0 0
        %1158 = vmatpush1.bf16.xpose.msra.mxu0 %v1137
        %1159 = vmatprep.subr.bf16.mxu0 0
        %1160 = vmatpush1.bf16.xpose.msra.mxu0 %v1134
        %1161 = vmatprep.subr.bf16.mxu0 0
        %1162 = vmatpush2.bf16.xpose.msra.mxu0 0
        %1163 = vmatprep.subr.bf16.mxu0 0
        %1164 = vmatpush2.bf16.xpose.msra.mxu0 0
        %1165 = vmatprep.subr.bf16.mxu0 0
        %1166 = vmatpush2.bf16.xpose.msra.mxu0 0
        %1167 = vmatprep.subr.bf16.mxu0 0
        %1168 = vmatpush2.bf16.xpose.msra.mxu0 0
        %1169 = vmatprep.subr.bf16.mxu0 0
        %1170 = vmatpush2.bf16.xpose.msra.mxu0 0
        %1171 = vmatprep.subr.bf16.mxu0 0
        %1172 = vmatpush2.bf16.xpose.msra.mxu0 0
        %1173 = vmatprep.subr.bf16.mxu0 0
        %1174 = vmatpush2.bf16.xpose.msra.mxu0 0
        %1175 = vmatprep.subr.bf16.mxu0 0
        %1176 = vmatpush2.bf16.xpose.msra.mxu0 0
        %1177 = vmatprep.mubr.bf16.mxu0 0
        %1178 = vmatmul.mubr.bf16.gmra.mxu0 %v1122
        %v1179 = vpop.f32.mrf.mxu0
        %v1180 = vadd.f32 0.0, %v1179
        %v1181 = vpop.f32.mrf.mxu0
        %v1182 = vpop.f32.mrf.mxu0
        %v1183 = vadd.f32 0.0, %v1182
        %v1184 = vpop.f32.mrf.mxu0
        %1185 = vmatprep.mubr.bf16.mxu0 0
        %1186 = vmatmul.mubr.bf16.gmra.mxu0 %v1125
        %v1187 = vpop.f32.mrf.mxu0
        %v1188 = vadd.f32 0.0, %v1187
        %v1189 = vpop.f32.mrf.mxu0
        %v1190 = vpop.f32.mrf.mxu0
        %v1191 = vadd.f32 0.0, %v1190
        %v1192 = vpop.f32.mrf.mxu0
        %1193 = vmatprep.mubr.bf16.mxu0 0
        %1194 = vmatmul.mubr.bf16.gmra.mxu0 %v1128
        %v1195 = vpop.f32.mrf.mxu0
        %v1196 = vadd.f32 0.0, %v1195
        %v1197 = vpop.f32.mrf.mxu0
        %v1198 = vpop.f32.mrf.mxu0
        %v1199 = vadd.f32 0.0, %v1198
        %v1200 = vpop.f32.mrf.mxu0
        %1201 = vmatprep.mubr.bf16.mxu0 0
        %1202 = vmatmul.mubr.bf16.gmra.mxu0 %v1131
        %v1203 = vpop.f32.mrf.mxu0
        %v1204 = vadd.f32 0.0, %v1203
        %v1205 = vpop.f32.mrf.mxu0
        %v1206 = vpop.f32.mrf.mxu0
        %v1207 = vadd.f32 0.0, %v1206
        %v1208 = vpop.f32.mrf.mxu0
        %1209 = vdwg.mxu0
        %v1211 = vsel %vm1031, %v991, 0
        %v1214 = vsel %vm1031, %v992, 0
        %v1217 = vsel %vm1031, %v993, 0
        %v1220 = vsel %vm1031, %v994, 0
        %v1223 = vsel %vm1031, %v1007, 0
        %v1226 = vsel %vm1031, %v1008, 0
        %v1229 = vsel %vm1031, %v1009, 0
        %v1232 = vsel %vm1031, %v1010, 0
        %1234 = vmatprep.subr.bf16.mxu0 0
        %1235 = vmatpush1.bf16.xpose.msra.mxu0 0
        %1236 = vmatprep.subr.bf16.mxu0 0
        %1237 = vmatpush1.bf16.xpose.msra.mxu0 0
        %1238 = vmatprep.subr.bf16.mxu0 0
        %1239 = vmatpush1.bf16.xpose.msra.mxu0 0
        %1240 = vmatprep.subr.bf16.mxu0 0
        %1241 = vmatpush1.bf16.xpose.msra.mxu0 0
        %1242 = vmatprep.subr.bf16.mxu0 0
        %1243 = vmatpush1.bf16.xpose.msra.mxu0 %v1232
        %1244 = vmatprep.subr.bf16.mxu0 0
        %1245 = vmatpush1.bf16.xpose.msra.mxu0 %v1229
        %1246 = vmatprep.subr.bf16.mxu0 0
        %1247 = vmatpush1.bf16.xpose.msra.mxu0 %v1226
        %1248 = vmatprep.subr.bf16.mxu0 0
        %1249 = vmatpush1.bf16.xpose.msra.mxu0 %v1223
        %1250 = vmatprep.subr.bf16.mxu0 0
        %1251 = vmatpush2.bf16.xpose.msra.mxu0 0
        %1252 = vmatprep.subr.bf16.mxu0 0
        %1253 = vmatpush2.bf16.xpose.msra.mxu0 0
        %1254 = vmatprep.subr.bf16.mxu0 0
        %1255 = vmatpush2.bf16.xpose.msra.mxu0 0
        %1256 = vmatprep.subr.bf16.mxu0 0
        %1257 = vmatpush2.bf16.xpose.msra.mxu0 0
        %1258 = vmatprep.subr.bf16.mxu0 0
        %1259 = vmatpush2.bf16.xpose.msra.mxu0 0
        %1260 = vmatprep.subr.bf16.mxu0 0
        %1261 = vmatpush2.bf16.xpose.msra.mxu0 0
        %1262 = vmatprep.subr.bf16.mxu0 0
        %1263 = vmatpush2.bf16.xpose.msra.mxu0 0
        %1264 = vmatprep.subr.bf16.mxu0 0
        %1265 = vmatpush2.bf16.xpose.msra.mxu0 0
        %1266 = vmatprep.mubr.bf16.mxu0 0
        %1267 = vmatmul.mubr.bf16.gmra.mxu0 %v1211
        %v1268 = vpop.f32.mrf.mxu0
        %v1269 = vadd.f32 0.0, %v1268
        %v1270 = vpop.f32.mrf.mxu0
        %v1271 = vpop.f32.mrf.mxu0
        %v1272 = vadd.f32 0.0, %v1271
        %v1273 = vpop.f32.mrf.mxu0
        %1274 = vmatprep.mubr.bf16.mxu0 0
        %1275 = vmatmul.mubr.bf16.gmra.mxu0 %v1214
        %v1276 = vpop.f32.mrf.mxu0
        %v1277 = vadd.f32 0.0, %v1276
        %v1278 = vpop.f32.mrf.mxu0
        %v1279 = vpop.f32.mrf.mxu0
        %v1280 = vadd.f32 0.0, %v1279
        %v1281 = vpop.f32.mrf.mxu0
        %1282 = vmatprep.mubr.bf16.mxu0 0
        %1283 = vmatmul.mubr.bf16.gmra.mxu0 %v1217
        %v1284 = vpop.f32.mrf.mxu0
        %v1285 = vadd.f32 0.0, %v1284
        %v1286 = vpop.f32.mrf.mxu0
        %v1287 = vpop.f32.mrf.mxu0
        %v1288 = vadd.f32 0.0, %v1287
        %v1289 = vpop.f32.mrf.mxu0
        %1290 = vmatprep.mubr.bf16.mxu0 0
        %1291 = vmatmul.mubr.bf16.gmra.mxu0 %v1220
        %v1292 = vpop.f32.mrf.mxu0
        %v1293 = vadd.f32 0.0, %v1292
        %v1294 = vpop.f32.mrf.mxu0
        %v1295 = vpop.f32.mrf.mxu0
        %v1296 = vadd.f32 0.0, %v1295
        %v1297 = vpop.f32.mrf.mxu0
        %1298 = vdwg.mxu0
        %v1300 = vsel %vm1031, %v995, 0
        %v1303 = vsel %vm1031, %v996, 0
        %v1306 = vsel %vm1031, %v997, 0
        %v1309 = vsel %vm1031, %v998, 0
        %v1312 = vsel %vm1031, %v1011, 0
        %v1315 = vsel %vm1031, %v1012, 0
        %v1318 = vsel %vm1031, %v1013, 0
        %v1321 = vsel %vm1031, %v1014, 0
        %1323 = vmatprep.subr.bf16.mxu0 0
        %1324 = vmatpush1.bf16.xpose.msra.mxu0 0
        %1325 = vmatprep.subr.bf16.mxu0 0
        %1326 = vmatpush1.bf16.xpose.msra.mxu0 0
        %1327 = vmatprep.subr.bf16.mxu0 0
        %1328 = vmatpush1.bf16.xpose.msra.mxu0 0
        %1329 = vmatprep.subr.bf16.mxu0 0
        %1330 = vmatpush1.bf16.xpose.msra.mxu0 0
        %1331 = vmatprep.subr.bf16.mxu0 0
        %1332 = vmatpush1.bf16.xpose.msra.mxu0 %v1321
        %1333 = vmatprep.subr.bf16.mxu0 0
        %1334 = vmatpush1.bf16.xpose.msra.mxu0 %v1318
        %1335 = vmatprep.subr.bf16.mxu0 0
        %1336 = vmatpush1.bf16.xpose.msra.mxu0 %v1315
        %1337 = vmatprep.subr.bf16.mxu0 0
        %1338 = vmatpush1.bf16.xpose.msra.mxu0 %v1312
        %1339 = vmatprep.subr.bf16.mxu0 0
        %1340 = vmatpush2.bf16.xpose.msra.mxu0 0
        %1341 = vmatprep.subr.bf16.mxu0 0
        %1342 = vmatpush2.bf16.xpose.msra.mxu0 0
        %1343 = vmatprep.subr.bf16.mxu0 0
        %1344 = vmatpush2.bf16.xpose.msra.mxu0 0
        %1345 = vmatprep.subr.bf16.mxu0 0
        %1346 = vmatpush2.bf16.xpose.msra.mxu0 0
        %1347 = vmatprep.subr.bf16.mxu0 0
        %1348 = vmatpush2.bf16.xpose.msra.mxu0 0
        %1349 = vmatprep.subr.bf16.mxu0 0
        %1350 = vmatpush2.bf16.xpose.msra.mxu0 0
        %1351 = vmatprep.subr.bf16.mxu0 0
        %1352 = vmatpush2.bf16.xpose.msra.mxu0 0
        %1353 = vmatprep.subr.bf16.mxu0 0
        %1354 = vmatpush2.bf16.xpose.msra.mxu0 0
        %1355 = vmatprep.mubr.bf16.mxu0 0
        %1356 = vmatmul.mubr.bf16.gmra.mxu0 %v1300
        %v1357 = vpop.f32.mrf.mxu0
        %v1358 = vadd.f32 0.0, %v1357
        %v1359 = vpop.f32.mrf.mxu0
        %v1360 = vpop.f32.mrf.mxu0
        %v1361 = vadd.f32 0.0, %v1360
        %v1362 = vpop.f32.mrf.mxu0
        %1363 = vmatprep.mubr.bf16.mxu0 0
        %1364 = vmatmul.mubr.bf16.gmra.mxu0 %v1303
        %v1365 = vpop.f32.mrf.mxu0
        %v1366 = vadd.f32 0.0, %v1365
        %v1367 = vpop.f32.mrf.mxu0
        %v1368 = vpop.f32.mrf.mxu0
        %v1369 = vadd.f32 0.0, %v1368
        %v1370 = vpop.f32.mrf.mxu0
        %1371 = vmatprep.mubr.bf16.mxu0 0
        %1372 = vmatmul.mubr.bf16.gmra.mxu0 %v1306
        %v1373 = vpop.f32.mrf.mxu0
        %v1374 = vadd.f32 0.0, %v1373
        %v1375 = vpop.f32.mrf.mxu0
        %v1376 = vpop.f32.mrf.mxu0
        %v1377 = vadd.f32 0.0, %v1376
        %v1378 = vpop.f32.mrf.mxu0
        %1379 = vmatprep.mubr.bf16.mxu0 0
        %1380 = vmatmul.mubr.bf16.gmra.mxu0 %v1309
        %v1381 = vpop.f32.mrf.mxu0
        %v1382 = vadd.f32 0.0, %v1381
        %v1383 = vpop.f32.mrf.mxu0
        %v1384 = vpop.f32.mrf.mxu0
        %v1385 = vadd.f32 0.0, %v1384
        %v1386 = vpop.f32.mrf.mxu0
        %1387 = vdwg.mxu0
        %vm1388 = vcmask 523264
        %v1389 = vsel %vm1388, %v1091, -inf
        %1390 = vmax.xlane.f32.xlu0 %v1389
        %v1391 = vpop.xlane.xlu0 %1390
        %v1392 = vsel %vm1388, %v1094, -inf
        %1393 = vmax.xlane.f32.xlu0 %v1392
        %v1394 = vpop.xlane.xlu0 %1393
        %v1395 = vsel %vm1388, %v1099, -inf
        %1396 = vmax.xlane.f32.xlu0 %v1395
        %v1397 = vpop.xlane.xlu0 %1396
        %v1398 = vsel %vm1388, %v1102, -inf
        %1399 = vmax.xlane.f32.xlu0 %v1398
        %v1400 = vpop.xlane.xlu0 %1399
        %v1401 = vsel %vm1388, %v1107, -inf
        %1402 = vmax.xlane.f32.xlu0 %v1401
        %v1403 = vpop.xlane.xlu0 %1402
        %v1404 = vsel %vm1388, %v1110, -inf
        %1405 = vmax.xlane.f32.xlu0 %v1404
        %v1406 = vpop.xlane.xlu0 %1405
        %v1407 = vsel %vm1388, %v1115, -inf
        %1408 = vmax.xlane.f32.xlu0 %v1407
        %v1409 = vpop.xlane.xlu0 %1408
        %v1410 = vsel %vm1388, %v1118, -inf
        %1411 = vmax.xlane.f32.xlu0 %v1410
        %v1412 = vpop.xlane.xlu0 %1411
        %v1413 = vsel %vm1388, %v1180, -inf
        %1414 = vmax.xlane.f32.xlu0 %v1413
        %v1415 = vpop.xlane.xlu0 %1414
        %v1416 = vsel %vm1388, %v1183, -inf
        %1417 = vmax.xlane.f32.xlu0 %v1416
        %v1418 = vpop.xlane.xlu0 %1417
        %v1419 = vsel %vm1388, %v1188, -inf
        %1420 = vmax.xlane.f32.xlu0 %v1419
        %v1421 = vpop.xlane.xlu0 %1420
        %v1422 = vsel %vm1388, %v1191, -inf
        %1423 = vmax.xlane.f32.xlu0 %v1422
        %v1424 = vpop.xlane.xlu0 %1423
        %v1425 = vsel %vm1388, %v1196, -inf
        %1426 = vmax.xlane.f32.xlu0 %v1425
        %v1427 = vpop.xlane.xlu0 %1426
        %v1428 = vsel %vm1388, %v1199, -inf
        %1429 = vmax.xlane.f32.xlu0 %v1428
        %v1430 = vpop.xlane.xlu0 %1429
        %v1431 = vsel %vm1388, %v1204, -inf
        %1432 = vmax.xlane.f32.xlu0 %v1431
        %v1433 = vpop.xlane.xlu0 %1432
        %v1434 = vsel %vm1388, %v1207, -inf
        %1435 = vmax.xlane.f32.xlu0 %v1434
        %v1436 = vpop.xlane.xlu0 %1435
        %v1437 = vsel %vm1388, %v1269, -inf
        %1438 = vmax.xlane.f32.xlu0 %v1437
        %v1439 = vpop.xlane.xlu0 %1438
        %v1440 = vsel %vm1388, %v1272, -inf
        %1441 = vmax.xlane.f32.xlu0 %v1440
        %v1442 = vpop.xlane.xlu0 %1441
        %v1443 = vsel %vm1388, %v1277, -inf
        %1444 = vmax.xlane.f32.xlu0 %v1443
        %v1445 = vpop.xlane.xlu0 %1444
        %v1446 = vsel %vm1388, %v1280, -inf
        %1447 = vmax.xlane.f32.xlu0 %v1446
        %v1448 = vpop.xlane.xlu0 %1447
        %v1449 = vsel %vm1388, %v1285, -inf
        %1450 = vmax.xlane.f32.xlu0 %v1449
        %v1451 = vpop.xlane.xlu0 %1450
        %v1452 = vsel %vm1388, %v1288, -inf
        %1453 = vmax.xlane.f32.xlu0 %v1452
        %v1454 = vpop.xlane.xlu0 %1453
        %v1455 = vsel %vm1388, %v1293, -inf
        %1456 = vmax.xlane.f32.xlu0 %v1455
        %v1457 = vpop.xlane.xlu0 %1456
        %v1458 = vsel %vm1388, %v1296, -inf
        %1459 = vmax.xlane.f32.xlu0 %v1458
        %v1460 = vpop.xlane.xlu0 %1459
        %v1461 = vsel %vm1388, %v1358, -inf
        %1462 = vmax.xlane.f32.xlu0 %v1461
        %v1463 = vpop.xlane.xlu0 %1462
        %v1464 = vsel %vm1388, %v1361, -inf
        %1465 = vmax.xlane.f32.xlu0 %v1464
        %v1466 = vpop.xlane.xlu0 %1465
        %v1467 = vsel %vm1388, %v1366, -inf
        %1468 = vmax.xlane.f32.xlu0 %v1467
        %v1469 = vpop.xlane.xlu0 %1468
        %v1470 = vsel %vm1388, %v1369, -inf
        %1471 = vmax.xlane.f32.xlu0 %v1470
        %v1472 = vpop.xlane.xlu0 %1471
        %v1473 = vsel %vm1388, %v1374, -inf
        %1474 = vmax.xlane.f32.xlu0 %v1473
        %v1475 = vpop.xlane.xlu0 %1474
        %v1476 = vsel %vm1388, %v1377, -inf
        %1477 = vmax.xlane.f32.xlu0 %v1476
        %v1478 = vpop.xlane.xlu0 %1477
        %v1479 = vsel %vm1388, %v1382, -inf
        %1480 = vmax.xlane.f32.xlu0 %v1479
        %v1481 = vpop.xlane.xlu0 %1480
        %v1482 = vsel %vm1388, %v1385, -inf
        %1483 = vmax.xlane.f32.xlu0 %v1482
        %v1484 = vpop.xlane.xlu0 %1483
        %v1485 = vsub.f32 %v1091, %v1391
        %v1486 = vsub.f32 %v1094, %v1394
        %v1487 = vsub.f32 %v1099, %v1397
        %v1488 = vsub.f32 %v1102, %v1400
        %v1489 = vsub.f32 %v1107, %v1403
        %v1490 = vsub.f32 %v1110, %v1406
        %v1491 = vsub.f32 %v1115, %v1409
        %v1492 = vsub.f32 %v1118, %v1412
        %v1493 = vsub.f32 %v1180, %v1415
        %v1494 = vsub.f32 %v1183, %v1418
        %v1495 = vsub.f32 %v1188, %v1421
        %v1496 = vsub.f32 %v1191, %v1424
        %v1497 = vsub.f32 %v1196, %v1427
        %v1498 = vsub.f32 %v1199, %v1430
        %v1499 = vsub.f32 %v1204, %v1433
        %v1500 = vsub.f32 %v1207, %v1436
        %v1501 = vsub.f32 %v1269, %v1439
        %v1502 = vsub.f32 %v1272, %v1442
        %v1503 = vsub.f32 %v1277, %v1445
        %v1504 = vsub.f32 %v1280, %v1448
        %v1505 = vsub.f32 %v1285, %v1451
        %v1506 = vsub.f32 %v1288, %v1454
        %v1507 = vsub.f32 %v1293, %v1457
        %v1508 = vsub.f32 %v1296, %v1460
        %v1509 = vsub.f32 %v1358, %v1463
        %v1510 = vsub.f32 %v1361, %v1466
        %v1511 = vsub.f32 %v1366, %v1469
        %v1512 = vsub.f32 %v1369, %v1472
        %v1513 = vsub.f32 %v1374, %v1475
        %v1514 = vsub.f32 %v1377, %v1478
        %v1515 = vsub.f32 %v1382, %v1481
        %v1516 = vsub.f32 %v1385, %v1484
        %v1517 = vmul.f32 %v1485, 1.442695
        %v1518 = vpow.pop %v1517
        %v1519 = vmul.f32 %v1486, 1.442695
        %v1520 = vpow.pop %v1519
        %v1521 = vmul.f32 %v1487, 1.442695
        %v1522 = vpow.pop %v1521
        %v1523 = vmul.f32 %v1488, 1.442695
        %v1524 = vpow.pop %v1523
        %v1525 = vmul.f32 %v1489, 1.442695
        %v1526 = vpow.pop %v1525
        %v1527 = vmul.f32 %v1490, 1.442695
        %v1528 = vpow.pop %v1527
        %v1529 = vmul.f32 %v1491, 1.442695
        %v1530 = vpow.pop %v1529
        %v1531 = vmul.f32 %v1492, 1.442695
        %v1532 = vpow.pop %v1531
        %v1533 = vmul.f32 %v1493, 1.442695
        %v1534 = vpow.pop %v1533
        %v1535 = vmul.f32 %v1494, 1.442695
        %v1536 = vpow.pop %v1535
        %v1537 = vmul.f32 %v1495, 1.442695
        %v1538 = vpow.pop %v1537
        %v1539 = vmul.f32 %v1496, 1.442695
        %v1540 = vpow.pop %v1539
        %v1541 = vmul.f32 %v1497, 1.442695
        %v1542 = vpow.pop %v1541
        %v1543 = vmul.f32 %v1498, 1.442695
        %v1544 = vpow.pop %v1543
        %v1545 = vmul.f32 %v1499, 1.442695
        %v1546 = vpow.pop %v1545
        %v1547 = vmul.f32 %v1500, 1.442695
        %v1548 = vpow.pop %v1547
        %v1549 = vmul.f32 %v1501, 1.442695
        %v1550 = vpow.pop %v1549
        %v1551 = vmul.f32 %v1502, 1.442695
        %v1552 = vpow.pop %v1551
        %v1553 = vmul.f32 %v1503, 1.442695
        %v1554 = vpow.pop %v1553
        %v1555 = vmul.f32 %v1504, 1.442695
        %v1556 = vpow.pop %v1555
        %v1557 = vmul.f32 %v1505, 1.442695
        %v1558 = vpow.pop %v1557
        %v1559 = vmul.f32 %v1506, 1.442695
        %v1560 = vpow.pop %v1559
        %v1561 = vmul.f32 %v1507, 1.442695
        %v1562 = vpow.pop %v1561
        %v1563 = vmul.f32 %v1508, 1.442695
        %v1564 = vpow.pop %v1563
        %v1565 = vmul.f32 %v1509, 1.442695
        %v1566 = vpow.pop %v1565
        %v1567 = vmul.f32 %v1510, 1.442695
        %v1568 = vpow.pop %v1567
        %v1569 = vmul.f32 %v1511, 1.442695
        %v1570 = vpow.pop %v1569
        %v1571 = vmul.f32 %v1512, 1.442695
        %v1572 = vpow.pop %v1571
        %v1573 = vmul.f32 %v1513, 1.442695
        %v1574 = vpow.pop %v1573
        %v1575 = vmul.f32 %v1514, 1.442695
        %v1576 = vpow.pop %v1575
        %v1577 = vmul.f32 %v1515, 1.442695
        %v1578 = vpow.pop %v1577
        %v1579 = vmul.f32 %v1516, 1.442695
        %v1580 = vpow.pop %v1579
        %v1581 = vsel %vm1388, %v1518, 0.0
        %1582 = vadd.xlane.f32.xlu0 %v1581
        %v1583 = vpop.xlane.xlu0 %1582
        %v1584 = vsel %vm1388, %v1520, 0.0
        %1585 = vadd.xlane.f32.xlu0 %v1584
        %v1586 = vpop.xlane.xlu0 %1585
        %v1587 = vsel %vm1388, %v1522, 0.0
        %1588 = vadd.xlane.f32.xlu0 %v1587
        %v1589 = vpop.xlane.xlu0 %1588
        %v1590 = vsel %vm1388, %v1524, 0.0
        %1591 = vadd.xlane.f32.xlu0 %v1590
        %v1592 = vpop.xlane.xlu0 %1591
        %v1593 = vsel %vm1388, %v1526, 0.0
        %1594 = vadd.xlane.f32.xlu0 %v1593
        %v1595 = vpop.xlane.xlu0 %1594
        %v1596 = vsel %vm1388, %v1528, 0.0
        %1597 = vadd.xlane.f32.xlu0 %v1596
        %v1598 = vpop.xlane.xlu0 %1597
        %v1599 = vsel %vm1388, %v1530, 0.0
        %1600 = vadd.xlane.f32.xlu0 %v1599
        %v1601 = vpop.xlane.xlu0 %1600
        %v1602 = vsel %vm1388, %v1532, 0.0
        %1603 = vadd.xlane.f32.xlu0 %v1602
        %v1604 = vpop.xlane.xlu0 %1603
        %v1605 = vsel %vm1388, %v1534, 0.0
        %1606 = vadd.xlane.f32.xlu0 %v1605
        %v1607 = vpop.xlane.xlu0 %1606
        %v1608 = vsel %vm1388, %v1536, 0.0
        %1609 = vadd.xlane.f32.xlu0 %v1608
        %v1610 = vpop.xlane.xlu0 %1609
        %v1611 = vsel %vm1388, %v1538, 0.0
        %1612 = vadd.xlane.f32.xlu0 %v1611
        %v1613 = vpop.xlane.xlu0 %1612
        %v1614 = vsel %vm1388, %v1540, 0.0
        %1615 = vadd.xlane.f32.xlu0 %v1614
        %v1616 = vpop.xlane.xlu0 %1615
        %v1617 = vsel %vm1388, %v1542, 0.0
        %1618 = vadd.xlane.f32.xlu0 %v1617
        %v1619 = vpop.xlane.xlu0 %1618
        %v1620 = vsel %vm1388, %v1544, 0.0
        %1621 = vadd.xlane.f32.xlu0 %v1620
        %v1622 = vpop.xlane.xlu0 %1621
        %v1623 = vsel %vm1388, %v1546, 0.0
        %1624 = vadd.xlane.f32.xlu0 %v1623
        %v1625 = vpop.xlane.xlu0 %1624
        %v1626 = vsel %vm1388, %v1548, 0.0
        %1627 = vadd.xlane.f32.xlu0 %v1626
        %v1628 = vpop.xlane.xlu0 %1627
        %v1629 = vsel %vm1388, %v1550, 0.0
        %1630 = vadd.xlane.f32.xlu0 %v1629
        %v1631 = vpop.xlane.xlu0 %1630
        %v1632 = vsel %vm1388, %v1552, 0.0
        %1633 = vadd.xlane.f32.xlu0 %v1632
        %v1634 = vpop.xlane.xlu0 %1633
        %v1635 = vsel %vm1388, %v1554, 0.0
        %1636 = vadd.xlane.f32.xlu0 %v1635
        %v1637 = vpop.xlane.xlu0 %1636
        %v1638 = vsel %vm1388, %v1556, 0.0
        %1639 = vadd.xlane.f32.xlu0 %v1638
        %v1640 = vpop.xlane.xlu0 %1639
        %v1641 = vsel %vm1388, %v1558, 0.0
        %1642 = vadd.xlane.f32.xlu0 %v1641
        %v1643 = vpop.xlane.xlu0 %1642
        %v1644 = vsel %vm1388, %v1560, 0.0
        %1645 = vadd.xlane.f32.xlu0 %v1644
        %v1646 = vpop.xlane.xlu0 %1645
        %v1647 = vsel %vm1388, %v1562, 0.0
        %1648 = vadd.xlane.f32.xlu0 %v1647
        %v1649 = vpop.xlane.xlu0 %1648
        %v1650 = vsel %vm1388, %v1564, 0.0
        %1651 = vadd.xlane.f32.xlu0 %v1650
        %v1652 = vpop.xlane.xlu0 %1651
        %v1653 = vsel %vm1388, %v1566, 0.0
        %1654 = vadd.xlane.f32.xlu0 %v1653
        %v1655 = vpop.xlane.xlu0 %1654
        %v1656 = vsel %vm1388, %v1568, 0.0
        %1657 = vadd.xlane.f32.xlu0 %v1656
        %v1658 = vpop.xlane.xlu0 %1657
        %v1659 = vsel %vm1388, %v1570, 0.0
        %1660 = vadd.xlane.f32.xlu0 %v1659
        %v1661 = vpop.xlane.xlu0 %1660
        %v1662 = vsel %vm1388, %v1572, 0.0
        %1663 = vadd.xlane.f32.xlu0 %v1662
        %v1664 = vpop.xlane.xlu0 %1663
        %v1665 = vsel %vm1388, %v1574, 0.0
        %1666 = vadd.xlane.f32.xlu0 %v1665
        %v1667 = vpop.xlane.xlu0 %1666
        %v1668 = vsel %vm1388, %v1576, 0.0
        %1669 = vadd.xlane.f32.xlu0 %v1668
        %v1670 = vpop.xlane.xlu0 %1669
        %v1671 = vsel %vm1388, %v1578, 0.0
        %1672 = vadd.xlane.f32.xlu0 %v1671
        %v1673 = vpop.xlane.xlu0 %1672
        %v1674 = vsel %vm1388, %v1580, 0.0
        %1675 = vadd.xlane.f32.xlu0 %v1674
        %v1676 = vpop.xlane.xlu0 %1675
        %v1677 = vrcp.pop %v1583
        %v1678 = vmul.f32 %v1518, %v1677
        %v1679 = vrcp.pop %v1586
        %v1680 = vmul.f32 %v1520, %v1679
        %v1681 = vrcp.pop %v1589
        %v1682 = vmul.f32 %v1522, %v1681
        %v1683 = vrcp.pop %v1592
        %v1684 = vmul.f32 %v1524, %v1683
        %v1685 = vrcp.pop %v1595
        %v1686 = vmul.f32 %v1526, %v1685
        %v1687 = vrcp.pop %v1598
        %v1688 = vmul.f32 %v1528, %v1687
        %v1689 = vrcp.pop %v1601
        %v1690 = vmul.f32 %v1530, %v1689
        %v1691 = vrcp.pop %v1604
        %v1692 = vmul.f32 %v1532, %v1691
        %v1693 = vrcp.pop %v1607
        %v1694 = vmul.f32 %v1534, %v1693
        %v1695 = vrcp.pop %v1610
        %v1696 = vmul.f32 %v1536, %v1695
        %v1697 = vrcp.pop %v1613
        %v1698 = vmul.f32 %v1538, %v1697
        %v1699 = vrcp.pop %v1616
        %v1700 = vmul.f32 %v1540, %v1699
        %v1701 = vrcp.pop %v1619
        %v1702 = vmul.f32 %v1542, %v1701
        %v1703 = vrcp.pop %v1622
        %v1704 = vmul.f32 %v1544, %v1703
        %v1705 = vrcp.pop %v1625
        %v1706 = vmul.f32 %v1546, %v1705
        %v1707 = vrcp.pop %v1628
        %v1708 = vmul.f32 %v1548, %v1707
        %v1709 = vrcp.pop %v1631
        %v1710 = vmul.f32 %v1550, %v1709
        %v1711 = vrcp.pop %v1634
        %v1712 = vmul.f32 %v1552, %v1711
        %v1713 = vrcp.pop %v1637
        %v1714 = vmul.f32 %v1554, %v1713
        %v1715 = vrcp.pop %v1640
        %v1716 = vmul.f32 %v1556, %v1715
        %v1717 = vrcp.pop %v1643
        %v1718 = vmul.f32 %v1558, %v1717
        %v1719 = vrcp.pop %v1646
        %v1720 = vmul.f32 %v1560, %v1719
        %v1721 = vrcp.pop %v1649
        %v1722 = vmul.f32 %v1562, %v1721
        %v1723 = vrcp.pop %v1652
        %v1724 = vmul.f32 %v1564, %v1723
        %v1725 = vrcp.pop %v1655
        %v1726 = vmul.f32 %v1566, %v1725
        %v1727 = vrcp.pop %v1658
        %v1728 = vmul.f32 %v1568, %v1727
        %v1729 = vrcp.pop %v1661
        %v1730 = vmul.f32 %v1570, %v1729
        %v1731 = vrcp.pop %v1664
        %v1732 = vmul.f32 %v1572, %v1731
        %v1733 = vrcp.pop %v1667
        %v1734 = vmul.f32 %v1574, %v1733
        %v1735 = vrcp.pop %v1670
        %v1736 = vmul.f32 %v1576, %v1735
        %v1737 = vrcp.pop %v1673
        %v1738 = vmul.f32 %v1578, %v1737
        %v1739 = vrcp.pop %v1676
        %v1740 = vmul.f32 %v1580, %v1739
        %v1741 = vpack.c.bf16 %v1680, %v1678
        %v1742 = vpack.c.bf16 %v1684, %v1682
        %v1743 = vpack.c.bf16 %v1688, %v1686
        %v1744 = vpack.c.bf16 %v1692, %v1690
        %v1745 = vpack.c.bf16 %v1696, %v1694
        %v1746 = vpack.c.bf16 %v1700, %v1698
        %v1747 = vpack.c.bf16 %v1704, %v1702
        %v1748 = vpack.c.bf16 %v1708, %v1706
        %v1749 = vpack.c.bf16 %v1712, %v1710
        %v1750 = vpack.c.bf16 %v1716, %v1714
        %v1751 = vpack.c.bf16 %v1720, %v1718
        %v1752 = vpack.c.bf16 %v1724, %v1722
        %v1753 = vpack.c.bf16 %v1728, %v1726
        %v1754 = vpack.c.bf16 %v1732, %v1730
        %v1755 = vpack.c.bf16 %v1736, %v1734
        %v1756 = vpack.c.bf16 %v1740, %v1738
        %v1758 = vsel %vm1388, %v1741, 0
        %v1761 = vsel %vm1388, %v1742, 0
        %v1764 = vsel %vm1388, %v1743, 0
        %v1767 = vsel %vm1388, %v1744, 0
        %1769 = vmatprep.subr.bf16.mxu0 0
        %1770 = vmatpush1.bf16.msra.mxu0 0
        %1771 = vmatprep.subr.bf16.mxu0 0
        %1772 = vmatpush1.bf16.msra.mxu0 0
        %1773 = vmatprep.subr.bf16.mxu0 0
        %1774 = vmatpush1.bf16.msra.mxu0 0
        %1775 = vmatprep.subr.bf16.mxu0 0
        %1776 = vmatpush1.bf16.msra.mxu0 0
        %1777 = vmatprep.subr.bf16.mxu0 0
        %1778 = vmatpush1.bf16.msra.mxu0 %v1018
        %1779 = vmatprep.subr.bf16.mxu0 0
        %1780 = vmatpush1.bf16.msra.mxu0 %v1017
        %1781 = vmatprep.subr.bf16.mxu0 0
        %1782 = vmatpush1.bf16.msra.mxu0 %v1016
        %1783 = vmatprep.subr.bf16.mxu0 0
        %1784 = vmatpush1.bf16.msra.mxu0 %v1015
        %1785 = vmatprep.subr.bf16.mxu0 0
        %1786 = vmatpush2.bf16.msra.mxu0 0
        %1787 = vmatprep.subr.bf16.mxu0 0
        %1788 = vmatpush2.bf16.msra.mxu0 0
        %1789 = vmatprep.subr.bf16.mxu0 0
        %1790 = vmatpush2.bf16.msra.mxu0 0
        %1791 = vmatprep.subr.bf16.mxu0 0
        %1792 = vmatpush2.bf16.msra.mxu0 0
        %1793 = vmatprep.subr.bf16.mxu0 0
        %1794 = vmatpush2.bf16.msra.mxu0 0
        %1795 = vmatprep.subr.bf16.mxu0 0
        %1796 = vmatpush2.bf16.msra.mxu0 0
        %1797 = vmatprep.subr.bf16.mxu0 0
        %1798 = vmatpush2.bf16.msra.mxu0 0
        %1799 = vmatprep.subr.bf16.mxu0 0
        %1800 = vmatpush2.bf16.msra.mxu0 0
        %1801 = vmatprep.mubr.bf16.mxu0 0
        %1802 = vmatmul.mubr.bf16.gmra.mxu0 %v1758
        %v1803 = vpop.f32.mrf.mxu0
        %v1804 = vadd.f32 0.0, %v1803
        %v1805 = vpop.f32.mrf.mxu0
        %v1806 = vpop.f32.mrf.mxu0
        %v1807 = vadd.f32 0.0, %v1806
        %v1808 = vpop.f32.mrf.mxu0
        %1809 = vmatprep.mubr.bf16.mxu0 0
        %1810 = vmatmul.mubr.bf16.gmra.mxu0 %v1761
        %v1811 = vpop.f32.mrf.mxu0
        %v1812 = vadd.f32 0.0, %v1811
        %v1813 = vpop.f32.mrf.mxu0
        %v1814 = vpop.f32.mrf.mxu0
        %v1815 = vadd.f32 0.0, %v1814
        %v1816 = vpop.f32.mrf.mxu0
        %1817 = vmatprep.mubr.bf16.mxu0 0
        %1818 = vmatmul.mubr.bf16.gmra.mxu0 %v1764
        %v1819 = vpop.f32.mrf.mxu0
        %v1820 = vadd.f32 0.0, %v1819
        %v1821 = vpop.f32.mrf.mxu0
        %v1822 = vpop.f32.mrf.mxu0
        %v1823 = vadd.f32 0.0, %v1822
        %v1824 = vpop.f32.mrf.mxu0
        %1825 = vmatprep.mubr.bf16.mxu0 0
        %1826 = vmatmul.mubr.bf16.gmra.mxu0 %v1767
        %v1827 = vpop.f32.mrf.mxu0
        %v1828 = vadd.f32 0.0, %v1827
        %v1829 = vpop.f32.mrf.mxu0
        %v1830 = vpop.f32.mrf.mxu0
        %v1831 = vadd.f32 0.0, %v1830
        %v1832 = vpop.f32.mrf.mxu0
        %1833 = vdwg.mxu0
        %v1835 = vsel %vm1388, %v1745, 0
        %v1838 = vsel %vm1388, %v1746, 0
        %v1841 = vsel %vm1388, %v1747, 0
        %v1844 = vsel %vm1388, %v1748, 0
        %1846 = vmatprep.subr.bf16.mxu0 0
        %1847 = vmatpush1.bf16.msra.mxu0 0
        %1848 = vmatprep.subr.bf16.mxu0 0
        %1849 = vmatpush1.bf16.msra.mxu0 0
        %1850 = vmatprep.subr.bf16.mxu0 0
        %1851 = vmatpush1.bf16.msra.mxu0 0
        %1852 = vmatprep.subr.bf16.mxu0 0
        %1853 = vmatpush1.bf16.msra.mxu0 0
        %1854 = vmatprep.subr.bf16.mxu0 0
        %1855 = vmatpush1.bf16.msra.mxu0 %v1022
        %1856 = vmatprep.subr.bf16.mxu0 0
        %1857 = vmatpush1.bf16.msra.mxu0 %v1021
        %1858 = vmatprep.subr.bf16.mxu0 0
        %1859 = vmatpush1.bf16.msra.mxu0 %v1020
        %1860 = vmatprep.subr.bf16.mxu0 0
        %1861 = vmatpush1.bf16.msra.mxu0 %v1019
        %1862 = vmatprep.subr.bf16.mxu0 0
        %1863 = vmatpush2.bf16.msra.mxu0 0
        %1864 = vmatprep.subr.bf16.mxu0 0
        %1865 = vmatpush2.bf16.msra.mxu0 0
        %1866 = vmatprep.subr.bf16.mxu0 0
        %1867 = vmatpush2.bf16.msra.mxu0 0
        %1868 = vmatprep.subr.bf16.mxu0 0
        %1869 = vmatpush2.bf16.msra.mxu0 0
        %1870 = vmatprep.subr.bf16.mxu0 0
        %1871 = vmatpush2.bf16.msra.mxu0 0
        %1872 = vmatprep.subr.bf16.mxu0 0
        %1873 = vmatpush2.bf16.msra.mxu0 0
        %1874 = vmatprep.subr.bf16.mxu0 0
        %1875 = vmatpush2.bf16.msra.mxu0 0
        %1876 = vmatprep.subr.bf16.mxu0 0
        %1877 = vmatpush2.bf16.msra.mxu0 0
        %1878 = vmatprep.mubr.bf16.mxu0 0
        %1879 = vmatmul.mubr.bf16.gmra.mxu0 %v1835
        %v1880 = vpop.f32.mrf.mxu0
        %v1881 = vadd.f32 0.0, %v1880
        %v1882 = vpop.f32.mrf.mxu0
        %v1883 = vpop.f32.mrf.mxu0
        %v1884 = vadd.f32 0.0, %v1883
        %v1885 = vpop.f32.mrf.mxu0
        %1886 = vmatprep.mubr.bf16.mxu0 0
        %1887 = vmatmul.mubr.bf16.gmra.mxu0 %v1838
        %v1888 = vpop.f32.mrf.mxu0
        %v1889 = vadd.f32 0.0, %v1888
        %v1890 = vpop.f32.mrf.mxu0
        %v1891 = vpop.f32.mrf.mxu0
        %v1892 = vadd.f32 0.0, %v1891
        %v1893 = vpop.f32.mrf.mxu0
        %1894 = vmatprep.mubr.bf16.mxu0 0
        %1895 = vmatmul.mubr.bf16.gmra.mxu0 %v1841
        %v1896 = vpop.f32.mrf.mxu0
        %v1897 = vadd.f32 0.0, %v1896
        %v1898 = vpop.f32.mrf.mxu0
        %v1899 = vpop.f32.mrf.mxu0
        %v1900 = vadd.f32 0.0, %v1899
        %v1901 = vpop.f32.mrf.mxu0
        %1902 = vmatprep.mubr.bf16.mxu0 0
        %1903 = vmatmul.mubr.bf16.gmra.mxu0 %v1844
        %v1904 = vpop.f32.mrf.mxu0
        %v1905 = vadd.f32 0.0, %v1904
        %v1906 = vpop.f32.mrf.mxu0
        %v1907 = vpop.f32.mrf.mxu0
        %v1908 = vadd.f32 0.0, %v1907
        %v1909 = vpop.f32.mrf.mxu0
        %1910 = vdwg.mxu0
        %v1912 = vsel %vm1388, %v1749, 0
        %v1915 = vsel %vm1388, %v1750, 0
        %v1918 = vsel %vm1388, %v1751, 0
        %v1921 = vsel %vm1388, %v1752, 0
        %1923 = vmatprep.subr.bf16.mxu0 0
        %1924 = vmatpush1.bf16.msra.mxu0 0
        %1925 = vmatprep.subr.bf16.mxu0 0
        %1926 = vmatpush1.bf16.msra.mxu0 0
        %1927 = vmatprep.subr.bf16.mxu0 0
        %1928 = vmatpush1.bf16.msra.mxu0 0
        %1929 = vmatprep.subr.bf16.mxu0 0
        %1930 = vmatpush1.bf16.msra.mxu0 0
        %1931 = vmatprep.subr.bf16.mxu0 0
        %1932 = vmatpush1.bf16.msra.mxu0 %v1026
        %1933 = vmatprep.subr.bf16.mxu0 0
        %1934 = vmatpush1.bf16.msra.mxu0 %v1025
        %1935 = vmatprep.subr.bf16.mxu0 0
        %1936 = vmatpush1.bf16.msra.mxu0 %v1024
        %1937 = vmatprep.subr.bf16.mxu0 0
        %1938 = vmatpush1.bf16.msra.mxu0 %v1023
        %1939 = vmatprep.subr.bf16.mxu0 0
        %1940 = vmatpush2.bf16.msra.mxu0 0
        %1941 = vmatprep.subr.bf16.mxu0 0
        %1942 = vmatpush2.bf16.msra.mxu0 0
        %1943 = vmatprep.subr.bf16.mxu0 0
        %1944 = vmatpush2.bf16.msra.mxu0 0
        %1945 = vmatprep.subr.bf16.mxu0 0
        %1946 = vmatpush2.bf16.msra.mxu0 0
        %1947 = vmatprep.subr.bf16.mxu0 0
        %1948 = vmatpush2.bf16.msra.mxu0 0
        %1949 = vmatprep.subr.bf16.mxu0 0
        %1950 = vmatpush2.bf16.msra.mxu0 0
        %1951 = vmatprep.subr.bf16.mxu0 0
        %1952 = vmatpush2.bf16.msra.mxu0 0
        %1953 = vmatprep.subr.bf16.mxu0 0
        %1954 = vmatpush2.bf16.msra.mxu0 0
        %1955 = vmatprep.mubr.bf16.mxu0 0
        %1956 = vmatmul.mubr.bf16.gmra.mxu0 %v1912
        %v1957 = vpop.f32.mrf.mxu0
        %v1958 = vadd.f32 0.0, %v1957
        %v1959 = vpop.f32.mrf.mxu0
        %v1960 = vpop.f32.mrf.mxu0
        %v1961 = vadd.f32 0.0, %v1960
        %v1962 = vpop.f32.mrf.mxu0
        %1963 = vmatprep.mubr.bf16.mxu0 0
        %1964 = vmatmul.mubr.bf16.gmra.mxu0 %v1915
        %v1965 = vpop.f32.mrf.mxu0
        %v1966 = vadd.f32 0.0, %v1965
        %v1967 = vpop.f32.mrf.mxu0
        %v1968 = vpop.f32.mrf.mxu0
        %v1969 = vadd.f32 0.0, %v1968
        %v1970 = vpop.f32.mrf.mxu0
        %1971 = vmatprep.mubr.bf16.mxu0 0
        %1972 = vmatmul.mubr.bf16.gmra.mxu0 %v1918
        %v1973 = vpop.f32.mrf.mxu0
        %v1974 = vadd.f32 0.0, %v1973
        %v1975 = vpop.f32.mrf.mxu0
        %v1976 = vpop.f32.mrf.mxu0
        %v1977 = vadd.f32 0.0, %v1976
        %v1978 = vpop.f32.mrf.mxu0
        %1979 = vmatprep.mubr.bf16.mxu0 0
        %1980 = vmatmul.mubr.bf16.gmra.mxu0 %v1921
        %v1981 = vpop.f32.mrf.mxu0
        %v1982 = vadd.f32 0.0, %v1981
        %v1983 = vpop.f32.mrf.mxu0
        %v1984 = vpop.f32.mrf.mxu0
        %v1985 = vadd.f32 0.0, %v1984
        %v1986 = vpop.f32.mrf.mxu0
        %1987 = vdwg.mxu0
        %v1989 = vsel %vm1388, %v1753, 0
        %v1992 = vsel %vm1388, %v1754, 0
        %v1995 = vsel %vm1388, %v1755, 0
        %v1998 = vsel %vm1388, %v1756, 0
        %2000 = vmatprep.subr.bf16.mxu0 0
        %2001 = vmatpush1.bf16.msra.mxu0 0
        %2002 = vmatprep.subr.bf16.mxu0 0
        %2003 = vmatpush1.bf16.msra.mxu0 0
        %2004 = vmatprep.subr.bf16.mxu0 0
        %2005 = vmatpush1.bf16.msra.mxu0 0
        %2006 = vmatprep.subr.bf16.mxu0 0
        %2007 = vmatpush1.bf16.msra.mxu0 0
        %2008 = vmatprep.subr.bf16.mxu0 0
        %2009 = vmatpush1.bf16.msra.mxu0 %v1030
        %2010 = vmatprep.subr.bf16.mxu0 0
        %2011 = vmatpush1.bf16.msra.mxu0 %v1029
        %2012 = vmatprep.subr.bf16.mxu0 0
        %2013 = vmatpush1.bf16.msra.mxu0 %v1028
        %2014 = vmatprep.subr.bf16.mxu0 0
        %2015 = vmatpush1.bf16.msra.mxu0 %v1027
        %2016 = vmatprep.subr.bf16.mxu0 0
        %2017 = vmatpush2.bf16.msra.mxu0 0
        %2018 = vmatprep.subr.bf16.mxu0 0
        %2019 = vmatpush2.bf16.msra.mxu0 0
        %2020 = vmatprep.subr.bf16.mxu0 0
        %2021 = vmatpush2.bf16.msra.mxu0 0
        %2022 = vmatprep.subr.bf16.mxu0 0
        %2023 = vmatpush2.bf16.msra.mxu0 0
        %2024 = vmatprep.subr.bf16.mxu0 0
        %2025 = vmatpush2.bf16.msra.mxu0 0
        %2026 = vmatprep.subr.bf16.mxu0 0
        %2027 = vmatpush2.bf16.msra.mxu0 0
        %2028 = vmatprep.subr.bf16.mxu0 0
        %2029 = vmatpush2.bf16.msra.mxu0 0
        %2030 = vmatprep.subr.bf16.mxu0 0
        %2031 = vmatpush2.bf16.msra.mxu0 0
        %2032 = vmatprep.mubr.bf16.mxu0 0
        %2033 = vmatmul.mubr.bf16.gmra.mxu0 %v1989
        %v2034 = vpop.f32.mrf.mxu0
        %v2035 = vadd.f32 0.0, %v2034
        %v2036 = vpop.f32.mrf.mxu0
        %v2037 = vpop.f32.mrf.mxu0
        %v2038 = vadd.f32 0.0, %v2037
        %v2039 = vpop.f32.mrf.mxu0
        %2040 = vmatprep.mubr.bf16.mxu0 0
        %2041 = vmatmul.mubr.bf16.gmra.mxu0 %v1992
        %v2042 = vpop.f32.mrf.mxu0
        %v2043 = vadd.f32 0.0, %v2042
        %v2044 = vpop.f32.mrf.mxu0
        %v2045 = vpop.f32.mrf.mxu0
        %v2046 = vadd.f32 0.0, %v2045
        %v2047 = vpop.f32.mrf.mxu0
        %2048 = vmatprep.mubr.bf16.mxu0 0
        %2049 = vmatmul.mubr.bf16.gmra.mxu0 %v1995
        %v2050 = vpop.f32.mrf.mxu0
        %v2051 = vadd.f32 0.0, %v2050
        %v2052 = vpop.f32.mrf.mxu0
        %v2053 = vpop.f32.mrf.mxu0
        %v2054 = vadd.f32 0.0, %v2053
        %v2055 = vpop.f32.mrf.mxu0
        %2056 = vmatprep.mubr.bf16.mxu0 0
        %2057 = vmatmul.mubr.bf16.gmra.mxu0 %v1998
        %v2058 = vpop.f32.mrf.mxu0
        %v2059 = vadd.f32 0.0, %v2058
        %v2060 = vpop.f32.mrf.mxu0
        %v2061 = vpop.f32.mrf.mxu0
        %v2062 = vadd.f32 0.0, %v2061
        %v2063 = vpop.f32.mrf.mxu0
        %2064 = vdwg.mxu0
        %v2065 = vpack.c.bf16 %v1807, %v1804
        %v2066 = vpack.c.bf16 %v1815, %v1812
        %v2067 = vpack.c.bf16 %v1823, %v1820
        %v2068 = vpack.c.bf16 %v1831, %v1828
        %v2069 = vpack.c.bf16 %v1884, %v1881
        %v2070 = vpack.c.bf16 %v1892, %v1889
        %v2071 = vpack.c.bf16 %v1900, %v1897
        %v2072 = vpack.c.bf16 %v1908, %v1905
        %v2073 = vpack.c.bf16 %v1961, %v1958
        %v2074 = vpack.c.bf16 %v1969, %v1966
        %v2075 = vpack.c.bf16 %v1977, %v1974
        %v2076 = vpack.c.bf16 %v1985, %v1982
        %v2077 = vpack.c.bf16 %v2038, %v2035
        %v2078 = vpack.c.bf16 %v2046, %v2043
        %v2079 = vpack.c.bf16 %v2054, %v2051
        %v2080 = vpack.c.bf16 %v2062, %v2059
        %2085 = vrot.lane.b32.xlu0 %v983, 96
        %v2086 = vpop.permute.xlu0 %2085
        %2087 = vrot.lane.b32.xlu0 %v984, 96
        %v2088 = vpop.permute.xlu0 %2087
        %2089 = vrot.lane.b32.xlu0 %v985, 96
        %v2090 = vpop.permute.xlu0 %2089
        %2091 = vrot.lane.b32.xlu0 %v986, 96
        %v2092 = vpop.permute.xlu0 %2091
        %2097 = vrot.lane.b32.xlu0 %v999, 96
        %v2098 = vpop.permute.xlu0 %2097
        %2099 = vrot.lane.b32.xlu0 %v1000, 96
        %v2100 = vpop.permute.xlu0 %2099
        %2101 = vrot.lane.b32.xlu0 %v1001, 96
        %v2102 = vpop.permute.xlu0 %2101
        %2103 = vrot.lane.b32.xlu0 %v1002, 96
        %v2104 = vpop.permute.xlu0 %2103
        %v2106 = vsel %vm1031, %v2086, 0
        %v2109 = vsel %vm1031, %v2088, 0
        %v2112 = vsel %vm1031, %v2090, 0
        %v2115 = vsel %vm1031, %v2092, 0
        %v2118 = vsel %vm1031, %v2098, 0
        %v2121 = vsel %vm1031, %v2100, 0
        %v2124 = vsel %vm1031, %v2102, 0
        %v2127 = vsel %vm1031, %v2104, 0
        %2129 = vmatprep.subr.bf16.mxu0 0
        %2130 = vmatpush1.bf16.xpose.msra.mxu0 0
        %2131 = vmatprep.subr.bf16.mxu0 0
        %2132 = vmatpush1.bf16.xpose.msra.mxu0 0
        %2133 = vmatprep.subr.bf16.mxu0 0
        %2134 = vmatpush1.bf16.xpose.msra.mxu0 0
        %2135 = vmatprep.subr.bf16.mxu0 0
        %2136 = vmatpush1.bf16.xpose.msra.mxu0 0
        %2137 = vmatprep.subr.bf16.mxu0 0
        %2138 = vmatpush1.bf16.xpose.msra.mxu0 %v2127
        %2139 = vmatprep.subr.bf16.mxu0 0
        %2140 = vmatpush1.bf16.xpose.msra.mxu0 %v2124
        %2141 = vmatprep.subr.bf16.mxu0 0
        %2142 = vmatpush1.bf16.xpose.msra.mxu0 %v2121
        %2143 = vmatprep.subr.bf16.mxu0 0
        %2144 = vmatpush1.bf16.xpose.msra.mxu0 %v2118
        %2145 = vmatprep.subr.bf16.mxu0 0
        %2146 = vmatpush2.bf16.xpose.msra.mxu0 0
        %2147 = vmatprep.subr.bf16.mxu0 0
        %2148 = vmatpush2.bf16.xpose.msra.mxu0 0
        %2149 = vmatprep.subr.bf16.mxu0 0
        %2150 = vmatpush2.bf16.xpose.msra.mxu0 0
        %2151 = vmatprep.subr.bf16.mxu0 0
        %2152 = vmatpush2.bf16.xpose.msra.mxu0 0
        %2153 = vmatprep.subr.bf16.mxu0 0
        %2154 = vmatpush2.bf16.xpose.msra.mxu0 0
        %2155 = vmatprep.subr.bf16.mxu0 0
        %2156 = vmatpush2.bf16.xpose.msra.mxu0 0
        %2157 = vmatprep.subr.bf16.mxu0 0
        %2158 = vmatpush2.bf16.xpose.msra.mxu0 0
        %2159 = vmatprep.subr.bf16.mxu0 0
        %2160 = vmatpush2.bf16.xpose.msra.mxu0 0
        %2161 = vmatprep.mubr.bf16.mxu0 0
        %2162 = vmatmul.mubr.bf16.gmra.mxu0 %v2106
        %v2163 = vpop.f32.mrf.mxu0
        %v2164 = vadd.f32 0.0, %v2163
        %v2165 = vpop.f32.mrf.mxu0
        %v2166 = vpop.f32.mrf.mxu0
        %v2167 = vadd.f32 0.0, %v2166
        %v2168 = vpop.f32.mrf.mxu0
        %2169 = vmatprep.mubr.bf16.mxu0 0
        %2170 = vmatmul.mubr.bf16.gmra.mxu0 %v2109
        %v2171 = vpop.f32.mrf.mxu0
        %v2172 = vadd.f32 0.0, %v2171
        %v2173 = vpop.f32.mrf.mxu0
        %v2174 = vpop.f32.mrf.mxu0
        %v2175 = vadd.f32 0.0, %v2174
        %v2176 = vpop.f32.mrf.mxu0
        %2177 = vmatprep.mubr.bf16.mxu0 0
        %2178 = vmatmul.mubr.bf16.gmra.mxu0 %v2112
        %v2179 = vpop.f32.mrf.mxu0
        %v2180 = vadd.f32 0.0, %v2179
        %v2181 = vpop.f32.mrf.mxu0
        %v2182 = vpop.f32.mrf.mxu0
        %v2183 = vadd.f32 0.0, %v2182
        %v2184 = vpop.f32.mrf.mxu0
        %2185 = vmatprep.mubr.bf16.mxu0 0
        %2186 = vmatmul.mubr.bf16.gmra.mxu0 %v2115
        %v2187 = vpop.f32.mrf.mxu0
        %v2188 = vadd.f32 0.0, %v2187
        %v2189 = vpop.f32.mrf.mxu0
        %v2190 = vpop.f32.mrf.mxu0
        %v2191 = vadd.f32 0.0, %v2190
        %v2192 = vpop.f32.mrf.mxu0
        %2193 = vdwg.mxu0
        %2198 = vrot.lane.b32.xlu0 %v987, 96
        %v2199 = vpop.permute.xlu0 %2198
        %2200 = vrot.lane.b32.xlu0 %v988, 96
        %v2201 = vpop.permute.xlu0 %2200
        %2202 = vrot.lane.b32.xlu0 %v989, 96
        %v2203 = vpop.permute.xlu0 %2202
        %2204 = vrot.lane.b32.xlu0 %v990, 96
        %v2205 = vpop.permute.xlu0 %2204
        %2210 = vrot.lane.b32.xlu0 %v1003, 96
        %v2211 = vpop.permute.xlu0 %2210
        %2212 = vrot.lane.b32.xlu0 %v1004, 96
        %v2213 = vpop.permute.xlu0 %2212
        %2214 = vrot.lane.b32.xlu0 %v1005, 96
        %v2215 = vpop.permute.xlu0 %2214
        %2216 = vrot.lane.b32.xlu0 %v1006, 96
        %v2217 = vpop.permute.xlu0 %2216
        %v2219 = vsel %vm1031, %v2199, 0
        %v2222 = vsel %vm1031, %v2201, 0
        %v2225 = vsel %vm1031, %v2203, 0
        %v2228 = vsel %vm1031, %v2205, 0
        %v2231 = vsel %vm1031, %v2211, 0
        %v2234 = vsel %vm1031, %v2213, 0
        %v2237 = vsel %vm1031, %v2215, 0
        %v2240 = vsel %vm1031, %v2217, 0
        %2242 = vmatprep.subr.bf16.mxu0 0
        %2243 = vmatpush1.bf16.xpose.msra.mxu0 0
        %2244 = vmatprep.subr.bf16.mxu0 0
        %2245 = vmatpush1.bf16.xpose.msra.mxu0 0
        %2246 = vmatprep.subr.bf16.mxu0 0
        %2247 = vmatpush1.bf16.xpose.msra.mxu0 0
        %2248 = vmatprep.subr.bf16.mxu0 0
        %2249 = vmatpush1.bf16.xpose.msra.mxu0 0
        %2250 = vmatprep.subr.bf16.mxu0 0
        %2251 = vmatpush1.bf16.xpose.msra.mxu0 %v2240
        %2252 = vmatprep.subr.bf16.mxu0 0
        %2253 = vmatpush1.bf16.xpose.msra.mxu0 %v2237
        %2254 = vmatprep.subr.bf16.mxu0 0
        %2255 = vmatpush1.bf16.xpose.msra.mxu0 %v2234
        %2256 = vmatprep.subr.bf16.mxu0 0
        %2257 = vmatpush1.bf16.xpose.msra.mxu0 %v2231
        %2258 = vmatprep.subr.bf16.mxu0 0
        %2259 = vmatpush2.bf16.xpose.msra.mxu0 0
        %2260 = vmatprep.subr.bf16.mxu0 0
        %2261 = vmatpush2.bf16.xpose.msra.mxu0 0
        %2262 = vmatprep.subr.bf16.mxu0 0
        %2263 = vmatpush2.bf16.xpose.msra.mxu0 0
        %2264 = vmatprep.subr.bf16.mxu0 0
        %2265 = vmatpush2.bf16.xpose.msra.mxu0 0
        %2266 = vmatprep.subr.bf16.mxu0 0
        %2267 = vmatpush2.bf16.xpose.msra.mxu0 0
        %2268 = vmatprep.subr.bf16.mxu0 0
        %2269 = vmatpush2.bf16.xpose.msra.mxu0 0
        %2270 = vmatprep.subr.bf16.mxu0 0
        %2271 = vmatpush2.bf16.xpose.msra.mxu0 0
        %2272 = vmatprep.subr.bf16.mxu0 0
        %2273 = vmatpush2.bf16.xpose.msra.mxu0 0
        %2274 = vmatprep.mubr.bf16.mxu0 0
        %2275 = vmatmul.mubr.bf16.gmra.mxu0 %v2219
        %v2276 = vpop.f32.mrf.mxu0
        %v2277 = vadd.f32 0.0, %v2276
        %v2278 = vpop.f32.mrf.mxu0
        %v2279 = vpop.f32.mrf.mxu0
        %v2280 = vadd.f32 0.0, %v2279
        %v2281 = vpop.f32.mrf.mxu0
        %2282 = vmatprep.mubr.bf16.mxu0 0
        %2283 = vmatmul.mubr.bf16.gmra.mxu0 %v2222
        %v2284 = vpop.f32.mrf.mxu0
        %v2285 = vadd.f32 0.0, %v2284
        %v2286 = vpop.f32.mrf.mxu0
        %v2287 = vpop.f32.mrf.mxu0
        %v2288 = vadd.f32 0.0, %v2287
        %v2289 = vpop.f32.mrf.mxu0
        %2290 = vmatprep.mubr.bf16.mxu0 0
        %2291 = vmatmul.mubr.bf16.gmra.mxu0 %v2225
        %v2292 = vpop.f32.mrf.mxu0
        %v2293 = vadd.f32 0.0, %v2292
        %v2294 = vpop.f32.mrf.mxu0
        %v2295 = vpop.f32.mrf.mxu0
        %v2296 = vadd.f32 0.0, %v2295
        %v2297 = vpop.f32.mrf.mxu0
        %2298 = vmatprep.mubr.bf16.mxu0 0
        %2299 = vmatmul.mubr.bf16.gmra.mxu0 %v2228
        %v2300 = vpop.f32.mrf.mxu0
        %v2301 = vadd.f32 0.0, %v2300
        %v2302 = vpop.f32.mrf.mxu0
        %v2303 = vpop.f32.mrf.mxu0
        %v2304 = vadd.f32 0.0, %v2303
        %v2305 = vpop.f32.mrf.mxu0
        %2306 = vdwg.mxu0
        %2311 = vrot.lane.b32.xlu0 %v991, 96
        %v2312 = vpop.permute.xlu0 %2311
        %2313 = vrot.lane.b32.xlu0 %v992, 96
        %v2314 = vpop.permute.xlu0 %2313
        %2315 = vrot.lane.b32.xlu0 %v993, 96
        %v2316 = vpop.permute.xlu0 %2315
        %2317 = vrot.lane.b32.xlu0 %v994, 96
        %v2318 = vpop.permute.xlu0 %2317
        %2323 = vrot.lane.b32.xlu0 %v1007, 96
        %v2324 = vpop.permute.xlu0 %2323
        %2325 = vrot.lane.b32.xlu0 %v1008, 96
        %v2326 = vpop.permute.xlu0 %2325
        %2327 = vrot.lane.b32.xlu0 %v1009, 96
        %v2328 = vpop.permute.xlu0 %2327
        %2329 = vrot.lane.b32.xlu0 %v1010, 96
        %v2330 = vpop.permute.xlu0 %2329
        %v2332 = vsel %vm1031, %v2312, 0
        %v2335 = vsel %vm1031, %v2314, 0
        %v2338 = vsel %vm1031, %v2316, 0
        %v2341 = vsel %vm1031, %v2318, 0
        %v2344 = vsel %vm1031, %v2324, 0
        %v2347 = vsel %vm1031, %v2326, 0
        %v2350 = vsel %vm1031, %v2328, 0
        %v2353 = vsel %vm1031, %v2330, 0
        %2355 = vmatprep.subr.bf16.mxu0 0
        %2356 = vmatpush1.bf16.xpose.msra.mxu0 0
        %2357 = vmatprep.subr.bf16.mxu0 0
        %2358 = vmatpush1.bf16.xpose.msra.mxu0 0
        %2359 = vmatprep.subr.bf16.mxu0 0
        %2360 = vmatpush1.bf16.xpose.msra.mxu0 0
        %2361 = vmatprep.subr.bf16.mxu0 0
        %2362 = vmatpush1.bf16.xpose.msra.mxu0 0
        %2363 = vmatprep.subr.bf16.mxu0 0
        %2364 = vmatpush1.bf16.xpose.msra.mxu0 %v2353
        %2365 = vmatprep.subr.bf16.mxu0 0
        %2366 = vmatpush1.bf16.xpose.msra.mxu0 %v2350
        %2367 = vmatprep.subr.bf16.mxu0 0
        %2368 = vmatpush1.bf16.xpose.msra.mxu0 %v2347
        %2369 = vmatprep.subr.bf16.mxu0 0
        %2370 = vmatpush1.bf16.xpose.msra.mxu0 %v2344
        %2371 = vmatprep.subr.bf16.mxu0 0
        %2372 = vmatpush2.bf16.xpose.msra.mxu0 0
        %2373 = vmatprep.subr.bf16.mxu0 0
        %2374 = vmatpush2.bf16.xpose.msra.mxu0 0
        %2375 = vmatprep.subr.bf16.mxu0 0
        %2376 = vmatpush2.bf16.xpose.msra.mxu0 0
        %2377 = vmatprep.subr.bf16.mxu0 0
        %2378 = vmatpush2.bf16.xpose.msra.mxu0 0
        %2379 = vmatprep.subr.bf16.mxu0 0
        %2380 = vmatpush2.bf16.xpose.msra.mxu0 0
        %2381 = vmatprep.subr.bf16.mxu0 0
        %2382 = vmatpush2.bf16.xpose.msra.mxu0 0
        %2383 = vmatprep.subr.bf16.mxu0 0
        %2384 = vmatpush2.bf16.xpose.msra.mxu0 0
        %2385 = vmatprep.subr.bf16.mxu0 0
        %2386 = vmatpush2.bf16.xpose.msra.mxu0 0
        %2387 = vmatprep.mubr.bf16.mxu0 0
        %2388 = vmatmul.mubr.bf16.gmra.mxu0 %v2332
        %v2389 = vpop.f32.mrf.mxu0
        %v2390 = vadd.f32 0.0, %v2389
        %v2391 = vpop.f32.mrf.mxu0
        %v2392 = vpop.f32.mrf.mxu0
        %v2393 = vadd.f32 0.0, %v2392
        %v2394 = vpop.f32.mrf.mxu0
        %2395 = vmatprep.mubr.bf16.mxu0 0
        %2396 = vmatmul.mubr.bf16.gmra.mxu0 %v2335
        %v2397 = vpop.f32.mrf.mxu0
        %v2398 = vadd.f32 0.0, %v2397
        %v2399 = vpop.f32.mrf.mxu0
        %v2400 = vpop.f32.mrf.mxu0
        %v2401 = vadd.f32 0.0, %v2400
        %v2402 = vpop.f32.mrf.mxu0
        %2403 = vmatprep.mubr.bf16.mxu0 0
        %2404 = vmatmul.mubr.bf16.gmra.mxu0 %v2338
        %v2405 = vpop.f32.mrf.mxu0
        %v2406 = vadd.f32 0.0, %v2405
        %v2407 = vpop.f32.mrf.mxu0
        %v2408 = vpop.f32.mrf.mxu0
        %v2409 = vadd.f32 0.0, %v2408
        %v2410 = vpop.f32.mrf.mxu0
        %2411 = vmatprep.mubr.bf16.mxu0 0
        %2412 = vmatmul.mubr.bf16.gmra.mxu0 %v2341
        %v2413 = vpop.f32.mrf.mxu0
        %v2414 = vadd.f32 0.0, %v2413
        %v2415 = vpop.f32.mrf.mxu0
        %v2416 = vpop.f32.mrf.mxu0
        %v2417 = vadd.f32 0.0, %v2416
        %v2418 = vpop.f32.mrf.mxu0
        %2419 = vdwg.mxu0
        %2424 = vrot.lane.b32.xlu0 %v995, 96
        %v2425 = vpop.permute.xlu0 %2424
        %2426 = vrot.lane.b32.xlu0 %v996, 96
        %v2427 = vpop.permute.xlu0 %2426
        %2428 = vrot.lane.b32.xlu0 %v997, 96
        %v2429 = vpop.permute.xlu0 %2428
        %2430 = vrot.lane.b32.xlu0 %v998, 96
        %v2431 = vpop.permute.xlu0 %2430
        %2436 = vrot.lane.b32.xlu0 %v1011, 96
        %v2437 = vpop.permute.xlu0 %2436
        %2438 = vrot.lane.b32.xlu0 %v1012, 96
        %v2439 = vpop.permute.xlu0 %2438
        %2440 = vrot.lane.b32.xlu0 %v1013, 96
        %v2441 = vpop.permute.xlu0 %2440
        %2442 = vrot.lane.b32.xlu0 %v1014, 96
        %v2443 = vpop.permute.xlu0 %2442
        %v2445 = vsel %vm1031, %v2425, 0
        %v2448 = vsel %vm1031, %v2427, 0
        %v2451 = vsel %vm1031, %v2429, 0
        %v2454 = vsel %vm1031, %v2431, 0
        %v2457 = vsel %vm1031, %v2437, 0
        %v2460 = vsel %vm1031, %v2439, 0
        %v2463 = vsel %vm1031, %v2441, 0
        %v2466 = vsel %vm1031, %v2443, 0
        %2468 = vmatprep.subr.bf16.mxu0 0
        %2469 = vmatpush1.bf16.xpose.msra.mxu0 0
        %2470 = vmatprep.subr.bf16.mxu0 0
        %2471 = vmatpush1.bf16.xpose.msra.mxu0 0
        %2472 = vmatprep.subr.bf16.mxu0 0
        %2473 = vmatpush1.bf16.xpose.msra.mxu0 0
        %2474 = vmatprep.subr.bf16.mxu0 0
        %2475 = vmatpush1.bf16.xpose.msra.mxu0 0
        %2476 = vmatprep.subr.bf16.mxu0 0
        %2477 = vmatpush1.bf16.xpose.msra.mxu0 %v2466
        %2478 = vmatprep.subr.bf16.mxu0 0
        %2479 = vmatpush1.bf16.xpose.msra.mxu0 %v2463
        %2480 = vmatprep.subr.bf16.mxu0 0
        %2481 = vmatpush1.bf16.xpose.msra.mxu0 %v2460
        %2482 = vmatprep.subr.bf16.mxu0 0
        %2483 = vmatpush1.bf16.xpose.msra.mxu0 %v2457
        %2484 = vmatprep.subr.bf16.mxu0 0
        %2485 = vmatpush2.bf16.xpose.msra.mxu0 0
        %2486 = vmatprep.subr.bf16.mxu0 0
        %2487 = vmatpush2.bf16.xpose.msra.mxu0 0
        %2488 = vmatprep.subr.bf16.mxu0 0
        %2489 = vmatpush2.bf16.xpose.msra.mxu0 0
        %2490 = vmatprep.subr.bf16.mxu0 0
        %2491 = vmatpush2.bf16.xpose.msra.mxu0 0
        %2492 = vmatprep.subr.bf16.mxu0 0
        %2493 = vmatpush2.bf16.xpose.msra.mxu0 0
        %2494 = vmatprep.subr.bf16.mxu0 0
        %2495 = vmatpush2.bf16.xpose.msra.mxu0 0
        %2496 = vmatprep.subr.bf16.mxu0 0
        %2497 = vmatpush2.bf16.xpose.msra.mxu0 0
        %2498 = vmatprep.subr.bf16.mxu0 0
        %2499 = vmatpush2.bf16.xpose.msra.mxu0 0
        %2500 = vmatprep.mubr.bf16.mxu0 0
        %2501 = vmatmul.mubr.bf16.gmra.mxu0 %v2445
        %v2502 = vpop.f32.mrf.mxu0
        %v2503 = vadd.f32 0.0, %v2502
        %v2504 = vpop.f32.mrf.mxu0
        %v2505 = vpop.f32.mrf.mxu0
        %v2506 = vadd.f32 0.0, %v2505
        %v2507 = vpop.f32.mrf.mxu0
        %2508 = vmatprep.mubr.bf16.mxu0 0
        %2509 = vmatmul.mubr.bf16.gmra.mxu0 %v2448
        %v2510 = vpop.f32.mrf.mxu0
        %v2511 = vadd.f32 0.0, %v2510
        %v2512 = vpop.f32.mrf.mxu0
        %v2513 = vpop.f32.mrf.mxu0
        %v2514 = vadd.f32 0.0, %v2513
        %v2515 = vpop.f32.mrf.mxu0
        %2516 = vmatprep.mubr.bf16.mxu0 0
        %2517 = vmatmul.mubr.bf16.gmra.mxu0 %v2451
        %v2518 = vpop.f32.mrf.mxu0
        %v2519 = vadd.f32 0.0, %v2518
        %v2520 = vpop.f32.mrf.mxu0
        %v2521 = vpop.f32.mrf.mxu0
        %v2522 = vadd.f32 0.0, %v2521
        %v2523 = vpop.f32.mrf.mxu0
        %2524 = vmatprep.mubr.bf16.mxu0 0
        %2525 = vmatmul.mubr.bf16.gmra.mxu0 %v2454
        %v2526 = vpop.f32.mrf.mxu0
        %v2527 = vadd.f32 0.0, %v2526
        %v2528 = vpop.f32.mrf.mxu0
        %v2529 = vpop.f32.mrf.mxu0
        %v2530 = vadd.f32 0.0, %v2529
        %v2531 = vpop.f32.mrf.mxu0
        %2532 = vdwg.mxu0
        %v2533 = vsel %vm1388, %v2164, -inf
        %2534 = vmax.xlane.f32.xlu0 %v2533
        %v2535 = vpop.xlane.xlu0 %2534
        %v2536 = vsel %vm1388, %v2167, -inf
        %2537 = vmax.xlane.f32.xlu0 %v2536
        %v2538 = vpop.xlane.xlu0 %2537
        %v2539 = vsel %vm1388, %v2172, -inf
        %2540 = vmax.xlane.f32.xlu0 %v2539
        %v2541 = vpop.xlane.xlu0 %2540
        %v2542 = vsel %vm1388, %v2175, -inf
        %2543 = vmax.xlane.f32.xlu0 %v2542
        %v2544 = vpop.xlane.xlu0 %2543
        %v2545 = vsel %vm1388, %v2180, -inf
        %2546 = vmax.xlane.f32.xlu0 %v2545
        %v2547 = vpop.xlane.xlu0 %2546
        %v2548 = vsel %vm1388, %v2183, -inf
        %2549 = vmax.xlane.f32.xlu0 %v2548
        %v2550 = vpop.xlane.xlu0 %2549
        %v2551 = vsel %vm1388, %v2188, -inf
        %2552 = vmax.xlane.f32.xlu0 %v2551
        %v2553 = vpop.xlane.xlu0 %2552
        %v2554 = vsel %vm1388, %v2191, -inf
        %2555 = vmax.xlane.f32.xlu0 %v2554
        %v2556 = vpop.xlane.xlu0 %2555
        %v2557 = vsel %vm1388, %v2277, -inf
        %2558 = vmax.xlane.f32.xlu0 %v2557
        %v2559 = vpop.xlane.xlu0 %2558
        %v2560 = vsel %vm1388, %v2280, -inf
        %2561 = vmax.xlane.f32.xlu0 %v2560
        %v2562 = vpop.xlane.xlu0 %2561
        %v2563 = vsel %vm1388, %v2285, -inf
        %2564 = vmax.xlane.f32.xlu0 %v2563
        %v2565 = vpop.xlane.xlu0 %2564
        %v2566 = vsel %vm1388, %v2288, -inf
        %2567 = vmax.xlane.f32.xlu0 %v2566
        %v2568 = vpop.xlane.xlu0 %2567
        %v2569 = vsel %vm1388, %v2293, -inf
        %2570 = vmax.xlane.f32.xlu0 %v2569
        %v2571 = vpop.xlane.xlu0 %2570
        %v2572 = vsel %vm1388, %v2296, -inf
        %2573 = vmax.xlane.f32.xlu0 %v2572
        %v2574 = vpop.xlane.xlu0 %2573
        %v2575 = vsel %vm1388, %v2301, -inf
        %2576 = vmax.xlane.f32.xlu0 %v2575
        %v2577 = vpop.xlane.xlu0 %2576
        %v2578 = vsel %vm1388, %v2304, -inf
        %2579 = vmax.xlane.f32.xlu0 %v2578
        %v2580 = vpop.xlane.xlu0 %2579
        %v2581 = vsel %vm1388, %v2390, -inf
        %2582 = vmax.xlane.f32.xlu0 %v2581
        %v2583 = vpop.xlane.xlu0 %2582
        %v2584 = vsel %vm1388, %v2393, -inf
        %2585 = vmax.xlane.f32.xlu0 %v2584
        %v2586 = vpop.xlane.xlu0 %2585
        %v2587 = vsel %vm1388, %v2398, -inf
        %2588 = vmax.xlane.f32.xlu0 %v2587
        %v2589 = vpop.xlane.xlu0 %2588
        %v2590 = vsel %vm1388, %v2401, -inf
        %2591 = vmax.xlane.f32.xlu0 %v2590
        %v2592 = vpop.xlane.xlu0 %2591
        %v2593 = vsel %vm1388, %v2406, -inf
        %2594 = vmax.xlane.f32.xlu0 %v2593
        %v2595 = vpop.xlane.xlu0 %2594
        %v2596 = vsel %vm1388, %v2409, -inf
        %2597 = vmax.xlane.f32.xlu0 %v2596
        %v2598 = vpop.xlane.xlu0 %2597
        %v2599 = vsel %vm1388, %v2414, -inf
        %2600 = vmax.xlane.f32.xlu0 %v2599
        %v2601 = vpop.xlane.xlu0 %2600
        %v2602 = vsel %vm1388, %v2417, -inf
        %2603 = vmax.xlane.f32.xlu0 %v2602
        %v2604 = vpop.xlane.xlu0 %2603
        %v2605 = vsel %vm1388, %v2503, -inf
        %2606 = vmax.xlane.f32.xlu0 %v2605
        %v2607 = vpop.xlane.xlu0 %2606
        %v2608 = vsel %vm1388, %v2506, -inf
        %2609 = vmax.xlane.f32.xlu0 %v2608
        %v2610 = vpop.xlane.xlu0 %2609
        %v2611 = vsel %vm1388, %v2511, -inf
        %2612 = vmax.xlane.f32.xlu0 %v2611
        %v2613 = vpop.xlane.xlu0 %2612
        %v2614 = vsel %vm1388, %v2514, -inf
        %2615 = vmax.xlane.f32.xlu0 %v2614
        %v2616 = vpop.xlane.xlu0 %2615
        %v2617 = vsel %vm1388, %v2519, -inf
        %2618 = vmax.xlane.f32.xlu0 %v2617
        %v2619 = vpop.xlane.xlu0 %2618
        %v2620 = vsel %vm1388, %v2522, -inf
        %2621 = vmax.xlane.f32.xlu0 %v2620
        %v2622 = vpop.xlane.xlu0 %2621
        %v2623 = vsel %vm1388, %v2527, -inf
        %2624 = vmax.xlane.f32.xlu0 %v2623
        %v2625 = vpop.xlane.xlu0 %2624
        %v2626 = vsel %vm1388, %v2530, -inf
        %2627 = vmax.xlane.f32.xlu0 %v2626
        %v2628 = vpop.xlane.xlu0 %2627
        %v2629 = vsub.f32 %v2164, %v2535
        %v2630 = vsub.f32 %v2167, %v2538
        %v2631 = vsub.f32 %v2172, %v2541
        %v2632 = vsub.f32 %v2175, %v2544
        %v2633 = vsub.f32 %v2180, %v2547
        %v2634 = vsub.f32 %v2183, %v2550
        %v2635 = vsub.f32 %v2188, %v2553
        %v2636 = vsub.f32 %v2191, %v2556
        %v2637 = vsub.f32 %v2277, %v2559
        %v2638 = vsub.f32 %v2280, %v2562
        %v2639 = vsub.f32 %v2285, %v2565
        %v2640 = vsub.f32 %v2288, %v2568
        %v2641 = vsub.f32 %v2293, %v2571
        %v2642 = vsub.f32 %v2296, %v2574
        %v2643 = vsub.f32 %v2301, %v2577
        %v2644 = vsub.f32 %v2304, %v2580
        %v2645 = vsub.f32 %v2390, %v2583
        %v2646 = vsub.f32 %v2393, %v2586
        %v2647 = vsub.f32 %v2398, %v2589
        %v2648 = vsub.f32 %v2401, %v2592
        %v2649 = vsub.f32 %v2406, %v2595
        %v2650 = vsub.f32 %v2409, %v2598
        %v2651 = vsub.f32 %v2414, %v2601
        %v2652 = vsub.f32 %v2417, %v2604
        %v2653 = vsub.f32 %v2503, %v2607
        %v2654 = vsub.f32 %v2506, %v2610
        %v2655 = vsub.f32 %v2511, %v2613
        %v2656 = vsub.f32 %v2514, %v2616
        %v2657 = vsub.f32 %v2519, %v2619
        %v2658 = vsub.f32 %v2522, %v2622
        %v2659 = vsub.f32 %v2527, %v2625
        %v2660 = vsub.f32 %v2530, %v2628
        %v2661 = vmul.f32 %v2629, 1.442695
        %v2662 = vpow.pop %v2661
        %v2663 = vmul.f32 %v2630, 1.442695
        %v2664 = vpow.pop %v2663
        %v2665 = vmul.f32 %v2631, 1.442695
        %v2666 = vpow.pop %v2665
        %v2667 = vmul.f32 %v2632, 1.442695
        %v2668 = vpow.pop %v2667
        %v2669 = vmul.f32 %v2633, 1.442695
        %v2670 = vpow.pop %v2669
        %v2671 = vmul.f32 %v2634, 1.442695
        %v2672 = vpow.pop %v2671
        %v2673 = vmul.f32 %v2635, 1.442695
        %v2674 = vpow.pop %v2673
        %v2675 = vmul.f32 %v2636, 1.442695
        %v2676 = vpow.pop %v2675
        %v2677 = vmul.f32 %v2637, 1.442695
        %v2678 = vpow.pop %v2677
        %v2679 = vmul.f32 %v2638, 1.442695
        %v2680 = vpow.pop %v2679
        %v2681 = vmul.f32 %v2639, 1.442695
        %v2682 = vpow.pop %v2681
        %v2683 = vmul.f32 %v2640, 1.442695
        %v2684 = vpow.pop %v2683
        %v2685 = vmul.f32 %v2641, 1.442695
        %v2686 = vpow.pop %v2685
        %v2687 = vmul.f32 %v2642, 1.442695
        %v2688 = vpow.pop %v2687
        %v2689 = vmul.f32 %v2643, 1.442695
        %v2690 = vpow.pop %v2689
        %v2691 = vmul.f32 %v2644, 1.442695
        %v2692 = vpow.pop %v2691
        %v2693 = vmul.f32 %v2645, 1.442695
        %v2694 = vpow.pop %v2693
        %v2695 = vmul.f32 %v2646, 1.442695
        %v2696 = vpow.pop %v2695
        %v2697 = vmul.f32 %v2647, 1.442695
        %v2698 = vpow.pop %v2697
        %v2699 = vmul.f32 %v2648, 1.442695
        %v2700 = vpow.pop %v2699
        %v2701 = vmul.f32 %v2649, 1.442695
        %v2702 = vpow.pop %v2701
        %v2703 = vmul.f32 %v2650, 1.442695
        %v2704 = vpow.pop %v2703
        %v2705 = vmul.f32 %v2651, 1.442695
        %v2706 = vpow.pop %v2705
        %v2707 = vmul.f32 %v2652, 1.442695
        %v2708 = vpow.pop %v2707
        %v2709 = vmul.f32 %v2653, 1.442695
        %v2710 = vpow.pop %v2709
        %v2711 = vmul.f32 %v2654, 1.442695
        %v2712 = vpow.pop %v2711
        %v2713 = vmul.f32 %v2655, 1.442695
        %v2714 = vpow.pop %v2713
        %v2715 = vmul.f32 %v2656, 1.442695
        %v2716 = vpow.pop %v2715
        %v2717 = vmul.f32 %v2657, 1.442695
        %v2718 = vpow.pop %v2717
        %v2719 = vmul.f32 %v2658, 1.442695
        %v2720 = vpow.pop %v2719
        %v2721 = vmul.f32 %v2659, 1.442695
        %v2722 = vpow.pop %v2721
        %v2723 = vmul.f32 %v2660, 1.442695
        %v2724 = vpow.pop %v2723
        %v2725 = vsel %vm1388, %v2662, 0.0
        %2726 = vadd.xlane.f32.xlu0 %v2725
        %v2727 = vpop.xlane.xlu0 %2726
        %v2728 = vsel %vm1388, %v2664, 0.0
        %2729 = vadd.xlane.f32.xlu0 %v2728
        %v2730 = vpop.xlane.xlu0 %2729
        %v2731 = vsel %vm1388, %v2666, 0.0
        %2732 = vadd.xlane.f32.xlu0 %v2731
        %v2733 = vpop.xlane.xlu0 %2732
        %v2734 = vsel %vm1388, %v2668, 0.0
        %2735 = vadd.xlane.f32.xlu0 %v2734
        %v2736 = vpop.xlane.xlu0 %2735
        %v2737 = vsel %vm1388, %v2670, 0.0
        %2738 = vadd.xlane.f32.xlu0 %v2737
        %v2739 = vpop.xlane.xlu0 %2738
        %v2740 = vsel %vm1388, %v2672, 0.0
        %2741 = vadd.xlane.f32.xlu0 %v2740
        %v2742 = vpop.xlane.xlu0 %2741
        %v2743 = vsel %vm1388, %v2674, 0.0
        %2744 = vadd.xlane.f32.xlu0 %v2743
        %v2745 = vpop.xlane.xlu0 %2744
        %v2746 = vsel %vm1388, %v2676, 0.0
        %2747 = vadd.xlane.f32.xlu0 %v2746
        %v2748 = vpop.xlane.xlu0 %2747
        %v2749 = vsel %vm1388, %v2678, 0.0
        %2750 = vadd.xlane.f32.xlu0 %v2749
        %v2751 = vpop.xlane.xlu0 %2750
        %v2752 = vsel %vm1388, %v2680, 0.0
        %2753 = vadd.xlane.f32.xlu0 %v2752
        %v2754 = vpop.xlane.xlu0 %2753
        %v2755 = vsel %vm1388, %v2682, 0.0
        %2756 = vadd.xlane.f32.xlu0 %v2755
        %v2757 = vpop.xlane.xlu0 %2756
        %v2758 = vsel %vm1388, %v2684, 0.0
        %2759 = vadd.xlane.f32.xlu0 %v2758
        %v2760 = vpop.xlane.xlu0 %2759
        %v2761 = vsel %vm1388, %v2686, 0.0
        %2762 = vadd.xlane.f32.xlu0 %v2761
        %v2763 = vpop.xlane.xlu0 %2762
        %v2764 = vsel %vm1388, %v2688, 0.0
        %2765 = vadd.xlane.f32.xlu0 %v2764
        %v2766 = vpop.xlane.xlu0 %2765
        %v2767 = vsel %vm1388, %v2690, 0.0
        %2768 = vadd.xlane.f32.xlu0 %v2767
        %v2769 = vpop.xlane.xlu0 %2768
        %v2770 = vsel %vm1388, %v2692, 0.0
        %2771 = vadd.xlane.f32.xlu0 %v2770
        %v2772 = vpop.xlane.xlu0 %2771
        %v2773 = vsel %vm1388, %v2694, 0.0
        %2774 = vadd.xlane.f32.xlu0 %v2773
        %v2775 = vpop.xlane.xlu0 %2774
        %v2776 = vsel %vm1388, %v2696, 0.0
        %2777 = vadd.xlane.f32.xlu0 %v2776
        %v2778 = vpop.xlane.xlu0 %2777
        %v2779 = vsel %vm1388, %v2698, 0.0
        %2780 = vadd.xlane.f32.xlu0 %v2779
        %v2781 = vpop.xlane.xlu0 %2780
        %v2782 = vsel %vm1388, %v2700, 0.0
        %2783 = vadd.xlane.f32.xlu0 %v2782
        %v2784 = vpop.xlane.xlu0 %2783
        %v2785 = vsel %vm1388, %v2702, 0.0
        %2786 = vadd.xlane.f32.xlu0 %v2785
        %v2787 = vpop.xlane.xlu0 %2786
        %v2788 = vsel %vm1388, %v2704, 0.0
        %2789 = vadd.xlane.f32.xlu0 %v2788
        %v2790 = vpop.xlane.xlu0 %2789
        %v2791 = vsel %vm1388, %v2706, 0.0
        %2792 = vadd.xlane.f32.xlu0 %v2791
        %v2793 = vpop.xlane.xlu0 %2792
        %v2794 = vsel %vm1388, %v2708, 0.0
        %2795 = vadd.xlane.f32.xlu0 %v2794
        %v2796 = vpop.xlane.xlu0 %2795
        %v2797 = vsel %vm1388, %v2710, 0.0
        %2798 = vadd.xlane.f32.xlu0 %v2797
        %v2799 = vpop.xlane.xlu0 %2798
        %v2800 = vsel %vm1388, %v2712, 0.0
        %2801 = vadd.xlane.f32.xlu0 %v2800
        %v2802 = vpop.xlane.xlu0 %2801
        %v2803 = vsel %vm1388, %v2714, 0.0
        %2804 = vadd.xlane.f32.xlu0 %v2803
        %v2805 = vpop.xlane.xlu0 %2804
        %v2806 = vsel %vm1388, %v2716, 0.0
        %2807 = vadd.xlane.f32.xlu0 %v2806
        %v2808 = vpop.xlane.xlu0 %2807
        %v2809 = vsel %vm1388, %v2718, 0.0
        %2810 = vadd.xlane.f32.xlu0 %v2809
        %v2811 = vpop.xlane.xlu0 %2810
        %v2812 = vsel %vm1388, %v2720, 0.0
        %2813 = vadd.xlane.f32.xlu0 %v2812
        %v2814 = vpop.xlane.xlu0 %2813
        %v2815 = vsel %vm1388, %v2722, 0.0
        %2816 = vadd.xlane.f32.xlu0 %v2815
        %v2817 = vpop.xlane.xlu0 %2816
        %v2818 = vsel %vm1388, %v2724, 0.0
        %2819 = vadd.xlane.f32.xlu0 %v2818
        %v2820 = vpop.xlane.xlu0 %2819
        %v2821 = vrcp.pop %v2727
        %v2822 = vmul.f32 %v2662, %v2821
        %v2823 = vrcp.pop %v2730
        %v2824 = vmul.f32 %v2664, %v2823
        %v2825 = vrcp.pop %v2733
        %v2826 = vmul.f32 %v2666, %v2825
        %v2827 = vrcp.pop %v2736
        %v2828 = vmul.f32 %v2668, %v2827
        %v2829 = vrcp.pop %v2739
        %v2830 = vmul.f32 %v2670, %v2829
        %v2831 = vrcp.pop %v2742
        %v2832 = vmul.f32 %v2672, %v2831
        %v2833 = vrcp.pop %v2745
        %v2834 = vmul.f32 %v2674, %v2833
        %v2835 = vrcp.pop %v2748
        %v2836 = vmul.f32 %v2676, %v2835
        %v2837 = vrcp.pop %v2751
        %v2838 = vmul.f32 %v2678, %v2837
        %v2839 = vrcp.pop %v2754
        %v2840 = vmul.f32 %v2680, %v2839
        %v2841 = vrcp.pop %v2757
        %v2842 = vmul.f32 %v2682, %v2841
        %v2843 = vrcp.pop %v2760
        %v2844 = vmul.f32 %v2684, %v2843
        %v2845 = vrcp.pop %v2763
        %v2846 = vmul.f32 %v2686, %v2845
        %v2847 = vrcp.pop %v2766
        %v2848 = vmul.f32 %v2688, %v2847
        %v2849 = vrcp.pop %v2769
        %v2850 = vmul.f32 %v2690, %v2849
        %v2851 = vrcp.pop %v2772
        %v2852 = vmul.f32 %v2692, %v2851
        %v2853 = vrcp.pop %v2775
        %v2854 = vmul.f32 %v2694, %v2853
        %v2855 = vrcp.pop %v2778
        %v2856 = vmul.f32 %v2696, %v2855
        %v2857 = vrcp.pop %v2781
        %v2858 = vmul.f32 %v2698, %v2857
        %v2859 = vrcp.pop %v2784
        %v2860 = vmul.f32 %v2700, %v2859
        %v2861 = vrcp.pop %v2787
        %v2862 = vmul.f32 %v2702, %v2861
        %v2863 = vrcp.pop %v2790
        %v2864 = vmul.f32 %v2704, %v2863
        %v2865 = vrcp.pop %v2793
        %v2866 = vmul.f32 %v2706, %v2865
        %v2867 = vrcp.pop %v2796
        %v2868 = vmul.f32 %v2708, %v2867
        %v2869 = vrcp.pop %v2799
        %v2870 = vmul.f32 %v2710, %v2869
        %v2871 = vrcp.pop %v2802
        %v2872 = vmul.f32 %v2712, %v2871
        %v2873 = vrcp.pop %v2805
        %v2874 = vmul.f32 %v2714, %v2873
        %v2875 = vrcp.pop %v2808
        %v2876 = vmul.f32 %v2716, %v2875
        %v2877 = vrcp.pop %v2811
        %v2878 = vmul.f32 %v2718, %v2877
        %v2879 = vrcp.pop %v2814
        %v2880 = vmul.f32 %v2720, %v2879
        %v2881 = vrcp.pop %v2817
        %v2882 = vmul.f32 %v2722, %v2881
        %v2883 = vrcp.pop %v2820
        %v2884 = vmul.f32 %v2724, %v2883
        %v2885 = vpack.c.bf16 %v2824, %v2822
        %v2886 = vpack.c.bf16 %v2828, %v2826
        %v2887 = vpack.c.bf16 %v2832, %v2830
        %v2888 = vpack.c.bf16 %v2836, %v2834
        %v2889 = vpack.c.bf16 %v2840, %v2838
        %v2890 = vpack.c.bf16 %v2844, %v2842
        %v2891 = vpack.c.bf16 %v2848, %v2846
        %v2892 = vpack.c.bf16 %v2852, %v2850
        %v2893 = vpack.c.bf16 %v2856, %v2854
        %v2894 = vpack.c.bf16 %v2860, %v2858
        %v2895 = vpack.c.bf16 %v2864, %v2862
        %v2896 = vpack.c.bf16 %v2868, %v2866
        %v2897 = vpack.c.bf16 %v2872, %v2870
        %v2898 = vpack.c.bf16 %v2876, %v2874
        %v2899 = vpack.c.bf16 %v2880, %v2878
        %v2900 = vpack.c.bf16 %v2884, %v2882
        %2905 = vrot.lane.b32.xlu0 %v1015, 96
        %v2906 = vpop.permute.xlu0 %2905
        %2907 = vrot.lane.b32.xlu0 %v1016, 96
        %v2908 = vpop.permute.xlu0 %2907
        %2909 = vrot.lane.b32.xlu0 %v1017, 96
        %v2910 = vpop.permute.xlu0 %2909
        %2911 = vrot.lane.b32.xlu0 %v1018, 96
        %v2912 = vpop.permute.xlu0 %2911
        %v2918 = vsel %vm1388, %v2885, 0
        %v2921 = vsel %vm1388, %v2886, 0
        %v2924 = vsel %vm1388, %v2887, 0
        %v2927 = vsel %vm1388, %v2888, 0
        %2929 = vmatprep.subr.bf16.mxu0 0
        %2930 = vmatpush1.bf16.msra.mxu0 0
        %2931 = vmatprep.subr.bf16.mxu0 0
        %2932 = vmatpush1.bf16.msra.mxu0 0
        %2933 = vmatprep.subr.bf16.mxu0 0
        %2934 = vmatpush1.bf16.msra.mxu0 0
        %2935 = vmatprep.subr.bf16.mxu0 0
        %2936 = vmatpush1.bf16.msra.mxu0 0
        %2937 = vmatprep.subr.bf16.mxu0 0
        %2938 = vmatpush1.bf16.msra.mxu0 %v2912
        %2939 = vmatprep.subr.bf16.mxu0 0
        %2940 = vmatpush1.bf16.msra.mxu0 %v2910
        %2941 = vmatprep.subr.bf16.mxu0 0
        %2942 = vmatpush1.bf16.msra.mxu0 %v2908
        %2943 = vmatprep.subr.bf16.mxu0 0
        %2944 = vmatpush1.bf16.msra.mxu0 %v2906
        %2945 = vmatprep.subr.bf16.mxu0 0
        %2946 = vmatpush2.bf16.msra.mxu0 0
        %2947 = vmatprep.subr.bf16.mxu0 0
        %2948 = vmatpush2.bf16.msra.mxu0 0
        %2949 = vmatprep.subr.bf16.mxu0 0
        %2950 = vmatpush2.bf16.msra.mxu0 0
        %2951 = vmatprep.subr.bf16.mxu0 0
        %2952 = vmatpush2.bf16.msra.mxu0 0
        %2953 = vmatprep.subr.bf16.mxu0 0
        %2954 = vmatpush2.bf16.msra.mxu0 0
        %2955 = vmatprep.subr.bf16.mxu0 0
        %2956 = vmatpush2.bf16.msra.mxu0 0
        %2957 = vmatprep.subr.bf16.mxu0 0
        %2958 = vmatpush2.bf16.msra.mxu0 0
        %2959 = vmatprep.subr.bf16.mxu0 0
        %2960 = vmatpush2.bf16.msra.mxu0 0
        %2961 = vmatprep.mubr.bf16.mxu0 0
        %2962 = vmatmul.mubr.bf16.gmra.mxu0 %v2918
        %v2963 = vpop.f32.mrf.mxu0
        %v2964 = vadd.f32 0.0, %v2963
        %v2965 = vpop.f32.mrf.mxu0
        %v2966 = vpop.f32.mrf.mxu0
        %v2967 = vadd.f32 0.0, %v2966
        %v2968 = vpop.f32.mrf.mxu0
        %2969 = vmatprep.mubr.bf16.mxu0 0
        %2970 = vmatmul.mubr.bf16.gmra.mxu0 %v2921
        %v2971 = vpop.f32.mrf.mxu0
        %v2972 = vadd.f32 0.0, %v2971
        %v2973 = vpop.f32.mrf.mxu0
        %v2974 = vpop.f32.mrf.mxu0
        %v2975 = vadd.f32 0.0, %v2974
        %v2976 = vpop.f32.mrf.mxu0
        %2977 = vmatprep.mubr.bf16.mxu0 0
        %2978 = vmatmul.mubr.bf16.gmra.mxu0 %v2924
        %v2979 = vpop.f32.mrf.mxu0
        %v2980 = vadd.f32 0.0, %v2979
        %v2981 = vpop.f32.mrf.mxu0
        %v2982 = vpop.f32.mrf.mxu0
        %v2983 = vadd.f32 0.0, %v2982
        %v2984 = vpop.f32.mrf.mxu0
        %2985 = vmatprep.mubr.bf16.mxu0 0
        %2986 = vmatmul.mubr.bf16.gmra.mxu0 %v2927
        %v2987 = vpop.f32.mrf.mxu0
        %v2988 = vadd.f32 0.0, %v2987
        %v2989 = vpop.f32.mrf.mxu0
        %v2990 = vpop.f32.mrf.mxu0
        %v2991 = vadd.f32 0.0, %v2990
        %v2992 = vpop.f32.mrf.mxu0
        %2993 = vdwg.mxu0
        %2998 = vrot.lane.b32.xlu0 %v1019, 96
        %v2999 = vpop.permute.xlu0 %2998
        %3000 = vrot.lane.b32.xlu0 %v1020, 96
        %v3001 = vpop.permute.xlu0 %3000
        %3002 = vrot.lane.b32.xlu0 %v1021, 96
        %v3003 = vpop.permute.xlu0 %3002
        %3004 = vrot.lane.b32.xlu0 %v1022, 96
        %v3005 = vpop.permute.xlu0 %3004
        %v3011 = vsel %vm1388, %v2889, 0
        %v3014 = vsel %vm1388, %v2890, 0
        %v3017 = vsel %vm1388, %v2891, 0
        %v3020 = vsel %vm1388, %v2892, 0
        %3022 = vmatprep.subr.bf16.mxu0 0
        %3023 = vmatpush1.bf16.msra.mxu0 0
        %3024 = vmatprep.subr.bf16.mxu0 0
        %3025 = vmatpush1.bf16.msra.mxu0 0
        %3026 = vmatprep.subr.bf16.mxu0 0
        %3027 = vmatpush1.bf16.msra.mxu0 0
        %3028 = vmatprep.subr.bf16.mxu0 0
        %3029 = vmatpush1.bf16.msra.mxu0 0
        %3030 = vmatprep.subr.bf16.mxu0 0
        %3031 = vmatpush1.bf16.msra.mxu0 %v3005
        %3032 = vmatprep.subr.bf16.mxu0 0
        %3033 = vmatpush1.bf16.msra.mxu0 %v3003
        %3034 = vmatprep.subr.bf16.mxu0 0
        %3035 = vmatpush1.bf16.msra.mxu0 %v3001
        %3036 = vmatprep.subr.bf16.mxu0 0
        %3037 = vmatpush1.bf16.msra.mxu0 %v2999
        %3038 = vmatprep.subr.bf16.mxu0 0
        %3039 = vmatpush2.bf16.msra.mxu0 0
        %3040 = vmatprep.subr.bf16.mxu0 0
        %3041 = vmatpush2.bf16.msra.mxu0 0
        %3042 = vmatprep.subr.bf16.mxu0 0
        %3043 = vmatpush2.bf16.msra.mxu0 0
        %3044 = vmatprep.subr.bf16.mxu0 0
        %3045 = vmatpush2.bf16.msra.mxu0 0
        %3046 = vmatprep.subr.bf16.mxu0 0
        %3047 = vmatpush2.bf16.msra.mxu0 0
        %3048 = vmatprep.subr.bf16.mxu0 0
        %3049 = vmatpush2.bf16.msra.mxu0 0
        %3050 = vmatprep.subr.bf16.mxu0 0
        %3051 = vmatpush2.bf16.msra.mxu0 0
        %3052 = vmatprep.subr.bf16.mxu0 0
        %3053 = vmatpush2.bf16.msra.mxu0 0
        %3054 = vmatprep.mubr.bf16.mxu0 0
        %3055 = vmatmul.mubr.bf16.gmra.mxu0 %v3011
        %v3056 = vpop.f32.mrf.mxu0
        %v3057 = vadd.f32 0.0, %v3056
        %v3058 = vpop.f32.mrf.mxu0
        %v3059 = vpop.f32.mrf.mxu0
        %v3060 = vadd.f32 0.0, %v3059
        %v3061 = vpop.f32.mrf.mxu0
        %3062 = vmatprep.mubr.bf16.mxu0 0
        %3063 = vmatmul.mubr.bf16.gmra.mxu0 %v3014
        %v3064 = vpop.f32.mrf.mxu0
        %v3065 = vadd.f32 0.0, %v3064
        %v3066 = vpop.f32.mrf.mxu0
        %v3067 = vpop.f32.mrf.mxu0
        %v3068 = vadd.f32 0.0, %v3067
        %v3069 = vpop.f32.mrf.mxu0
        %3070 = vmatprep.mubr.bf16.mxu0 0
        %3071 = vmatmul.mubr.bf16.gmra.mxu0 %v3017
        %v3072 = vpop.f32.mrf.mxu0
        %v3073 = vadd.f32 0.0, %v3072
        %v3074 = vpop.f32.mrf.mxu0
        %v3075 = vpop.f32.mrf.mxu0
        %v3076 = vadd.f32 0.0, %v3075
        %v3077 = vpop.f32.mrf.mxu0
        %3078 = vmatprep.mubr.bf16.mxu0 0
        %3079 = vmatmul.mubr.bf16.gmra.mxu0 %v3020
        %v3080 = vpop.f32.mrf.mxu0
        %v3081 = vadd.f32 0.0, %v3080
        %v3082 = vpop.f32.mrf.mxu0
        %v3083 = vpop.f32.mrf.mxu0
        %v3084 = vadd.f32 0.0, %v3083
        %v3085 = vpop.f32.mrf.mxu0
        %3086 = vdwg.mxu0
        %3091 = vrot.lane.b32.xlu0 %v1023, 96
        %v3092 = vpop.permute.xlu0 %3091
        %3093 = vrot.lane.b32.xlu0 %v1024, 96
        %v3094 = vpop.permute.xlu0 %3093
        %3095 = vrot.lane.b32.xlu0 %v1025, 96
        %v3096 = vpop.permute.xlu0 %3095
        %3097 = vrot.lane.b32.xlu0 %v1026, 96
        %v3098 = vpop.permute.xlu0 %3097
        %v3104 = vsel %vm1388, %v2893, 0
        %v3107 = vsel %vm1388, %v2894, 0
        %v3110 = vsel %vm1388, %v2895, 0
        %v3113 = vsel %vm1388, %v2896, 0
        %3115 = vmatprep.subr.bf16.mxu0 0
        %3116 = vmatpush1.bf16.msra.mxu0 0
        %3117 = vmatprep.subr.bf16.mxu0 0
        %3118 = vmatpush1.bf16.msra.mxu0 0
        %3119 = vmatprep.subr.bf16.mxu0 0
        %3120 = vmatpush1.bf16.msra.mxu0 0
        %3121 = vmatprep.subr.bf16.mxu0 0
        %3122 = vmatpush1.bf16.msra.mxu0 0
        %3123 = vmatprep.subr.bf16.mxu0 0
        %3124 = vmatpush1.bf16.msra.mxu0 %v3098
        %3125 = vmatprep.subr.bf16.mxu0 0
        %3126 = vmatpush1.bf16.msra.mxu0 %v3096
        %3127 = vmatprep.subr.bf16.mxu0 0
        %3128 = vmatpush1.bf16.msra.mxu0 %v3094
        %3129 = vmatprep.subr.bf16.mxu0 0
        %3130 = vmatpush1.bf16.msra.mxu0 %v3092
        %3131 = vmatprep.subr.bf16.mxu0 0
        %3132 = vmatpush2.bf16.msra.mxu0 0
        %3133 = vmatprep.subr.bf16.mxu0 0
        %3134 = vmatpush2.bf16.msra.mxu0 0
        %3135 = vmatprep.subr.bf16.mxu0 0
        %3136 = vmatpush2.bf16.msra.mxu0 0
        %3137 = vmatprep.subr.bf16.mxu0 0
        %3138 = vmatpush2.bf16.msra.mxu0 0
        %3139 = vmatprep.subr.bf16.mxu0 0
        %3140 = vmatpush2.bf16.msra.mxu0 0
        %3141 = vmatprep.subr.bf16.mxu0 0
        %3142 = vmatpush2.bf16.msra.mxu0 0
        %3143 = vmatprep.subr.bf16.mxu0 0
        %3144 = vmatpush2.bf16.msra.mxu0 0
        %3145 = vmatprep.subr.bf16.mxu0 0
        %3146 = vmatpush2.bf16.msra.mxu0 0
        %3147 = vmatprep.mubr.bf16.mxu0 0
        %3148 = vmatmul.mubr.bf16.gmra.mxu0 %v3104
        %v3149 = vpop.f32.mrf.mxu0
        %v3150 = vadd.f32 0.0, %v3149
        %v3151 = vpop.f32.mrf.mxu0
        %v3152 = vpop.f32.mrf.mxu0
        %v3153 = vadd.f32 0.0, %v3152
        %v3154 = vpop.f32.mrf.mxu0
        %3155 = vmatprep.mubr.bf16.mxu0 0
        %3156 = vmatmul.mubr.bf16.gmra.mxu0 %v3107
        %v3157 = vpop.f32.mrf.mxu0
        %v3158 = vadd.f32 0.0, %v3157
        %v3159 = vpop.f32.mrf.mxu0
        %v3160 = vpop.f32.mrf.mxu0
        %v3161 = vadd.f32 0.0, %v3160
        %v3162 = vpop.f32.mrf.mxu0
        %3163 = vmatprep.mubr.bf16.mxu0 0
        %3164 = vmatmul.mubr.bf16.gmra.mxu0 %v3110
        %v3165 = vpop.f32.mrf.mxu0
        %v3166 = vadd.f32 0.0, %v3165
        %v3167 = vpop.f32.mrf.mxu0
        %v3168 = vpop.f32.mrf.mxu0
        %v3169 = vadd.f32 0.0, %v3168
        %v3170 = vpop.f32.mrf.mxu0
        %3171 = vmatprep.mubr.bf16.mxu0 0
        %3172 = vmatmul.mubr.bf16.gmra.mxu0 %v3113
        %v3173 = vpop.f32.mrf.mxu0
        %v3174 = vadd.f32 0.0, %v3173
        %v3175 = vpop.f32.mrf.mxu0
        %v3176 = vpop.f32.mrf.mxu0
        %v3177 = vadd.f32 0.0, %v3176
        %v3178 = vpop.f32.mrf.mxu0
        %3179 = vdwg.mxu0
        %3184 = vrot.lane.b32.xlu0 %v1027, 96
        %v3185 = vpop.permute.xlu0 %3184
        %3186 = vrot.lane.b32.xlu0 %v1028, 96
        %v3187 = vpop.permute.xlu0 %3186
        %3188 = vrot.lane.b32.xlu0 %v1029, 96
        %v3189 = vpop.permute.xlu0 %3188
        %3190 = vrot.lane.b32.xlu0 %v1030, 96
        %v3191 = vpop.permute.xlu0 %3190
        %v3197 = vsel %vm1388, %v2897, 0
        %v3200 = vsel %vm1388, %v2898, 0
        %v3203 = vsel %vm1388, %v2899, 0
        %v3206 = vsel %vm1388, %v2900, 0
        %3208 = vmatprep.subr.bf16.mxu0 0
        %3209 = vmatpush1.bf16.msra.mxu0 0
        %3210 = vmatprep.subr.bf16.mxu0 0
        %3211 = vmatpush1.bf16.msra.mxu0 0
        %3212 = vmatprep.subr.bf16.mxu0 0
        %3213 = vmatpush1.bf16.msra.mxu0 0
        %3214 = vmatprep.subr.bf16.mxu0 0
        %3215 = vmatpush1.bf16.msra.mxu0 0
        %3216 = vmatprep.subr.bf16.mxu0 0
        %3217 = vmatpush1.bf16.msra.mxu0 %v3191
        %3218 = vmatprep.subr.bf16.mxu0 0
        %3219 = vmatpush1.bf16.msra.mxu0 %v3189
        %3220 = vmatprep.subr.bf16.mxu0 0
        %3221 = vmatpush1.bf16.msra.mxu0 %v3187
        %3222 = vmatprep.subr.bf16.mxu0 0
        %3223 = vmatpush1.bf16.msra.mxu0 %v3185
        %3224 = vmatprep.subr.bf16.mxu0 0
        %3225 = vmatpush2.bf16.msra.mxu0 0
        %3226 = vmatprep.subr.bf16.mxu0 0
        %3227 = vmatpush2.bf16.msra.mxu0 0
        %3228 = vmatprep.subr.bf16.mxu0 0
        %3229 = vmatpush2.bf16.msra.mxu0 0
        %3230 = vmatprep.subr.bf16.mxu0 0
        %3231 = vmatpush2.bf16.msra.mxu0 0
        %3232 = vmatprep.subr.bf16.mxu0 0
        %3233 = vmatpush2.bf16.msra.mxu0 0
        %3234 = vmatprep.subr.bf16.mxu0 0
        %3235 = vmatpush2.bf16.msra.mxu0 0
        %3236 = vmatprep.subr.bf16.mxu0 0
        %3237 = vmatpush2.bf16.msra.mxu0 0
        %3238 = vmatprep.subr.bf16.mxu0 0
        %3239 = vmatpush2.bf16.msra.mxu0 0
        %3240 = vmatprep.mubr.bf16.mxu0 0
        %3241 = vmatmul.mubr.bf16.gmra.mxu0 %v3197
        %v3242 = vpop.f32.mrf.mxu0
        %v3243 = vadd.f32 0.0, %v3242
        %v3244 = vpop.f32.mrf.mxu0
        %v3245 = vpop.f32.mrf.mxu0
        %v3246 = vadd.f32 0.0, %v3245
        %v3247 = vpop.f32.mrf.mxu0
        %3248 = vmatprep.mubr.bf16.mxu0 0
        %3249 = vmatmul.mubr.bf16.gmra.mxu0 %v3200
        %v3250 = vpop.f32.mrf.mxu0
        %v3251 = vadd.f32 0.0, %v3250
        %v3252 = vpop.f32.mrf.mxu0
        %v3253 = vpop.f32.mrf.mxu0
        %v3254 = vadd.f32 0.0, %v3253
        %v3255 = vpop.f32.mrf.mxu0
        %3256 = vmatprep.mubr.bf16.mxu0 0
        %3257 = vmatmul.mubr.bf16.gmra.mxu0 %v3203
        %v3258 = vpop.f32.mrf.mxu0
        %v3259 = vadd.f32 0.0, %v3258
        %v3260 = vpop.f32.mrf.mxu0
        %v3261 = vpop.f32.mrf.mxu0
        %v3262 = vadd.f32 0.0, %v3261
        %v3263 = vpop.f32.mrf.mxu0
        %3264 = vmatprep.mubr.bf16.mxu0 0
        %3265 = vmatmul.mubr.bf16.gmra.mxu0 %v3206
        %v3266 = vpop.f32.mrf.mxu0
        %v3267 = vadd.f32 0.0, %v3266
        %v3268 = vpop.f32.mrf.mxu0
        %v3269 = vpop.f32.mrf.mxu0
        %v3270 = vadd.f32 0.0, %v3269
        %v3271 = vpop.f32.mrf.mxu0
        %3272 = vdwg.mxu0
        %v3273 = vpack.c.bf16 %v2967, %v2964
        %v3274 = vpack.c.bf16 %v2975, %v2972
        %v3275 = vpack.c.bf16 %v2983, %v2980
        %v3276 = vpack.c.bf16 %v2991, %v2988
        %v3277 = vpack.c.bf16 %v3060, %v3057
        %v3278 = vpack.c.bf16 %v3068, %v3065
        %v3279 = vpack.c.bf16 %v3076, %v3073
        %v3280 = vpack.c.bf16 %v3084, %v3081
        %v3281 = vpack.c.bf16 %v3153, %v3150
        %v3282 = vpack.c.bf16 %v3161, %v3158
        %v3283 = vpack.c.bf16 %v3169, %v3166
        %v3284 = vpack.c.bf16 %v3177, %v3174
        %v3285 = vpack.c.bf16 %v3246, %v3243
        %v3286 = vpack.c.bf16 %v3254, %v3251
        %v3287 = vpack.c.bf16 %v3262, %v3259
        %v3288 = vpack.c.bf16 %v3270, %v3267
        %v3293 = vunpack.c.l.b16 %v939
        %v3294 = vunpack.c.l.b16 %v940
        %v3295 = vunpack.c.l.b16 %v941
        %v3296 = vunpack.c.l.b16 %v942
        %v3297 = vpack.c.b16 %v3294, %v3293
        %v3298 = vpack.c.b16 %v3296, %v3295
        %v3302 = vsel %vm1031, %v3273, 0
        %v3305 = vsel %vm1031, %v3274, 0
        %v3308 = vsel %vm1031, %v3275, 0
        %v3311 = vsel %vm1031, %v3276, 0
        %v3314 = vsel %vm1031, %v3277, 0
        %v3317 = vsel %vm1031, %v3278, 0
        %v3320 = vsel %vm1031, %v3279, 0
        %v3323 = vsel %vm1031, %v3280, 0
        %v3326 = vsel %vm1031, %v3281, 0
        %v3329 = vsel %vm1031, %v3282, 0
        %v3332 = vsel %vm1031, %v3283, 0
        %v3335 = vsel %vm1031, %v3284, 0
        %v3338 = vsel %vm1031, %v3285, 0
        %v3341 = vsel %vm1031, %v3286, 0
        %v3344 = vsel %vm1031, %v3287, 0
        %v3347 = vsel %vm1031, %v3288, 0
        %3349 = vmatprep.subr.bf16.mxu0 0
        %3350 = vmatpush1.bf16.msra.mxu0 0
        %3351 = vmatprep.subr.bf16.mxu0 0
        %3352 = vmatpush1.bf16.msra.mxu0 0
        %3353 = vmatprep.subr.bf16.mxu0 0
        %3354 = vmatpush1.bf16.msra.mxu0 0
        %3355 = vmatprep.subr.bf16.mxu0 0
        %3356 = vmatpush1.bf16.msra.mxu0 0
        %3357 = vmatprep.subr.bf16.mxu0 0
        %3358 = vmatpush1.bf16.msra.mxu0 0
        %3359 = vmatprep.subr.bf16.mxu0 0
        %3360 = vmatpush1.bf16.msra.mxu0 0
        %3361 = vmatprep.subr.bf16.mxu0 0
        %3362 = vmatpush1.bf16.msra.mxu0 %v3298
        %3363 = vmatprep.subr.bf16.mxu0 0
        %3364 = vmatpush1.bf16.msra.mxu0 %v3297
        %3365 = vmatprep.subr.bf16.mxu0 0
        %3366 = vmatpush2.bf16.msra.mxu0 0
        %3367 = vmatprep.subr.bf16.mxu0 0
        %3368 = vmatpush2.bf16.msra.mxu0 0
        %3369 = vmatprep.subr.bf16.mxu0 0
        %3370 = vmatpush2.bf16.msra.mxu0 0
        %3371 = vmatprep.subr.bf16.mxu0 0
        %3372 = vmatpush2.bf16.msra.mxu0 0
        %3373 = vmatprep.subr.bf16.mxu0 0
        %3374 = vmatpush2.bf16.msra.mxu0 0
        %3375 = vmatprep.subr.bf16.mxu0 0
        %3376 = vmatpush2.bf16.msra.mxu0 0
        %3377 = vmatprep.subr.bf16.mxu0 0
        %3378 = vmatpush2.bf16.msra.mxu0 0
        %3379 = vmatprep.subr.bf16.mxu0 0
        %3380 = vmatpush2.bf16.msra.mxu0 0
        %3381 = vmatprep.mubr.bf16.mxu0 0
        %3382 = vmatmul.mubr.bf16.gmra.mxu0 %v3302
        %v3383 = vpop.f32.mrf.mxu0
        %v3384 = vadd.f32 0.0, %v3383
        %v3385 = vpop.f32.mrf.mxu0
        %v3386 = vpop.f32.mrf.mxu0
        %v3387 = vadd.f32 0.0, %v3386
        %v3388 = vpop.f32.mrf.mxu0
        %3389 = vmatprep.mubr.bf16.mxu0 0
        %3390 = vmatmul.mubr.bf16.gmra.mxu0 %v3305
        %v3391 = vpop.f32.mrf.mxu0
        %v3392 = vadd.f32 0.0, %v3391
        %v3393 = vpop.f32.mrf.mxu0
        %v3394 = vpop.f32.mrf.mxu0
        %v3395 = vadd.f32 0.0, %v3394
        %v3396 = vpop.f32.mrf.mxu0
        %3397 = vmatprep.mubr.bf16.mxu0 0
        %3398 = vmatmul.mubr.bf16.gmra.mxu0 %v3308
        %v3399 = vpop.f32.mrf.mxu0
        %v3400 = vadd.f32 0.0, %v3399
        %v3401 = vpop.f32.mrf.mxu0
        %v3402 = vpop.f32.mrf.mxu0
        %v3403 = vadd.f32 0.0, %v3402
        %v3404 = vpop.f32.mrf.mxu0
        %3405 = vmatprep.mubr.bf16.mxu0 0
        %3406 = vmatmul.mubr.bf16.gmra.mxu0 %v3311
        %v3407 = vpop.f32.mrf.mxu0
        %v3408 = vadd.f32 0.0, %v3407
        %v3409 = vpop.f32.mrf.mxu0
        %v3410 = vpop.f32.mrf.mxu0
        %v3411 = vadd.f32 0.0, %v3410
        %v3412 = vpop.f32.mrf.mxu0
        %3413 = vmatprep.mubr.bf16.mxu0 0
        %3414 = vmatmul.mubr.bf16.gmra.mxu0 %v3314
        %v3415 = vpop.f32.mrf.mxu0
        %v3416 = vadd.f32 0.0, %v3415
        %v3417 = vpop.f32.mrf.mxu0
        %v3418 = vpop.f32.mrf.mxu0
        %v3419 = vadd.f32 0.0, %v3418
        %v3420 = vpop.f32.mrf.mxu0
        %3421 = vmatprep.mubr.bf16.mxu0 0
        %3422 = vmatmul.mubr.bf16.gmra.mxu0 %v3317
        %v3423 = vpop.f32.mrf.mxu0
        %v3424 = vadd.f32 0.0, %v3423
        %v3425 = vpop.f32.mrf.mxu0
        %v3426 = vpop.f32.mrf.mxu0
        %v3427 = vadd.f32 0.0, %v3426
        %v3428 = vpop.f32.mrf.mxu0
        %3429 = vmatprep.mubr.bf16.mxu0 0
        %3430 = vmatmul.mubr.bf16.gmra.mxu0 %v3320
        %v3431 = vpop.f32.mrf.mxu0
        %v3432 = vadd.f32 0.0, %v3431
        %v3433 = vpop.f32.mrf.mxu0
        %v3434 = vpop.f32.mrf.mxu0
        %v3435 = vadd.f32 0.0, %v3434
        %v3436 = vpop.f32.mrf.mxu0
        %3437 = vmatprep.mubr.bf16.mxu0 0
        %3438 = vmatmul.mubr.bf16.gmra.mxu0 %v3323
        %v3439 = vpop.f32.mrf.mxu0
        %v3440 = vadd.f32 0.0, %v3439
        %v3441 = vpop.f32.mrf.mxu0
        %v3442 = vpop.f32.mrf.mxu0
        %v3443 = vadd.f32 0.0, %v3442
        %v3444 = vpop.f32.mrf.mxu0
        %3445 = vmatprep.mubr.bf16.mxu0 0
        %3446 = vmatmul.mubr.bf16.gmra.mxu0 %v3326
        %v3447 = vpop.f32.mrf.mxu0
        %v3448 = vadd.f32 0.0, %v3447
        %v3449 = vpop.f32.mrf.mxu0
        %v3450 = vpop.f32.mrf.mxu0
        %v3451 = vadd.f32 0.0, %v3450
        %v3452 = vpop.f32.mrf.mxu0
        %3453 = vmatprep.mubr.bf16.mxu0 0
        %3454 = vmatmul.mubr.bf16.gmra.mxu0 %v3329
        %v3455 = vpop.f32.mrf.mxu0
        %v3456 = vadd.f32 0.0, %v3455
        %v3457 = vpop.f32.mrf.mxu0
        %v3458 = vpop.f32.mrf.mxu0
        %v3459 = vadd.f32 0.0, %v3458
        %v3460 = vpop.f32.mrf.mxu0
        %3461 = vmatprep.mubr.bf16.mxu0 0
        %3462 = vmatmul.mubr.bf16.gmra.mxu0 %v3332
        %v3463 = vpop.f32.mrf.mxu0
        %v3464 = vadd.f32 0.0, %v3463
        %v3465 = vpop.f32.mrf.mxu0
        %v3466 = vpop.f32.mrf.mxu0
        %v3467 = vadd.f32 0.0, %v3466
        %v3468 = vpop.f32.mrf.mxu0
        %3469 = vmatprep.mubr.bf16.mxu0 0
        %3470 = vmatmul.mubr.bf16.gmra.mxu0 %v3335
        %v3471 = vpop.f32.mrf.mxu0
        %v3472 = vadd.f32 0.0, %v3471
        %v3473 = vpop.f32.mrf.mxu0
        %v3474 = vpop.f32.mrf.mxu0
        %v3475 = vadd.f32 0.0, %v3474
        %v3476 = vpop.f32.mrf.mxu0
        %3477 = vmatprep.mubr.bf16.mxu0 0
        %3478 = vmatmul.mubr.bf16.gmra.mxu0 %v3338
        %v3479 = vpop.f32.mrf.mxu0
        %v3480 = vadd.f32 0.0, %v3479
        %v3481 = vpop.f32.mrf.mxu0
        %v3482 = vpop.f32.mrf.mxu0
        %v3483 = vadd.f32 0.0, %v3482
        %v3484 = vpop.f32.mrf.mxu0
        %3485 = vmatprep.mubr.bf16.mxu0 0
        %3486 = vmatmul.mubr.bf16.gmra.mxu0 %v3341
        %v3487 = vpop.f32.mrf.mxu0
        %v3488 = vadd.f32 0.0, %v3487
        %v3489 = vpop.f32.mrf.mxu0
        %v3490 = vpop.f32.mrf.mxu0
        %v3491 = vadd.f32 0.0, %v3490
        %v3492 = vpop.f32.mrf.mxu0
        %3493 = vmatprep.mubr.bf16.mxu0 0
        %3494 = vmatmul.mubr.bf16.gmra.mxu0 %v3344
        %v3495 = vpop.f32.mrf.mxu0
        %v3496 = vadd.f32 0.0, %v3495
        %v3497 = vpop.f32.mrf.mxu0
        %v3498 = vpop.f32.mrf.mxu0
        %v3499 = vadd.f32 0.0, %v3498
        %v3500 = vpop.f32.mrf.mxu0
        %3501 = vmatprep.mubr.bf16.mxu0 0
        %3502 = vmatmul.mubr.bf16.gmra.mxu0 %v3347
        %v3503 = vpop.f32.mrf.mxu0
        %v3504 = vadd.f32 0.0, %v3503
        %v3505 = vpop.f32.mrf.mxu0
        %v3506 = vpop.f32.mrf.mxu0
        %v3507 = vadd.f32 0.0, %v3506
        %v3508 = vpop.f32.mrf.mxu0
        %3509 = vdwg.mxu0
        %v3514 = vunpack.c.l.b16 %v935
        %v3515 = vunpack.c.l.b16 %v936
        %v3516 = vunpack.c.l.b16 %v937
        %v3517 = vunpack.c.l.b16 %v938
        %v3518 = vpack.c.b16 %v3515, %v3514
        %v3519 = vpack.c.b16 %v3517, %v3516
        %v3523 = vsel %vm1031, %v2065, 0
        %v3526 = vsel %vm1031, %v2066, 0
        %v3529 = vsel %vm1031, %v2067, 0
        %v3532 = vsel %vm1031, %v2068, 0
        %v3535 = vsel %vm1031, %v2069, 0
        %v3538 = vsel %vm1031, %v2070, 0
        %v3541 = vsel %vm1031, %v2071, 0
        %v3544 = vsel %vm1031, %v2072, 0
        %v3547 = vsel %vm1031, %v2073, 0
        %v3550 = vsel %vm1031, %v2074, 0
        %v3553 = vsel %vm1031, %v2075, 0
        %v3556 = vsel %vm1031, %v2076, 0
        %v3559 = vsel %vm1031, %v2077, 0
        %v3562 = vsel %vm1031, %v2078, 0
        %v3565 = vsel %vm1031, %v2079, 0
        %v3568 = vsel %vm1031, %v2080, 0
        %3570 = vmatprep.subr.bf16.mxu0 0
        %3571 = vmatpush1.bf16.msra.mxu0 0
        %3572 = vmatprep.subr.bf16.mxu0 0
        %3573 = vmatpush1.bf16.msra.mxu0 0
        %3574 = vmatprep.subr.bf16.mxu0 0
        %3575 = vmatpush1.bf16.msra.mxu0 0
        %3576 = vmatprep.subr.bf16.mxu0 0
        %3577 = vmatpush1.bf16.msra.mxu0 0
        %3578 = vmatprep.subr.bf16.mxu0 0
        %3579 = vmatpush1.bf16.msra.mxu0 0
        %3580 = vmatprep.subr.bf16.mxu0 0
        %3581 = vmatpush1.bf16.msra.mxu0 0
        %3582 = vmatprep.subr.bf16.mxu0 0
        %3583 = vmatpush1.bf16.msra.mxu0 %v3519
        %3584 = vmatprep.subr.bf16.mxu0 0
        %3585 = vmatpush1.bf16.msra.mxu0 %v3518
        %3586 = vmatprep.subr.bf16.mxu0 0
        %3587 = vmatpush2.bf16.msra.mxu0 0
        %3588 = vmatprep.subr.bf16.mxu0 0
        %3589 = vmatpush2.bf16.msra.mxu0 0
        %3590 = vmatprep.subr.bf16.mxu0 0
        %3591 = vmatpush2.bf16.msra.mxu0 0
        %3592 = vmatprep.subr.bf16.mxu0 0
        %3593 = vmatpush2.bf16.msra.mxu0 0
        %3594 = vmatprep.subr.bf16.mxu0 0
        %3595 = vmatpush2.bf16.msra.mxu0 0
        %3596 = vmatprep.subr.bf16.mxu0 0
        %3597 = vmatpush2.bf16.msra.mxu0 0
        %3598 = vmatprep.subr.bf16.mxu0 0
        %3599 = vmatpush2.bf16.msra.mxu0 0
        %3600 = vmatprep.subr.bf16.mxu0 0
        %3601 = vmatpush2.bf16.msra.mxu0 0
        %3602 = vmatprep.mubr.bf16.mxu0 0
        %3603 = vmatmul.mubr.bf16.gmra.mxu0 %v3523
        %v3604 = vpop.f32.mrf.mxu0
        %v3605 = vadd.f32 %v3384, %v3604
        %v3606 = vpop.f32.mrf.mxu0
        %v3607 = vpop.f32.mrf.mxu0
        %v3608 = vadd.f32 %v3387, %v3607
        %v3609 = vpop.f32.mrf.mxu0
        %3610 = vmatprep.mubr.bf16.mxu0 0
        %3611 = vmatmul.mubr.bf16.gmra.mxu0 %v3526
        %v3612 = vpop.f32.mrf.mxu0
        %v3613 = vadd.f32 %v3392, %v3612
        %v3614 = vpop.f32.mrf.mxu0
        %v3615 = vpop.f32.mrf.mxu0
        %v3616 = vadd.f32 %v3395, %v3615
        %v3617 = vpop.f32.mrf.mxu0
        %3618 = vmatprep.mubr.bf16.mxu0 0
        %3619 = vmatmul.mubr.bf16.gmra.mxu0 %v3529
        %v3620 = vpop.f32.mrf.mxu0
        %v3621 = vadd.f32 %v3400, %v3620
        %v3622 = vpop.f32.mrf.mxu0
        %v3623 = vpop.f32.mrf.mxu0
        %v3624 = vadd.f32 %v3403, %v3623
        %v3625 = vpop.f32.mrf.mxu0
        %3626 = vmatprep.mubr.bf16.mxu0 0
        %3627 = vmatmul.mubr.bf16.gmra.mxu0 %v3532
        %v3628 = vpop.f32.mrf.mxu0
        %v3629 = vadd.f32 %v3408, %v3628
        %v3630 = vpop.f32.mrf.mxu0
        %v3631 = vpop.f32.mrf.mxu0
        %v3632 = vadd.f32 %v3411, %v3631
        %v3633 = vpop.f32.mrf.mxu0
        %3634 = vmatprep.mubr.bf16.mxu0 0
        %3635 = vmatmul.mubr.bf16.gmra.mxu0 %v3535
        %v3636 = vpop.f32.mrf.mxu0
        %v3637 = vadd.f32 %v3416, %v3636
        %v3638 = vpop.f32.mrf.mxu0
        %v3639 = vpop.f32.mrf.mxu0
        %v3640 = vadd.f32 %v3419, %v3639
        %v3641 = vpop.f32.mrf.mxu0
        %3642 = vmatprep.mubr.bf16.mxu0 0
        %3643 = vmatmul.mubr.bf16.gmra.mxu0 %v3538
        %v3644 = vpop.f32.mrf.mxu0
        %v3645 = vadd.f32 %v3424, %v3644
        %v3646 = vpop.f32.mrf.mxu0
        %v3647 = vpop.f32.mrf.mxu0
        %v3648 = vadd.f32 %v3427, %v3647
        %v3649 = vpop.f32.mrf.mxu0
        %3650 = vmatprep.mubr.bf16.mxu0 0
        %3651 = vmatmul.mubr.bf16.gmra.mxu0 %v3541
        %v3652 = vpop.f32.mrf.mxu0
        %v3653 = vadd.f32 %v3432, %v3652
        %v3654 = vpop.f32.mrf.mxu0
        %v3655 = vpop.f32.mrf.mxu0
        %v3656 = vadd.f32 %v3435, %v3655
        %v3657 = vpop.f32.mrf.mxu0
        %3658 = vmatprep.mubr.bf16.mxu0 0
        %3659 = vmatmul.mubr.bf16.gmra.mxu0 %v3544
        %v3660 = vpop.f32.mrf.mxu0
        %v3661 = vadd.f32 %v3440, %v3660
        %v3662 = vpop.f32.mrf.mxu0
        %v3663 = vpop.f32.mrf.mxu0
        %v3664 = vadd.f32 %v3443, %v3663
        %v3665 = vpop.f32.mrf.mxu0
        %3666 = vmatprep.mubr.bf16.mxu0 0
        %3667 = vmatmul.mubr.bf16.gmra.mxu0 %v3547
        %v3668 = vpop.f32.mrf.mxu0
        %v3669 = vadd.f32 %v3448, %v3668
        %v3670 = vpop.f32.mrf.mxu0
        %v3671 = vpop.f32.mrf.mxu0
        %v3672 = vadd.f32 %v3451, %v3671
        %v3673 = vpop.f32.mrf.mxu0
        %3674 = vmatprep.mubr.bf16.mxu0 0
        %3675 = vmatmul.mubr.bf16.gmra.mxu0 %v3550
        %v3676 = vpop.f32.mrf.mxu0
        %v3677 = vadd.f32 %v3456, %v3676
        %v3678 = vpop.f32.mrf.mxu0
        %v3679 = vpop.f32.mrf.mxu0
        %v3680 = vadd.f32 %v3459, %v3679
        %v3681 = vpop.f32.mrf.mxu0
        %3682 = vmatprep.mubr.bf16.mxu0 0
        %3683 = vmatmul.mubr.bf16.gmra.mxu0 %v3553
        %v3684 = vpop.f32.mrf.mxu0
        %v3685 = vadd.f32 %v3464, %v3684
        %v3686 = vpop.f32.mrf.mxu0
        %v3687 = vpop.f32.mrf.mxu0
        %v3688 = vadd.f32 %v3467, %v3687
        %v3689 = vpop.f32.mrf.mxu0
        %3690 = vmatprep.mubr.bf16.mxu0 0
        %3691 = vmatmul.mubr.bf16.gmra.mxu0 %v3556
        %v3692 = vpop.f32.mrf.mxu0
        %v3693 = vadd.f32 %v3472, %v3692
        %v3694 = vpop.f32.mrf.mxu0
        %v3695 = vpop.f32.mrf.mxu0
        %v3696 = vadd.f32 %v3475, %v3695
        %v3697 = vpop.f32.mrf.mxu0
        %3698 = vmatprep.mubr.bf16.mxu0 0
        %3699 = vmatmul.mubr.bf16.gmra.mxu0 %v3559
        %v3700 = vpop.f32.mrf.mxu0
        %v3701 = vadd.f32 %v3480, %v3700
        %v3702 = vpop.f32.mrf.mxu0
        %v3703 = vpop.f32.mrf.mxu0
        %v3704 = vadd.f32 %v3483, %v3703
        %v3705 = vpop.f32.mrf.mxu0
        %3706 = vmatprep.mubr.bf16.mxu0 0
        %3707 = vmatmul.mubr.bf16.gmra.mxu0 %v3562
        %v3708 = vpop.f32.mrf.mxu0
        %v3709 = vadd.f32 %v3488, %v3708
        %v3710 = vpop.f32.mrf.mxu0
        %v3711 = vpop.f32.mrf.mxu0
        %v3712 = vadd.f32 %v3491, %v3711
        %v3713 = vpop.f32.mrf.mxu0
        %3714 = vmatprep.mubr.bf16.mxu0 0
        %3715 = vmatmul.mubr.bf16.gmra.mxu0 %v3565
        %v3716 = vpop.f32.mrf.mxu0
        %v3717 = vadd.f32 %v3496, %v3716
        %v3718 = vpop.f32.mrf.mxu0
        %v3719 = vpop.f32.mrf.mxu0
        %v3720 = vadd.f32 %v3499, %v3719
        %v3721 = vpop.f32.mrf.mxu0
        %3722 = vmatprep.mubr.bf16.mxu0 0
        %3723 = vmatmul.mubr.bf16.gmra.mxu0 %v3568
        %v3724 = vpop.f32.mrf.mxu0
        %v3725 = vadd.f32 %v3504, %v3724
        %v3726 = vpop.f32.mrf.mxu0
        %v3727 = vpop.f32.mrf.mxu0
        %v3728 = vadd.f32 %v3507, %v3727
        %v3729 = vpop.f32.mrf.mxu0
        %3730 = vdwg.mxu0
        %3731 = vrot.lane.b32.xlu0 %v983, 64
        %v3732 = vpop.permute.xlu0 %3731
        %3733 = vrot.lane.b32.xlu0 %v984, 64
        %v3734 = vpop.permute.xlu0 %3733
        %3735 = vrot.lane.b32.xlu0 %v985, 64
        %v3736 = vpop.permute.xlu0 %3735
        %3737 = vrot.lane.b32.xlu0 %v986, 64
        %v3738 = vpop.permute.xlu0 %3737
        %3739 = vrot.lane.b32.xlu0 %v999, 64
        %v3740 = vpop.permute.xlu0 %3739
        %3741 = vrot.lane.b32.xlu0 %v1000, 64
        %v3742 = vpop.permute.xlu0 %3741
        %3743 = vrot.lane.b32.xlu0 %v1001, 64
        %v3744 = vpop.permute.xlu0 %3743
        %3745 = vrot.lane.b32.xlu0 %v1002, 64
        %v3746 = vpop.permute.xlu0 %3745
        %v3748 = vsel %vm1031, %v3732, 0
        %v3751 = vsel %vm1031, %v3734, 0
        %v3754 = vsel %vm1031, %v3736, 0
        %v3757 = vsel %vm1031, %v3738, 0
        %v3760 = vsel %vm1031, %v3740, 0
        %v3763 = vsel %vm1031, %v3742, 0
        %v3766 = vsel %vm1031, %v3744, 0
        %v3769 = vsel %vm1031, %v3746, 0
        %3771 = vmatprep.subr.bf16.mxu0 0
        %3772 = vmatpush1.bf16.xpose.msra.mxu0 0
        %3773 = vmatprep.subr.bf16.mxu0 0
        %3774 = vmatpush1.bf16.xpose.msra.mxu0 0
        %3775 = vmatprep.subr.bf16.mxu0 0
        %3776 = vmatpush1.bf16.xpose.msra.mxu0 0
        %3777 = vmatprep.subr.bf16.mxu0 0
        %3778 = vmatpush1.bf16.xpose.msra.mxu0 0
        %3779 = vmatprep.subr.bf16.mxu0 0
        %3780 = vmatpush1.bf16.xpose.msra.mxu0 %v3769
        %3781 = vmatprep.subr.bf16.mxu0 0
        %3782 = vmatpush1.bf16.xpose.msra.mxu0 %v3766
        %3783 = vmatprep.subr.bf16.mxu0 0
        %3784 = vmatpush1.bf16.xpose.msra.mxu0 %v3763
        %3785 = vmatprep.subr.bf16.mxu0 0
        %3786 = vmatpush1.bf16.xpose.msra.mxu0 %v3760
        %3787 = vmatprep.subr.bf16.mxu0 0
        %3788 = vmatpush2.bf16.xpose.msra.mxu0 0
        %3789 = vmatprep.subr.bf16.mxu0 0
        %3790 = vmatpush2.bf16.xpose.msra.mxu0 0
        %3791 = vmatprep.subr.bf16.mxu0 0
        %3792 = vmatpush2.bf16.xpose.msra.mxu0 0
        %3793 = vmatprep.subr.bf16.mxu0 0
        %3794 = vmatpush2.bf16.xpose.msra.mxu0 0
        %3795 = vmatprep.subr.bf16.mxu0 0
        %3796 = vmatpush2.bf16.xpose.msra.mxu0 0
        %3797 = vmatprep.subr.bf16.mxu0 0
        %3798 = vmatpush2.bf16.xpose.msra.mxu0 0
        %3799 = vmatprep.subr.bf16.mxu0 0
        %3800 = vmatpush2.bf16.xpose.msra.mxu0 0
        %3801 = vmatprep.subr.bf16.mxu0 0
        %3802 = vmatpush2.bf16.xpose.msra.mxu0 0
        %3803 = vmatprep.mubr.bf16.mxu0 0
        %3804 = vmatmul.mubr.bf16.gmra.mxu0 %v3748
        %v3805 = vpop.f32.mrf.mxu0
        %v3806 = vadd.f32 0.0, %v3805
        %v3807 = vpop.f32.mrf.mxu0
        %v3808 = vpop.f32.mrf.mxu0
        %v3809 = vadd.f32 0.0, %v3808
        %v3810 = vpop.f32.mrf.mxu0
        %3811 = vmatprep.mubr.bf16.mxu0 0
        %3812 = vmatmul.mubr.bf16.gmra.mxu0 %v3751
        %v3813 = vpop.f32.mrf.mxu0
        %v3814 = vadd.f32 0.0, %v3813
        %v3815 = vpop.f32.mrf.mxu0
        %v3816 = vpop.f32.mrf.mxu0
        %v3817 = vadd.f32 0.0, %v3816
        %v3818 = vpop.f32.mrf.mxu0
        %3819 = vmatprep.mubr.bf16.mxu0 0
        %3820 = vmatmul.mubr.bf16.gmra.mxu0 %v3754
        %v3821 = vpop.f32.mrf.mxu0
        %v3822 = vadd.f32 0.0, %v3821
        %v3823 = vpop.f32.mrf.mxu0
        %v3824 = vpop.f32.mrf.mxu0
        %v3825 = vadd.f32 0.0, %v3824
        %v3826 = vpop.f32.mrf.mxu0
        %3827 = vmatprep.mubr.bf16.mxu0 0
        %3828 = vmatmul.mubr.bf16.gmra.mxu0 %v3757
        %v3829 = vpop.f32.mrf.mxu0
        %v3830 = vadd.f32 0.0, %v3829
        %v3831 = vpop.f32.mrf.mxu0
        %v3832 = vpop.f32.mrf.mxu0
        %v3833 = vadd.f32 0.0, %v3832
        %v3834 = vpop.f32.mrf.mxu0
        %3835 = vdwg.mxu0
        %3836 = vrot.lane.b32.xlu0 %v987, 64
        %v3837 = vpop.permute.xlu0 %3836
        %3838 = vrot.lane.b32.xlu0 %v988, 64
        %v3839 = vpop.permute.xlu0 %3838
        %3840 = vrot.lane.b32.xlu0 %v989, 64
        %v3841 = vpop.permute.xlu0 %3840
        %3842 = vrot.lane.b32.xlu0 %v990, 64
        %v3843 = vpop.permute.xlu0 %3842
        %3844 = vrot.lane.b32.xlu0 %v1003, 64
        %v3845 = vpop.permute.xlu0 %3844
        %3846 = vrot.lane.b32.xlu0 %v1004, 64
        %v3847 = vpop.permute.xlu0 %3846
        %3848 = vrot.lane.b32.xlu0 %v1005, 64
        %v3849 = vpop.permute.xlu0 %3848
        %3850 = vrot.lane.b32.xlu0 %v1006, 64
        %v3851 = vpop.permute.xlu0 %3850
        %v3853 = vsel %vm1031, %v3837, 0
        %v3856 = vsel %vm1031, %v3839, 0
        %v3859 = vsel %vm1031, %v3841, 0
        %v3862 = vsel %vm1031, %v3843, 0
        %v3865 = vsel %vm1031, %v3845, 0
        %v3868 = vsel %vm1031, %v3847, 0
        %v3871 = vsel %vm1031, %v3849, 0
        %v3874 = vsel %vm1031, %v3851, 0
        %3876 = vmatprep.subr.bf16.mxu0 0
        %3877 = vmatpush1.bf16.xpose.msra.mxu0 0
        %3878 = vmatprep.subr.bf16.mxu0 0
        %3879 = vmatpush1.bf16.xpose.msra.mxu0 0
        %3880 = vmatprep.subr.bf16.mxu0 0
        %3881 = vmatpush1.bf16.xpose.msra.mxu0 0
        %3882 = vmatprep.subr.bf16.mxu0 0
        %3883 = vmatpush1.bf16.xpose.msra.mxu0 0
        %3884 = vmatprep.subr.bf16.mxu0 0
        %3885 = vmatpush1.bf16.xpose.msra.mxu0 %v3874
        %3886 = vmatprep.subr.bf16.mxu0 0
        %3887 = vmatpush1.bf16.xpose.msra.mxu0 %v3871
        %3888 = vmatprep.subr.bf16.mxu0 0
        %3889 = vmatpush1.bf16.xpose.msra.mxu0 %v3868
        %3890 = vmatprep.subr.bf16.mxu0 0
        %3891 = vmatpush1.bf16.xpose.msra.mxu0 %v3865
        %3892 = vmatprep.subr.bf16.mxu0 0
        %3893 = vmatpush2.bf16.xpose.msra.mxu0 0
        %3894 = vmatprep.subr.bf16.mxu0 0
        %3895 = vmatpush2.bf16.xpose.msra.mxu0 0
        %3896 = vmatprep.subr.bf16.mxu0 0
        %3897 = vmatpush2.bf16.xpose.msra.mxu0 0
        %3898 = vmatprep.subr.bf16.mxu0 0
        %3899 = vmatpush2.bf16.xpose.msra.mxu0 0
        %3900 = vmatprep.subr.bf16.mxu0 0
        %3901 = vmatpush2.bf16.xpose.msra.mxu0 0
        %3902 = vmatprep.subr.bf16.mxu0 0
        %3903 = vmatpush2.bf16.xpose.msra.mxu0 0
        %3904 = vmatprep.subr.bf16.mxu0 0
        %3905 = vmatpush2.bf16.xpose.msra.mxu0 0
        %3906 = vmatprep.subr.bf16.mxu0 0
        %3907 = vmatpush2.bf16.xpose.msra.mxu0 0
        %3908 = vmatprep.mubr.bf16.mxu0 0
        %3909 = vmatmul.mubr.bf16.gmra.mxu0 %v3853
        %v3910 = vpop.f32.mrf.mxu0
        %v3911 = vadd.f32 0.0, %v3910
        %v3912 = vpop.f32.mrf.mxu0
        %v3913 = vpop.f32.mrf.mxu0
        %v3914 = vadd.f32 0.0, %v3913
        %v3915 = vpop.f32.mrf.mxu0
        %3916 = vmatprep.mubr.bf16.mxu0 0
        %3917 = vmatmul.mubr.bf16.gmra.mxu0 %v3856
        %v3918 = vpop.f32.mrf.mxu0
        %v3919 = vadd.f32 0.0, %v3918
        %v3920 = vpop.f32.mrf.mxu0
        %v3921 = vpop.f32.mrf.mxu0
        %v3922 = vadd.f32 0.0, %v3921
        %v3923 = vpop.f32.mrf.mxu0
        %3924 = vmatprep.mubr.bf16.mxu0 0
        %3925 = vmatmul.mubr.bf16.gmra.mxu0 %v3859
        %v3926 = vpop.f32.mrf.mxu0
        %v3927 = vadd.f32 0.0, %v3926
        %v3928 = vpop.f32.mrf.mxu0
        %v3929 = vpop.f32.mrf.mxu0
        %v3930 = vadd.f32 0.0, %v3929
        %v3931 = vpop.f32.mrf.mxu0
        %3932 = vmatprep.mubr.bf16.mxu0 0
        %3933 = vmatmul.mubr.bf16.gmra.mxu0 %v3862
        %v3934 = vpop.f32.mrf.mxu0
        %v3935 = vadd.f32 0.0, %v3934
        %v3936 = vpop.f32.mrf.mxu0
        %v3937 = vpop.f32.mrf.mxu0
        %v3938 = vadd.f32 0.0, %v3937
        %v3939 = vpop.f32.mrf.mxu0
        %3940 = vdwg.mxu0
        %3941 = vrot.lane.b32.xlu0 %v991, 64
        %v3942 = vpop.permute.xlu0 %3941
        %3943 = vrot.lane.b32.xlu0 %v992, 64
        %v3944 = vpop.permute.xlu0 %3943
        %3945 = vrot.lane.b32.xlu0 %v993, 64
        %v3946 = vpop.permute.xlu0 %3945
        %3947 = vrot.lane.b32.xlu0 %v994, 64
        %v3948 = vpop.permute.xlu0 %3947
        %3949 = vrot.lane.b32.xlu0 %v1007, 64
        %v3950 = vpop.permute.xlu0 %3949
        %3951 = vrot.lane.b32.xlu0 %v1008, 64
        %v3952 = vpop.permute.xlu0 %3951
        %3953 = vrot.lane.b32.xlu0 %v1009, 64
        %v3954 = vpop.permute.xlu0 %3953
        %3955 = vrot.lane.b32.xlu0 %v1010, 64
        %v3956 = vpop.permute.xlu0 %3955
        %v3958 = vsel %vm1031, %v3942, 0
        %v3961 = vsel %vm1031, %v3944, 0
        %v3964 = vsel %vm1031, %v3946, 0
        %v3967 = vsel %vm1031, %v3948, 0
        %v3970 = vsel %vm1031, %v3950, 0
        %v3973 = vsel %vm1031, %v3952, 0
        %v3976 = vsel %vm1031, %v3954, 0
        %v3979 = vsel %vm1031, %v3956, 0
        %3981 = vmatprep.subr.bf16.mxu0 0
        %3982 = vmatpush1.bf16.xpose.msra.mxu0 0
        %3983 = vmatprep.subr.bf16.mxu0 0
        %3984 = vmatpush1.bf16.xpose.msra.mxu0 0
        %3985 = vmatprep.subr.bf16.mxu0 0
        %3986 = vmatpush1.bf16.xpose.msra.mxu0 0
        %3987 = vmatprep.subr.bf16.mxu0 0
        %3988 = vmatpush1.bf16.xpose.msra.mxu0 0
        %3989 = vmatprep.subr.bf16.mxu0 0
        %3990 = vmatpush1.bf16.xpose.msra.mxu0 %v3979
        %3991 = vmatprep.subr.bf16.mxu0 0
        %3992 = vmatpush1.bf16.xpose.msra.mxu0 %v3976
        %3993 = vmatprep.subr.bf16.mxu0 0
        %3994 = vmatpush1.bf16.xpose.msra.mxu0 %v3973
        %3995 = vmatprep.subr.bf16.mxu0 0
        %3996 = vmatpush1.bf16.xpose.msra.mxu0 %v3970
        %3997 = vmatprep.subr.bf16.mxu0 0
        %3998 = vmatpush2.bf16.xpose.msra.mxu0 0
        %3999 = vmatprep.subr.bf16.mxu0 0
        %4000 = vmatpush2.bf16.xpose.msra.mxu0 0
        %4001 = vmatprep.subr.bf16.mxu0 0
        %4002 = vmatpush2.bf16.xpose.msra.mxu0 0
        %4003 = vmatprep.subr.bf16.mxu0 0
        %4004 = vmatpush2.bf16.xpose.msra.mxu0 0
        %4005 = vmatprep.subr.bf16.mxu0 0
        %4006 = vmatpush2.bf16.xpose.msra.mxu0 0
        %4007 = vmatprep.subr.bf16.mxu0 0
        %4008 = vmatpush2.bf16.xpose.msra.mxu0 0
        %4009 = vmatprep.subr.bf16.mxu0 0
        %4010 = vmatpush2.bf16.xpose.msra.mxu0 0
        %4011 = vmatprep.subr.bf16.mxu0 0
        %4012 = vmatpush2.bf16.xpose.msra.mxu0 0
        %4013 = vmatprep.mubr.bf16.mxu0 0
        %4014 = vmatmul.mubr.bf16.gmra.mxu0 %v3958
        %v4015 = vpop.f32.mrf.mxu0
        %v4016 = vadd.f32 0.0, %v4015
        %v4017 = vpop.f32.mrf.mxu0
        %v4018 = vpop.f32.mrf.mxu0
        %v4019 = vadd.f32 0.0, %v4018
        %v4020 = vpop.f32.mrf.mxu0
        %4021 = vmatprep.mubr.bf16.mxu0 0
        %4022 = vmatmul.mubr.bf16.gmra.mxu0 %v3961
        %v4023 = vpop.f32.mrf.mxu0
        %v4024 = vadd.f32 0.0, %v4023
        %v4025 = vpop.f32.mrf.mxu0
        %v4026 = vpop.f32.mrf.mxu0
        %v4027 = vadd.f32 0.0, %v4026
        %v4028 = vpop.f32.mrf.mxu0
        %4029 = vmatprep.mubr.bf16.mxu0 0
        %4030 = vmatmul.mubr.bf16.gmra.mxu0 %v3964
        %v4031 = vpop.f32.mrf.mxu0
        %v4032 = vadd.f32 0.0, %v4031
        %v4033 = vpop.f32.mrf.mxu0
        %v4034 = vpop.f32.mrf.mxu0
        %v4035 = vadd.f32 0.0, %v4034
        %v4036 = vpop.f32.mrf.mxu0
        %4037 = vmatprep.mubr.bf16.mxu0 0
        %4038 = vmatmul.mubr.bf16.gmra.mxu0 %v3967
        %v4039 = vpop.f32.mrf.mxu0
        %v4040 = vadd.f32 0.0, %v4039
        %v4041 = vpop.f32.mrf.mxu0
        %v4042 = vpop.f32.mrf.mxu0
        %v4043 = vadd.f32 0.0, %v4042
        %v4044 = vpop.f32.mrf.mxu0
        %4045 = vdwg.mxu0
        %4046 = vrot.lane.b32.xlu0 %v995, 64
        %v4047 = vpop.permute.xlu0 %4046
        %4048 = vrot.lane.b32.xlu0 %v996, 64
        %v4049 = vpop.permute.xlu0 %4048
        %4050 = vrot.lane.b32.xlu0 %v997, 64
        %v4051 = vpop.permute.xlu0 %4050
        %4052 = vrot.lane.b32.xlu0 %v998, 64
        %v4053 = vpop.permute.xlu0 %4052
        %4054 = vrot.lane.b32.xlu0 %v1011, 64
        %v4055 = vpop.permute.xlu0 %4054
        %4056 = vrot.lane.b32.xlu0 %v1012, 64
        %v4057 = vpop.permute.xlu0 %4056
        %4058 = vrot.lane.b32.xlu0 %v1013, 64
        %v4059 = vpop.permute.xlu0 %4058
        %4060 = vrot.lane.b32.xlu0 %v1014, 64
        %v4061 = vpop.permute.xlu0 %4060
        %v4063 = vsel %vm1031, %v4047, 0
        %v4066 = vsel %vm1031, %v4049, 0
        %v4069 = vsel %vm1031, %v4051, 0
        %v4072 = vsel %vm1031, %v4053, 0
        %v4075 = vsel %vm1031, %v4055, 0
        %v4078 = vsel %vm1031, %v4057, 0
        %v4081 = vsel %vm1031, %v4059, 0
        %v4084 = vsel %vm1031, %v4061, 0
        %4086 = vmatprep.subr.bf16.mxu0 0
        %4087 = vmatpush1.bf16.xpose.msra.mxu0 0
        %4088 = vmatprep.subr.bf16.mxu0 0
        %4089 = vmatpush1.bf16.xpose.msra.mxu0 0
        %4090 = vmatprep.subr.bf16.mxu0 0
        %4091 = vmatpush1.bf16.xpose.msra.mxu0 0
        %4092 = vmatprep.subr.bf16.mxu0 0
        %4093 = vmatpush1.bf16.xpose.msra.mxu0 0
        %4094 = vmatprep.subr.bf16.mxu0 0
        %4095 = vmatpush1.bf16.xpose.msra.mxu0 %v4084
        %4096 = vmatprep.subr.bf16.mxu0 0
        %4097 = vmatpush1.bf16.xpose.msra.mxu0 %v4081
        %4098 = vmatprep.subr.bf16.mxu0 0
        %4099 = vmatpush1.bf16.xpose.msra.mxu0 %v4078
        %4100 = vmatprep.subr.bf16.mxu0 0
        %4101 = vmatpush1.bf16.xpose.msra.mxu0 %v4075
        %4102 = vmatprep.subr.bf16.mxu0 0
        %4103 = vmatpush2.bf16.xpose.msra.mxu0 0
        %4104 = vmatprep.subr.bf16.mxu0 0
        %4105 = vmatpush2.bf16.xpose.msra.mxu0 0
        %4106 = vmatprep.subr.bf16.mxu0 0
        %4107 = vmatpush2.bf16.xpose.msra.mxu0 0
        %4108 = vmatprep.subr.bf16.mxu0 0
        %4109 = vmatpush2.bf16.xpose.msra.mxu0 0
        %4110 = vmatprep.subr.bf16.mxu0 0
        %4111 = vmatpush2.bf16.xpose.msra.mxu0 0
        %4112 = vmatprep.subr.bf16.mxu0 0
        %4113 = vmatpush2.bf16.xpose.msra.mxu0 0
        %4114 = vmatprep.subr.bf16.mxu0 0
        %4115 = vmatpush2.bf16.xpose.msra.mxu0 0
        %4116 = vmatprep.subr.bf16.mxu0 0
        %4117 = vmatpush2.bf16.xpose.msra.mxu0 0
        %4118 = vmatprep.mubr.bf16.mxu0 0
        %4119 = vmatmul.mubr.bf16.gmra.mxu0 %v4063
        %v4120 = vpop.f32.mrf.mxu0
        %v4121 = vadd.f32 0.0, %v4120
        %v4122 = vpop.f32.mrf.mxu0
        %v4123 = vpop.f32.mrf.mxu0
        %v4124 = vadd.f32 0.0, %v4123
        %v4125 = vpop.f32.mrf.mxu0
        %4126 = vmatprep.mubr.bf16.mxu0 0
        %4127 = vmatmul.mubr.bf16.gmra.mxu0 %v4066
        %v4128 = vpop.f32.mrf.mxu0
        %v4129 = vadd.f32 0.0, %v4128
        %v4130 = vpop.f32.mrf.mxu0
        %v4131 = vpop.f32.mrf.mxu0
        %v4132 = vadd.f32 0.0, %v4131
        %v4133 = vpop.f32.mrf.mxu0
        %4134 = vmatprep.mubr.bf16.mxu0 0
        %4135 = vmatmul.mubr.bf16.gmra.mxu0 %v4069
        %v4136 = vpop.f32.mrf.mxu0
        %v4137 = vadd.f32 0.0, %v4136
        %v4138 = vpop.f32.mrf.mxu0
        %v4139 = vpop.f32.mrf.mxu0
        %v4140 = vadd.f32 0.0, %v4139
        %v4141 = vpop.f32.mrf.mxu0
        %4142 = vmatprep.mubr.bf16.mxu0 0
        %4143 = vmatmul.mubr.bf16.gmra.mxu0 %v4072
        %v4144 = vpop.f32.mrf.mxu0
        %v4145 = vadd.f32 0.0, %v4144
        %v4146 = vpop.f32.mrf.mxu0
        %v4147 = vpop.f32.mrf.mxu0
        %v4148 = vadd.f32 0.0, %v4147
        %v4149 = vpop.f32.mrf.mxu0
        %4150 = vdwg.mxu0
        %v4151 = vsel %vm1388, %v3806, -inf
        %4152 = vmax.xlane.f32.xlu0 %v4151
        %v4153 = vpop.xlane.xlu0 %4152
        %v4154 = vsel %vm1388, %v3809, -inf
        %4155 = vmax.xlane.f32.xlu0 %v4154
        %v4156 = vpop.xlane.xlu0 %4155
        %v4157 = vsel %vm1388, %v3814, -inf
        %4158 = vmax.xlane.f32.xlu0 %v4157
        %v4159 = vpop.xlane.xlu0 %4158
        %v4160 = vsel %vm1388, %v3817, -inf
        %4161 = vmax.xlane.f32.xlu0 %v4160
        %v4162 = vpop.xlane.xlu0 %4161
        %v4163 = vsel %vm1388, %v3822, -inf
        %4164 = vmax.xlane.f32.xlu0 %v4163
        %v4165 = vpop.xlane.xlu0 %4164
        %v4166 = vsel %vm1388, %v3825, -inf
        %4167 = vmax.xlane.f32.xlu0 %v4166
        %v4168 = vpop.xlane.xlu0 %4167
        %v4169 = vsel %vm1388, %v3830, -inf
        %4170 = vmax.xlane.f32.xlu0 %v4169
        %v4171 = vpop.xlane.xlu0 %4170
        %v4172 = vsel %vm1388, %v3833, -inf
        %4173 = vmax.xlane.f32.xlu0 %v4172
        %v4174 = vpop.xlane.xlu0 %4173
        %v4175 = vsel %vm1388, %v3911, -inf
        %4176 = vmax.xlane.f32.xlu0 %v4175
        %v4177 = vpop.xlane.xlu0 %4176
        %v4178 = vsel %vm1388, %v3914, -inf
        %4179 = vmax.xlane.f32.xlu0 %v4178
        %v4180 = vpop.xlane.xlu0 %4179
        %v4181 = vsel %vm1388, %v3919, -inf
        %4182 = vmax.xlane.f32.xlu0 %v4181
        %v4183 = vpop.xlane.xlu0 %4182
        %v4184 = vsel %vm1388, %v3922, -inf
        %4185 = vmax.xlane.f32.xlu0 %v4184
        %v4186 = vpop.xlane.xlu0 %4185
        %v4187 = vsel %vm1388, %v3927, -inf
        %4188 = vmax.xlane.f32.xlu0 %v4187
        %v4189 = vpop.xlane.xlu0 %4188
        %v4190 = vsel %vm1388, %v3930, -inf
        %4191 = vmax.xlane.f32.xlu0 %v4190
        %v4192 = vpop.xlane.xlu0 %4191
        %v4193 = vsel %vm1388, %v3935, -inf
        %4194 = vmax.xlane.f32.xlu0 %v4193
        %v4195 = vpop.xlane.xlu0 %4194
        %v4196 = vsel %vm1388, %v3938, -inf
        %4197 = vmax.xlane.f32.xlu0 %v4196
        %v4198 = vpop.xlane.xlu0 %4197
        %v4199 = vsel %vm1388, %v4016, -inf
        %4200 = vmax.xlane.f32.xlu0 %v4199
        %v4201 = vpop.xlane.xlu0 %4200
        %v4202 = vsel %vm1388, %v4019, -inf
        %4203 = vmax.xlane.f32.xlu0 %v4202
        %v4204 = vpop.xlane.xlu0 %4203
        %v4205 = vsel %vm1388, %v4024, -inf
        %4206 = vmax.xlane.f32.xlu0 %v4205
        %v4207 = vpop.xlane.xlu0 %4206
        %v4208 = vsel %vm1388, %v4027, -inf
        %4209 = vmax.xlane.f32.xlu0 %v4208
        %v4210 = vpop.xlane.xlu0 %4209
        %v4211 = vsel %vm1388, %v4032, -inf
        %4212 = vmax.xlane.f32.xlu0 %v4211
        %v4213 = vpop.xlane.xlu0 %4212
        %v4214 = vsel %vm1388, %v4035, -inf
        %4215 = vmax.xlane.f32.xlu0 %v4214
        %v4216 = vpop.xlane.xlu0 %4215
        %v4217 = vsel %vm1388, %v4040, -inf
        %4218 = vmax.xlane.f32.xlu0 %v4217
        %v4219 = vpop.xlane.xlu0 %4218
        %v4220 = vsel %vm1388, %v4043, -inf
        %4221 = vmax.xlane.f32.xlu0 %v4220
        %v4222 = vpop.xlane.xlu0 %4221
        %v4223 = vsel %vm1388, %v4121, -inf
        %4224 = vmax.xlane.f32.xlu0 %v4223
        %v4225 = vpop.xlane.xlu0 %4224
        %v4226 = vsel %vm1388, %v4124, -inf
        %4227 = vmax.xlane.f32.xlu0 %v4226
        %v4228 = vpop.xlane.xlu0 %4227
        %v4229 = vsel %vm1388, %v4129, -inf
        %4230 = vmax.xlane.f32.xlu0 %v4229
        %v4231 = vpop.xlane.xlu0 %4230
        %v4232 = vsel %vm1388, %v4132, -inf
        %4233 = vmax.xlane.f32.xlu0 %v4232
        %v4234 = vpop.xlane.xlu0 %4233
        %v4235 = vsel %vm1388, %v4137, -inf
        %4236 = vmax.xlane.f32.xlu0 %v4235
        %v4237 = vpop.xlane.xlu0 %4236
        %v4238 = vsel %vm1388, %v4140, -inf
        %4239 = vmax.xlane.f32.xlu0 %v4238
        %v4240 = vpop.xlane.xlu0 %4239
        %v4241 = vsel %vm1388, %v4145, -inf
        %4242 = vmax.xlane.f32.xlu0 %v4241
        %v4243 = vpop.xlane.xlu0 %4242
        %v4244 = vsel %vm1388, %v4148, -inf
        %4245 = vmax.xlane.f32.xlu0 %v4244
        %v4246 = vpop.xlane.xlu0 %4245
        %v4247 = vsub.f32 %v3806, %v4153
        %v4248 = vsub.f32 %v3809, %v4156
        %v4249 = vsub.f32 %v3814, %v4159
        %v4250 = vsub.f32 %v3817, %v4162
        %v4251 = vsub.f32 %v3822, %v4165
        %v4252 = vsub.f32 %v3825, %v4168
        %v4253 = vsub.f32 %v3830, %v4171
        %v4254 = vsub.f32 %v3833, %v4174
        %v4255 = vsub.f32 %v3911, %v4177
        %v4256 = vsub.f32 %v3914, %v4180
        %v4257 = vsub.f32 %v3919, %v4183
        %v4258 = vsub.f32 %v3922, %v4186
        %v4259 = vsub.f32 %v3927, %v4189
        %v4260 = vsub.f32 %v3930, %v4192
        %v4261 = vsub.f32 %v3935, %v4195
        %v4262 = vsub.f32 %v3938, %v4198
        %v4263 = vsub.f32 %v4016, %v4201
        %v4264 = vsub.f32 %v4019, %v4204
        %v4265 = vsub.f32 %v4024, %v4207
        %v4266 = vsub.f32 %v4027, %v4210
        %v4267 = vsub.f32 %v4032, %v4213
        %v4268 = vsub.f32 %v4035, %v4216
        %v4269 = vsub.f32 %v4040, %v4219
        %v4270 = vsub.f32 %v4043, %v4222
        %v4271 = vsub.f32 %v4121, %v4225
        %v4272 = vsub.f32 %v4124, %v4228
        %v4273 = vsub.f32 %v4129, %v4231
        %v4274 = vsub.f32 %v4132, %v4234
        %v4275 = vsub.f32 %v4137, %v4237
        %v4276 = vsub.f32 %v4140, %v4240
        %v4277 = vsub.f32 %v4145, %v4243
        %v4278 = vsub.f32 %v4148, %v4246
        %v4279 = vmul.f32 %v4247, 1.442695
        %v4280 = vpow.pop %v4279
        %v4281 = vmul.f32 %v4248, 1.442695
        %v4282 = vpow.pop %v4281
        %v4283 = vmul.f32 %v4249, 1.442695
        %v4284 = vpow.pop %v4283
        %v4285 = vmul.f32 %v4250, 1.442695
        %v4286 = vpow.pop %v4285
        %v4287 = vmul.f32 %v4251, 1.442695
        %v4288 = vpow.pop %v4287
        %v4289 = vmul.f32 %v4252, 1.442695
        %v4290 = vpow.pop %v4289
        %v4291 = vmul.f32 %v4253, 1.442695
        %v4292 = vpow.pop %v4291
        %v4293 = vmul.f32 %v4254, 1.442695
        %v4294 = vpow.pop %v4293
        %v4295 = vmul.f32 %v4255, 1.442695
        %v4296 = vpow.pop %v4295
        %v4297 = vmul.f32 %v4256, 1.442695
        %v4298 = vpow.pop %v4297
        %v4299 = vmul.f32 %v4257, 1.442695
        %v4300 = vpow.pop %v4299
        %v4301 = vmul.f32 %v4258, 1.442695
        %v4302 = vpow.pop %v4301
        %v4303 = vmul.f32 %v4259, 1.442695
        %v4304 = vpow.pop %v4303
        %v4305 = vmul.f32 %v4260, 1.442695
        %v4306 = vpow.pop %v4305
        %v4307 = vmul.f32 %v4261, 1.442695
        %v4308 = vpow.pop %v4307
        %v4309 = vmul.f32 %v4262, 1.442695
        %v4310 = vpow.pop %v4309
        %v4311 = vmul.f32 %v4263, 1.442695
        %v4312 = vpow.pop %v4311
        %v4313 = vmul.f32 %v4264, 1.442695
        %v4314 = vpow.pop %v4313
        %v4315 = vmul.f32 %v4265, 1.442695
        %v4316 = vpow.pop %v4315
        %v4317 = vmul.f32 %v4266, 1.442695
        %v4318 = vpow.pop %v4317
        %v4319 = vmul.f32 %v4267, 1.442695
        %v4320 = vpow.pop %v4319
        %v4321 = vmul.f32 %v4268, 1.442695
        %v4322 = vpow.pop %v4321
        %v4323 = vmul.f32 %v4269, 1.442695
        %v4324 = vpow.pop %v4323
        %v4325 = vmul.f32 %v4270, 1.442695
        %v4326 = vpow.pop %v4325
        %v4327 = vmul.f32 %v4271, 1.442695
        %v4328 = vpow.pop %v4327
        %v4329 = vmul.f32 %v4272, 1.442695
        %v4330 = vpow.pop %v4329
        %v4331 = vmul.f32 %v4273, 1.442695
        %v4332 = vpow.pop %v4331
        %v4333 = vmul.f32 %v4274, 1.442695
        %v4334 = vpow.pop %v4333
        %v4335 = vmul.f32 %v4275, 1.442695
        %v4336 = vpow.pop %v4335
        %v4337 = vmul.f32 %v4276, 1.442695
        %v4338 = vpow.pop %v4337
        %v4339 = vmul.f32 %v4277, 1.442695
        %v4340 = vpow.pop %v4339
        %v4341 = vmul.f32 %v4278, 1.442695
        %v4342 = vpow.pop %v4341
        %v4343 = vsel %vm1388, %v4280, 0.0
        %4344 = vadd.xlane.f32.xlu0 %v4343
        %v4345 = vpop.xlane.xlu0 %4344
        %v4346 = vsel %vm1388, %v4282, 0.0
        %4347 = vadd.xlane.f32.xlu0 %v4346
        %v4348 = vpop.xlane.xlu0 %4347
        %v4349 = vsel %vm1388, %v4284, 0.0
        %4350 = vadd.xlane.f32.xlu0 %v4349
        %v4351 = vpop.xlane.xlu0 %4350
        %v4352 = vsel %vm1388, %v4286, 0.0
        %4353 = vadd.xlane.f32.xlu0 %v4352
        %v4354 = vpop.xlane.xlu0 %4353
        %v4355 = vsel %vm1388, %v4288, 0.0
        %4356 = vadd.xlane.f32.xlu0 %v4355
        %v4357 = vpop.xlane.xlu0 %4356
        %v4358 = vsel %vm1388, %v4290, 0.0
        %4359 = vadd.xlane.f32.xlu0 %v4358
        %v4360 = vpop.xlane.xlu0 %4359
        %v4361 = vsel %vm1388, %v4292, 0.0
        %4362 = vadd.xlane.f32.xlu0 %v4361
        %v4363 = vpop.xlane.xlu0 %4362
        %v4364 = vsel %vm1388, %v4294, 0.0
        %4365 = vadd.xlane.f32.xlu0 %v4364
        %v4366 = vpop.xlane.xlu0 %4365
        %v4367 = vsel %vm1388, %v4296, 0.0
        %4368 = vadd.xlane.f32.xlu0 %v4367
        %v4369 = vpop.xlane.xlu0 %4368
        %v4370 = vsel %vm1388, %v4298, 0.0
        %4371 = vadd.xlane.f32.xlu0 %v4370
        %v4372 = vpop.xlane.xlu0 %4371
        %v4373 = vsel %vm1388, %v4300, 0.0
        %4374 = vadd.xlane.f32.xlu0 %v4373
        %v4375 = vpop.xlane.xlu0 %4374
        %v4376 = vsel %vm1388, %v4302, 0.0
        %4377 = vadd.xlane.f32.xlu0 %v4376
        %v4378 = vpop.xlane.xlu0 %4377
        %v4379 = vsel %vm1388, %v4304, 0.0
        %4380 = vadd.xlane.f32.xlu0 %v4379
        %v4381 = vpop.xlane.xlu0 %4380
        %v4382 = vsel %vm1388, %v4306, 0.0
        %4383 = vadd.xlane.f32.xlu0 %v4382
        %v4384 = vpop.xlane.xlu0 %4383
        %v4385 = vsel %vm1388, %v4308, 0.0
        %4386 = vadd.xlane.f32.xlu0 %v4385
        %v4387 = vpop.xlane.xlu0 %4386
        %v4388 = vsel %vm1388, %v4310, 0.0
        %4389 = vadd.xlane.f32.xlu0 %v4388
        %v4390 = vpop.xlane.xlu0 %4389
        %v4391 = vsel %vm1388, %v4312, 0.0
        %4392 = vadd.xlane.f32.xlu0 %v4391
        %v4393 = vpop.xlane.xlu0 %4392
        %v4394 = vsel %vm1388, %v4314, 0.0
        %4395 = vadd.xlane.f32.xlu0 %v4394
        %v4396 = vpop.xlane.xlu0 %4395
        %v4397 = vsel %vm1388, %v4316, 0.0
        %4398 = vadd.xlane.f32.xlu0 %v4397
        %v4399 = vpop.xlane.xlu0 %4398
        %v4400 = vsel %vm1388, %v4318, 0.0
        %4401 = vadd.xlane.f32.xlu0 %v4400
        %v4402 = vpop.xlane.xlu0 %4401
        %v4403 = vsel %vm1388, %v4320, 0.0
        %4404 = vadd.xlane.f32.xlu0 %v4403
        %v4405 = vpop.xlane.xlu0 %4404
        %v4406 = vsel %vm1388, %v4322, 0.0
        %4407 = vadd.xlane.f32.xlu0 %v4406
        %v4408 = vpop.xlane.xlu0 %4407
        %v4409 = vsel %vm1388, %v4324, 0.0
        %4410 = vadd.xlane.f32.xlu0 %v4409
        %v4411 = vpop.xlane.xlu0 %4410
        %v4412 = vsel %vm1388, %v4326, 0.0
        %4413 = vadd.xlane.f32.xlu0 %v4412
        %v4414 = vpop.xlane.xlu0 %4413
        %v4415 = vsel %vm1388, %v4328, 0.0
        %4416 = vadd.xlane.f32.xlu0 %v4415
        %v4417 = vpop.xlane.xlu0 %4416
        %v4418 = vsel %vm1388, %v4330, 0.0
        %4419 = vadd.xlane.f32.xlu0 %v4418
        %v4420 = vpop.xlane.xlu0 %4419
        %v4421 = vsel %vm1388, %v4332, 0.0
        %4422 = vadd.xlane.f32.xlu0 %v4421
        %v4423 = vpop.xlane.xlu0 %4422
        %v4424 = vsel %vm1388, %v4334, 0.0
        %4425 = vadd.xlane.f32.xlu0 %v4424
        %v4426 = vpop.xlane.xlu0 %4425
        %v4427 = vsel %vm1388, %v4336, 0.0
        %4428 = vadd.xlane.f32.xlu0 %v4427
        %v4429 = vpop.xlane.xlu0 %4428
        %v4430 = vsel %vm1388, %v4338, 0.0
        %4431 = vadd.xlane.f32.xlu0 %v4430
        %v4432 = vpop.xlane.xlu0 %4431
        %v4433 = vsel %vm1388, %v4340, 0.0
        %4434 = vadd.xlane.f32.xlu0 %v4433
        %v4435 = vpop.xlane.xlu0 %4434
        %v4436 = vsel %vm1388, %v4342, 0.0
        %4437 = vadd.xlane.f32.xlu0 %v4436
        %v4438 = vpop.xlane.xlu0 %4437
        %v4439 = vrcp.pop %v4345
        %v4440 = vmul.f32 %v4280, %v4439
        %v4441 = vrcp.pop %v4348
        %v4442 = vmul.f32 %v4282, %v4441
        %v4443 = vrcp.pop %v4351
        %v4444 = vmul.f32 %v4284, %v4443
        %v4445 = vrcp.pop %v4354
        %v4446 = vmul.f32 %v4286, %v4445
        %v4447 = vrcp.pop %v4357
        %v4448 = vmul.f32 %v4288, %v4447
        %v4449 = vrcp.pop %v4360
        %v4450 = vmul.f32 %v4290, %v4449
        %v4451 = vrcp.pop %v4363
        %v4452 = vmul.f32 %v4292, %v4451
        %v4453 = vrcp.pop %v4366
        %v4454 = vmul.f32 %v4294, %v4453
        %v4455 = vrcp.pop %v4369
        %v4456 = vmul.f32 %v4296, %v4455
        %v4457 = vrcp.pop %v4372
        %v4458 = vmul.f32 %v4298, %v4457
        %v4459 = vrcp.pop %v4375
        %v4460 = vmul.f32 %v4300, %v4459
        %v4461 = vrcp.pop %v4378
        %v4462 = vmul.f32 %v4302, %v4461
        %v4463 = vrcp.pop %v4381
        %v4464 = vmul.f32 %v4304, %v4463
        %v4465 = vrcp.pop %v4384
        %v4466 = vmul.f32 %v4306, %v4465
        %v4467 = vrcp.pop %v4387
        %v4468 = vmul.f32 %v4308, %v4467
        %v4469 = vrcp.pop %v4390
        %v4470 = vmul.f32 %v4310, %v4469
        %v4471 = vrcp.pop %v4393
        %v4472 = vmul.f32 %v4312, %v4471
        %v4473 = vrcp.pop %v4396
        %v4474 = vmul.f32 %v4314, %v4473
        %v4475 = vrcp.pop %v4399
        %v4476 = vmul.f32 %v4316, %v4475
        %v4477 = vrcp.pop %v4402
        %v4478 = vmul.f32 %v4318, %v4477
        %v4479 = vrcp.pop %v4405
        %v4480 = vmul.f32 %v4320, %v4479
        %v4481 = vrcp.pop %v4408
        %v4482 = vmul.f32 %v4322, %v4481
        %v4483 = vrcp.pop %v4411
        %v4484 = vmul.f32 %v4324, %v4483
        %v4485 = vrcp.pop %v4414
        %v4486 = vmul.f32 %v4326, %v4485
        %v4487 = vrcp.pop %v4417
        %v4488 = vmul.f32 %v4328, %v4487
        %v4489 = vrcp.pop %v4420
        %v4490 = vmul.f32 %v4330, %v4489
        %v4491 = vrcp.pop %v4423
        %v4492 = vmul.f32 %v4332, %v4491
        %v4493 = vrcp.pop %v4426
        %v4494 = vmul.f32 %v4334, %v4493
        %v4495 = vrcp.pop %v4429
        %v4496 = vmul.f32 %v4336, %v4495
        %v4497 = vrcp.pop %v4432
        %v4498 = vmul.f32 %v4338, %v4497
        %v4499 = vrcp.pop %v4435
        %v4500 = vmul.f32 %v4340, %v4499
        %v4501 = vrcp.pop %v4438
        %v4502 = vmul.f32 %v4342, %v4501
        %v4503 = vpack.c.bf16 %v4442, %v4440
        %v4504 = vpack.c.bf16 %v4446, %v4444
        %v4505 = vpack.c.bf16 %v4450, %v4448
        %v4506 = vpack.c.bf16 %v4454, %v4452
        %v4507 = vpack.c.bf16 %v4458, %v4456
        %v4508 = vpack.c.bf16 %v4462, %v4460
        %v4509 = vpack.c.bf16 %v4466, %v4464
        %v4510 = vpack.c.bf16 %v4470, %v4468
        %v4511 = vpack.c.bf16 %v4474, %v4472
        %v4512 = vpack.c.bf16 %v4478, %v4476
        %v4513 = vpack.c.bf16 %v4482, %v4480
        %v4514 = vpack.c.bf16 %v4486, %v4484
        %v4515 = vpack.c.bf16 %v4490, %v4488
        %v4516 = vpack.c.bf16 %v4494, %v4492
        %v4517 = vpack.c.bf16 %v4498, %v4496
        %v4518 = vpack.c.bf16 %v4502, %v4500
        %4519 = vrot.lane.b32.xlu0 %v1015, 64
        %v4520 = vpop.permute.xlu0 %4519
        %4521 = vrot.lane.b32.xlu0 %v1016, 64
        %v4522 = vpop.permute.xlu0 %4521
        %4523 = vrot.lane.b32.xlu0 %v1017, 64
        %v4524 = vpop.permute.xlu0 %4523
        %4525 = vrot.lane.b32.xlu0 %v1018, 64
        %v4526 = vpop.permute.xlu0 %4525
        %v4532 = vsel %vm1388, %v4503, 0
        %v4535 = vsel %vm1388, %v4504, 0
        %v4538 = vsel %vm1388, %v4505, 0
        %v4541 = vsel %vm1388, %v4506, 0
        %4543 = vmatprep.subr.bf16.mxu0 0
        %4544 = vmatpush1.bf16.msra.mxu0 0
        %4545 = vmatprep.subr.bf16.mxu0 0
        %4546 = vmatpush1.bf16.msra.mxu0 0
        %4547 = vmatprep.subr.bf16.mxu0 0
        %4548 = vmatpush1.bf16.msra.mxu0 0
        %4549 = vmatprep.subr.bf16.mxu0 0
        %4550 = vmatpush1.bf16.msra.mxu0 0
        %4551 = vmatprep.subr.bf16.mxu0 0
        %4552 = vmatpush1.bf16.msra.mxu0 %v4526
        %4553 = vmatprep.subr.bf16.mxu0 0
        %4554 = vmatpush1.bf16.msra.mxu0 %v4524
        %4555 = vmatprep.subr.bf16.mxu0 0
        %4556 = vmatpush1.bf16.msra.mxu0 %v4522
        %4557 = vmatprep.subr.bf16.mxu0 0
        %4558 = vmatpush1.bf16.msra.mxu0 %v4520
        %4559 = vmatprep.subr.bf16.mxu0 0
        %4560 = vmatpush2.bf16.msra.mxu0 0
        %4561 = vmatprep.subr.bf16.mxu0 0
        %4562 = vmatpush2.bf16.msra.mxu0 0
        %4563 = vmatprep.subr.bf16.mxu0 0
        %4564 = vmatpush2.bf16.msra.mxu0 0
        %4565 = vmatprep.subr.bf16.mxu0 0
        %4566 = vmatpush2.bf16.msra.mxu0 0
        %4567 = vmatprep.subr.bf16.mxu0 0
        %4568 = vmatpush2.bf16.msra.mxu0 0
        %4569 = vmatprep.subr.bf16.mxu0 0
        %4570 = vmatpush2.bf16.msra.mxu0 0
        %4571 = vmatprep.subr.bf16.mxu0 0
        %4572 = vmatpush2.bf16.msra.mxu0 0
        %4573 = vmatprep.subr.bf16.mxu0 0
        %4574 = vmatpush2.bf16.msra.mxu0 0
        %4575 = vmatprep.mubr.bf16.mxu0 0
        %4576 = vmatmul.mubr.bf16.gmra.mxu0 %v4532
        %v4577 = vpop.f32.mrf.mxu0
        %v4578 = vadd.f32 0.0, %v4577
        %v4579 = vpop.f32.mrf.mxu0
        %v4580 = vpop.f32.mrf.mxu0
        %v4581 = vadd.f32 0.0, %v4580
        %v4582 = vpop.f32.mrf.mxu0
        %4583 = vmatprep.mubr.bf16.mxu0 0
        %4584 = vmatmul.mubr.bf16.gmra.mxu0 %v4535
        %v4585 = vpop.f32.mrf.mxu0
        %v4586 = vadd.f32 0.0, %v4585
        %v4587 = vpop.f32.mrf.mxu0
        %v4588 = vpop.f32.mrf.mxu0
        %v4589 = vadd.f32 0.0, %v4588
        %v4590 = vpop.f32.mrf.mxu0
        %4591 = vmatprep.mubr.bf16.mxu0 0
        %4592 = vmatmul.mubr.bf16.gmra.mxu0 %v4538
        %v4593 = vpop.f32.mrf.mxu0
        %v4594 = vadd.f32 0.0, %v4593
        %v4595 = vpop.f32.mrf.mxu0
        %v4596 = vpop.f32.mrf.mxu0
        %v4597 = vadd.f32 0.0, %v4596
        %v4598 = vpop.f32.mrf.mxu0
        %4599 = vmatprep.mubr.bf16.mxu0 0
        %4600 = vmatmul.mubr.bf16.gmra.mxu0 %v4541
        %v4601 = vpop.f32.mrf.mxu0
        %v4602 = vadd.f32 0.0, %v4601
        %v4603 = vpop.f32.mrf.mxu0
        %v4604 = vpop.f32.mrf.mxu0
        %v4605 = vadd.f32 0.0, %v4604
        %v4606 = vpop.f32.mrf.mxu0
        %4607 = vdwg.mxu0
        %4608 = vrot.lane.b32.xlu0 %v1019, 64
        %v4609 = vpop.permute.xlu0 %4608
        %4610 = vrot.lane.b32.xlu0 %v1020, 64
        %v4611 = vpop.permute.xlu0 %4610
        %4612 = vrot.lane.b32.xlu0 %v1021, 64
        %v4613 = vpop.permute.xlu0 %4612
        %4614 = vrot.lane.b32.xlu0 %v1022, 64
        %v4615 = vpop.permute.xlu0 %4614
        %v4621 = vsel %vm1388, %v4507, 0
        %v4624 = vsel %vm1388, %v4508, 0
        %v4627 = vsel %vm1388, %v4509, 0
        %v4630 = vsel %vm1388, %v4510, 0
        %4632 = vmatprep.subr.bf16.mxu0 0
        %4633 = vmatpush1.bf16.msra.mxu0 0
        %4634 = vmatprep.subr.bf16.mxu0 0
        %4635 = vmatpush1.bf16.msra.mxu0 0
        %4636 = vmatprep.subr.bf16.mxu0 0
        %4637 = vmatpush1.bf16.msra.mxu0 0
        %4638 = vmatprep.subr.bf16.mxu0 0
        %4639 = vmatpush1.bf16.msra.mxu0 0
        %4640 = vmatprep.subr.bf16.mxu0 0
        %4641 = vmatpush1.bf16.msra.mxu0 %v4615
        %4642 = vmatprep.subr.bf16.mxu0 0
        %4643 = vmatpush1.bf16.msra.mxu0 %v4613
        %4644 = vmatprep.subr.bf16.mxu0 0
        %4645 = vmatpush1.bf16.msra.mxu0 %v4611
        %4646 = vmatprep.subr.bf16.mxu0 0
        %4647 = vmatpush1.bf16.msra.mxu0 %v4609
        %4648 = vmatprep.subr.bf16.mxu0 0
        %4649 = vmatpush2.bf16.msra.mxu0 0
        %4650 = vmatprep.subr.bf16.mxu0 0
        %4651 = vmatpush2.bf16.msra.mxu0 0
        %4652 = vmatprep.subr.bf16.mxu0 0
        %4653 = vmatpush2.bf16.msra.mxu0 0
        %4654 = vmatprep.subr.bf16.mxu0 0
        %4655 = vmatpush2.bf16.msra.mxu0 0
        %4656 = vmatprep.subr.bf16.mxu0 0
        %4657 = vmatpush2.bf16.msra.mxu0 0
        %4658 = vmatprep.subr.bf16.mxu0 0
        %4659 = vmatpush2.bf16.msra.mxu0 0
        %4660 = vmatprep.subr.bf16.mxu0 0
        %4661 = vmatpush2.bf16.msra.mxu0 0
        %4662 = vmatprep.subr.bf16.mxu0 0
        %4663 = vmatpush2.bf16.msra.mxu0 0
        %4664 = vmatprep.mubr.bf16.mxu0 0
        %4665 = vmatmul.mubr.bf16.gmra.mxu0 %v4621
        %v4666 = vpop.f32.mrf.mxu0
        %v4667 = vadd.f32 0.0, %v4666
        %v4668 = vpop.f32.mrf.mxu0
        %v4669 = vpop.f32.mrf.mxu0
        %v4670 = vadd.f32 0.0, %v4669
        %v4671 = vpop.f32.mrf.mxu0
        %4672 = vmatprep.mubr.bf16.mxu0 0
        %4673 = vmatmul.mubr.bf16.gmra.mxu0 %v4624
        %v4674 = vpop.f32.mrf.mxu0
        %v4675 = vadd.f32 0.0, %v4674
        %v4676 = vpop.f32.mrf.mxu0
        %v4677 = vpop.f32.mrf.mxu0
        %v4678 = vadd.f32 0.0, %v4677
        %v4679 = vpop.f32.mrf.mxu0
        %4680 = vmatprep.mubr.bf16.mxu0 0
        %4681 = vmatmul.mubr.bf16.gmra.mxu0 %v4627
        %v4682 = vpop.f32.mrf.mxu0
        %v4683 = vadd.f32 0.0, %v4682
        %v4684 = vpop.f32.mrf.mxu0
        %v4685 = vpop.f32.mrf.mxu0
        %v4686 = vadd.f32 0.0, %v4685
        %v4687 = vpop.f32.mrf.mxu0
        %4688 = vmatprep.mubr.bf16.mxu0 0
        %4689 = vmatmul.mubr.bf16.gmra.mxu0 %v4630
        %v4690 = vpop.f32.mrf.mxu0
        %v4691 = vadd.f32 0.0, %v4690
        %v4692 = vpop.f32.mrf.mxu0
        %v4693 = vpop.f32.mrf.mxu0
        %v4694 = vadd.f32 0.0, %v4693
        %v4695 = vpop.f32.mrf.mxu0
        %4696 = vdwg.mxu0
        %4697 = vrot.lane.b32.xlu0 %v1023, 64
        %v4698 = vpop.permute.xlu0 %4697
        %4699 = vrot.lane.b32.xlu0 %v1024, 64
        %v4700 = vpop.permute.xlu0 %4699
        %4701 = vrot.lane.b32.xlu0 %v1025, 64
        %v4702 = vpop.permute.xlu0 %4701
        %4703 = vrot.lane.b32.xlu0 %v1026, 64
        %v4704 = vpop.permute.xlu0 %4703
        %v4710 = vsel %vm1388, %v4511, 0
        %v4713 = vsel %vm1388, %v4512, 0
        %v4716 = vsel %vm1388, %v4513, 0
        %v4719 = vsel %vm1388, %v4514, 0
        %4721 = vmatprep.subr.bf16.mxu0 0
        %4722 = vmatpush1.bf16.msra.mxu0 0
        %4723 = vmatprep.subr.bf16.mxu0 0
        %4724 = vmatpush1.bf16.msra.mxu0 0
        %4725 = vmatprep.subr.bf16.mxu0 0
        %4726 = vmatpush1.bf16.msra.mxu0 0
        %4727 = vmatprep.subr.bf16.mxu0 0
        %4728 = vmatpush1.bf16.msra.mxu0 0
        %4729 = vmatprep.subr.bf16.mxu0 0
        %4730 = vmatpush1.bf16.msra.mxu0 %v4704
        %4731 = vmatprep.subr.bf16.mxu0 0
        %4732 = vmatpush1.bf16.msra.mxu0 %v4702
        %4733 = vmatprep.subr.bf16.mxu0 0
        %4734 = vmatpush1.bf16.msra.mxu0 %v4700
        %4735 = vmatprep.subr.bf16.mxu0 0
        %4736 = vmatpush1.bf16.msra.mxu0 %v4698
        %4737 = vmatprep.subr.bf16.mxu0 0
        %4738 = vmatpush2.bf16.msra.mxu0 0
        %4739 = vmatprep.subr.bf16.mxu0 0
        %4740 = vmatpush2.bf16.msra.mxu0 0
        %4741 = vmatprep.subr.bf16.mxu0 0
        %4742 = vmatpush2.bf16.msra.mxu0 0
        %4743 = vmatprep.subr.bf16.mxu0 0
        %4744 = vmatpush2.bf16.msra.mxu0 0
        %4745 = vmatprep.subr.bf16.mxu0 0
        %4746 = vmatpush2.bf16.msra.mxu0 0
        %4747 = vmatprep.subr.bf16.mxu0 0
        %4748 = vmatpush2.bf16.msra.mxu0 0
        %4749 = vmatprep.subr.bf16.mxu0 0
        %4750 = vmatpush2.bf16.msra.mxu0 0
        %4751 = vmatprep.subr.bf16.mxu0 0
        %4752 = vmatpush2.bf16.msra.mxu0 0
        %4753 = vmatprep.mubr.bf16.mxu0 0
        %4754 = vmatmul.mubr.bf16.gmra.mxu0 %v4710
        %v4755 = vpop.f32.mrf.mxu0
        %v4756 = vadd.f32 0.0, %v4755
        %v4757 = vpop.f32.mrf.mxu0
        %v4758 = vpop.f32.mrf.mxu0
        %v4759 = vadd.f32 0.0, %v4758
        %v4760 = vpop.f32.mrf.mxu0
        %4761 = vmatprep.mubr.bf16.mxu0 0
        %4762 = vmatmul.mubr.bf16.gmra.mxu0 %v4713
        %v4763 = vpop.f32.mrf.mxu0
        %v4764 = vadd.f32 0.0, %v4763
        %v4765 = vpop.f32.mrf.mxu0
        %v4766 = vpop.f32.mrf.mxu0
        %v4767 = vadd.f32 0.0, %v4766
        %v4768 = vpop.f32.mrf.mxu0
        %4769 = vmatprep.mubr.bf16.mxu0 0
        %4770 = vmatmul.mubr.bf16.gmra.mxu0 %v4716
        %v4771 = vpop.f32.mrf.mxu0
        %v4772 = vadd.f32 0.0, %v4771
        %v4773 = vpop.f32.mrf.mxu0
        %v4774 = vpop.f32.mrf.mxu0
        %v4775 = vadd.f32 0.0, %v4774
        %v4776 = vpop.f32.mrf.mxu0
        %4777 = vmatprep.mubr.bf16.mxu0 0
        %4778 = vmatmul.mubr.bf16.gmra.mxu0 %v4719
        %v4779 = vpop.f32.mrf.mxu0
        %v4780 = vadd.f32 0.0, %v4779
        %v4781 = vpop.f32.mrf.mxu0
        %v4782 = vpop.f32.mrf.mxu0
        %v4783 = vadd.f32 0.0, %v4782
        %v4784 = vpop.f32.mrf.mxu0
        %4785 = vdwg.mxu0
        %4786 = vrot.lane.b32.xlu0 %v1027, 64
        %v4787 = vpop.permute.xlu0 %4786
        %4788 = vrot.lane.b32.xlu0 %v1028, 64
        %v4789 = vpop.permute.xlu0 %4788
        %4790 = vrot.lane.b32.xlu0 %v1029, 64
        %v4791 = vpop.permute.xlu0 %4790
        %4792 = vrot.lane.b32.xlu0 %v1030, 64
        %v4793 = vpop.permute.xlu0 %4792
        %v4799 = vsel %vm1388, %v4515, 0
        %v4802 = vsel %vm1388, %v4516, 0
        %v4805 = vsel %vm1388, %v4517, 0
        %v4808 = vsel %vm1388, %v4518, 0
        %4810 = vmatprep.subr.bf16.mxu0 0
        %4811 = vmatpush1.bf16.msra.mxu0 0
        %4812 = vmatprep.subr.bf16.mxu0 0
        %4813 = vmatpush1.bf16.msra.mxu0 0
        %4814 = vmatprep.subr.bf16.mxu0 0
        %4815 = vmatpush1.bf16.msra.mxu0 0
        %4816 = vmatprep.subr.bf16.mxu0 0
        %4817 = vmatpush1.bf16.msra.mxu0 0
        %4818 = vmatprep.subr.bf16.mxu0 0
        %4819 = vmatpush1.bf16.msra.mxu0 %v4793
        %4820 = vmatprep.subr.bf16.mxu0 0
        %4821 = vmatpush1.bf16.msra.mxu0 %v4791
        %4822 = vmatprep.subr.bf16.mxu0 0
        %4823 = vmatpush1.bf16.msra.mxu0 %v4789
        %4824 = vmatprep.subr.bf16.mxu0 0
        %4825 = vmatpush1.bf16.msra.mxu0 %v4787
        %4826 = vmatprep.subr.bf16.mxu0 0
        %4827 = vmatpush2.bf16.msra.mxu0 0
        %4828 = vmatprep.subr.bf16.mxu0 0
        %4829 = vmatpush2.bf16.msra.mxu0 0
        %4830 = vmatprep.subr.bf16.mxu0 0
        %4831 = vmatpush2.bf16.msra.mxu0 0
        %4832 = vmatprep.subr.bf16.mxu0 0
        %4833 = vmatpush2.bf16.msra.mxu0 0
        %4834 = vmatprep.subr.bf16.mxu0 0
        %4835 = vmatpush2.bf16.msra.mxu0 0
        %4836 = vmatprep.subr.bf16.mxu0 0
        %4837 = vmatpush2.bf16.msra.mxu0 0
        %4838 = vmatprep.subr.bf16.mxu0 0
        %4839 = vmatpush2.bf16.msra.mxu0 0
        %4840 = vmatprep.subr.bf16.mxu0 0
        %4841 = vmatpush2.bf16.msra.mxu0 0
        %4842 = vmatprep.mubr.bf16.mxu0 0
        %4843 = vmatmul.mubr.bf16.gmra.mxu0 %v4799
        %v4844 = vpop.f32.mrf.mxu0
        %v4845 = vadd.f32 0.0, %v4844
        %v4846 = vpop.f32.mrf.mxu0
        %v4847 = vpop.f32.mrf.mxu0
        %v4848 = vadd.f32 0.0, %v4847
        %v4849 = vpop.f32.mrf.mxu0
        %4850 = vmatprep.mubr.bf16.mxu0 0
        %4851 = vmatmul.mubr.bf16.gmra.mxu0 %v4802
        %v4852 = vpop.f32.mrf.mxu0
        %v4853 = vadd.f32 0.0, %v4852
        %v4854 = vpop.f32.mrf.mxu0
        %v4855 = vpop.f32.mrf.mxu0
        %v4856 = vadd.f32 0.0, %v4855
        %v4857 = vpop.f32.mrf.mxu0
        %4858 = vmatprep.mubr.bf16.mxu0 0
        %4859 = vmatmul.mubr.bf16.gmra.mxu0 %v4805
        %v4860 = vpop.f32.mrf.mxu0
        %v4861 = vadd.f32 0.0, %v4860
        %v4862 = vpop.f32.mrf.mxu0
        %v4863 = vpop.f32.mrf.mxu0
        %v4864 = vadd.f32 0.0, %v4863
        %v4865 = vpop.f32.mrf.mxu0
        %4866 = vmatprep.mubr.bf16.mxu0 0
        %4867 = vmatmul.mubr.bf16.gmra.mxu0 %v4808
        %v4868 = vpop.f32.mrf.mxu0
        %v4869 = vadd.f32 0.0, %v4868
        %v4870 = vpop.f32.mrf.mxu0
        %v4871 = vpop.f32.mrf.mxu0
        %v4872 = vadd.f32 0.0, %v4871
        %v4873 = vpop.f32.mrf.mxu0
        %4874 = vdwg.mxu0
        %v4875 = vpack.c.bf16 %v4581, %v4578
        %v4876 = vpack.c.bf16 %v4589, %v4586
        %v4877 = vpack.c.bf16 %v4597, %v4594
        %v4878 = vpack.c.bf16 %v4605, %v4602
        %v4879 = vpack.c.bf16 %v4670, %v4667
        %v4880 = vpack.c.bf16 %v4678, %v4675
        %v4881 = vpack.c.bf16 %v4686, %v4683
        %v4882 = vpack.c.bf16 %v4694, %v4691
        %v4883 = vpack.c.bf16 %v4759, %v4756
        %v4884 = vpack.c.bf16 %v4767, %v4764
        %v4885 = vpack.c.bf16 %v4775, %v4772
        %v4886 = vpack.c.bf16 %v4783, %v4780
        %v4887 = vpack.c.bf16 %v4848, %v4845
        %v4888 = vpack.c.bf16 %v4856, %v4853
        %v4889 = vpack.c.bf16 %v4864, %v4861
        %v4890 = vpack.c.bf16 %v4872, %v4869
        %v4895 = vunpack.c.l.b16 %v943
        %v4896 = vunpack.c.l.b16 %v944
        %v4897 = vunpack.c.l.b16 %v945
        %v4898 = vunpack.c.l.b16 %v946
        %v4899 = vpack.c.b16 %v4896, %v4895
        %v4900 = vpack.c.b16 %v4898, %v4897
        %v4904 = vsel %vm1031, %v4875, 0
        %v4907 = vsel %vm1031, %v4876, 0
        %v4910 = vsel %vm1031, %v4877, 0
        %v4913 = vsel %vm1031, %v4878, 0
        %v4916 = vsel %vm1031, %v4879, 0
        %v4919 = vsel %vm1031, %v4880, 0
        %v4922 = vsel %vm1031, %v4881, 0
        %v4925 = vsel %vm1031, %v4882, 0
        %v4928 = vsel %vm1031, %v4883, 0
        %v4931 = vsel %vm1031, %v4884, 0
        %v4934 = vsel %vm1031, %v4885, 0
        %v4937 = vsel %vm1031, %v4886, 0
        %v4940 = vsel %vm1031, %v4887, 0
        %v4943 = vsel %vm1031, %v4888, 0
        %v4946 = vsel %vm1031, %v4889, 0
        %v4949 = vsel %vm1031, %v4890, 0
        %4951 = vmatprep.subr.bf16.mxu0 0
        %4952 = vmatpush1.bf16.msra.mxu0 0
        %4953 = vmatprep.subr.bf16.mxu0 0
        %4954 = vmatpush1.bf16.msra.mxu0 0
        %4955 = vmatprep.subr.bf16.mxu0 0
        %4956 = vmatpush1.bf16.msra.mxu0 0
        %4957 = vmatprep.subr.bf16.mxu0 0
        %4958 = vmatpush1.bf16.msra.mxu0 0
        %4959 = vmatprep.subr.bf16.mxu0 0
        %4960 = vmatpush1.bf16.msra.mxu0 0
        %4961 = vmatprep.subr.bf16.mxu0 0
        %4962 = vmatpush1.bf16.msra.mxu0 0
        %4963 = vmatprep.subr.bf16.mxu0 0
        %4964 = vmatpush1.bf16.msra.mxu0 %v4900
        %4965 = vmatprep.subr.bf16.mxu0 0
        %4966 = vmatpush1.bf16.msra.mxu0 %v4899
        %4967 = vmatprep.subr.bf16.mxu0 0
        %4968 = vmatpush2.bf16.msra.mxu0 0
        %4969 = vmatprep.subr.bf16.mxu0 0
        %4970 = vmatpush2.bf16.msra.mxu0 0
        %4971 = vmatprep.subr.bf16.mxu0 0
        %4972 = vmatpush2.bf16.msra.mxu0 0
        %4973 = vmatprep.subr.bf16.mxu0 0
        %4974 = vmatpush2.bf16.msra.mxu0 0
        %4975 = vmatprep.subr.bf16.mxu0 0
        %4976 = vmatpush2.bf16.msra.mxu0 0
        %4977 = vmatprep.subr.bf16.mxu0 0
        %4978 = vmatpush2.bf16.msra.mxu0 0
        %4979 = vmatprep.subr.bf16.mxu0 0
        %4980 = vmatpush2.bf16.msra.mxu0 0
        %4981 = vmatprep.subr.bf16.mxu0 0
        %4982 = vmatpush2.bf16.msra.mxu0 0
        %4983 = vmatprep.mubr.bf16.mxu0 0
        %4984 = vmatmul.mubr.bf16.gmra.mxu0 %v4904
        %v4985 = vpop.f32.mrf.mxu0
        %v4986 = vadd.f32 0.0, %v4985
        %v4987 = vpop.f32.mrf.mxu0
        %v4988 = vpop.f32.mrf.mxu0
        %v4989 = vadd.f32 0.0, %v4988
        %v4990 = vpop.f32.mrf.mxu0
        %4991 = vmatprep.mubr.bf16.mxu0 0
        %4992 = vmatmul.mubr.bf16.gmra.mxu0 %v4907
        %v4993 = vpop.f32.mrf.mxu0
        %v4994 = vadd.f32 0.0, %v4993
        %v4995 = vpop.f32.mrf.mxu0
        %v4996 = vpop.f32.mrf.mxu0
        %v4997 = vadd.f32 0.0, %v4996
        %v4998 = vpop.f32.mrf.mxu0
        %4999 = vmatprep.mubr.bf16.mxu0 0
        %5000 = vmatmul.mubr.bf16.gmra.mxu0 %v4910
        %v5001 = vpop.f32.mrf.mxu0
        %v5002 = vadd.f32 0.0, %v5001
        %v5003 = vpop.f32.mrf.mxu0
        %v5004 = vpop.f32.mrf.mxu0
        %v5005 = vadd.f32 0.0, %v5004
        %v5006 = vpop.f32.mrf.mxu0
        %5007 = vmatprep.mubr.bf16.mxu0 0
        %5008 = vmatmul.mubr.bf16.gmra.mxu0 %v4913
        %v5009 = vpop.f32.mrf.mxu0
        %v5010 = vadd.f32 0.0, %v5009
        %v5011 = vpop.f32.mrf.mxu0
        %v5012 = vpop.f32.mrf.mxu0
        %v5013 = vadd.f32 0.0, %v5012
        %v5014 = vpop.f32.mrf.mxu0
        %5015 = vmatprep.mubr.bf16.mxu0 0
        %5016 = vmatmul.mubr.bf16.gmra.mxu0 %v4916
        %v5017 = vpop.f32.mrf.mxu0
        %v5018 = vadd.f32 0.0, %v5017
        %v5019 = vpop.f32.mrf.mxu0
        %v5020 = vpop.f32.mrf.mxu0
        %v5021 = vadd.f32 0.0, %v5020
        %v5022 = vpop.f32.mrf.mxu0
        %5023 = vmatprep.mubr.bf16.mxu0 0
        %5024 = vmatmul.mubr.bf16.gmra.mxu0 %v4919
        %v5025 = vpop.f32.mrf.mxu0
        %v5026 = vadd.f32 0.0, %v5025
        %v5027 = vpop.f32.mrf.mxu0
        %v5028 = vpop.f32.mrf.mxu0
        %v5029 = vadd.f32 0.0, %v5028
        %v5030 = vpop.f32.mrf.mxu0
        %5031 = vmatprep.mubr.bf16.mxu0 0
        %5032 = vmatmul.mubr.bf16.gmra.mxu0 %v4922
        %v5033 = vpop.f32.mrf.mxu0
        %v5034 = vadd.f32 0.0, %v5033
        %v5035 = vpop.f32.mrf.mxu0
        %v5036 = vpop.f32.mrf.mxu0
        %v5037 = vadd.f32 0.0, %v5036
        %v5038 = vpop.f32.mrf.mxu0
        %5039 = vmatprep.mubr.bf16.mxu0 0
        %5040 = vmatmul.mubr.bf16.gmra.mxu0 %v4925
        %v5041 = vpop.f32.mrf.mxu0
        %v5042 = vadd.f32 0.0, %v5041
        %v5043 = vpop.f32.mrf.mxu0
        %v5044 = vpop.f32.mrf.mxu0
        %v5045 = vadd.f32 0.0, %v5044
        %v5046 = vpop.f32.mrf.mxu0
        %5047 = vmatprep.mubr.bf16.mxu0 0
        %5048 = vmatmul.mubr.bf16.gmra.mxu0 %v4928
        %v5049 = vpop.f32.mrf.mxu0
        %v5050 = vadd.f32 0.0, %v5049
        %v5051 = vpop.f32.mrf.mxu0
        %v5052 = vpop.f32.mrf.mxu0
        %v5053 = vadd.f32 0.0, %v5052
        %v5054 = vpop.f32.mrf.mxu0
        %5055 = vmatprep.mubr.bf16.mxu0 0
        %5056 = vmatmul.mubr.bf16.gmra.mxu0 %v4931
        %v5057 = vpop.f32.mrf.mxu0
        %v5058 = vadd.f32 0.0, %v5057
        %v5059 = vpop.f32.mrf.mxu0
        %v5060 = vpop.f32.mrf.mxu0
        %v5061 = vadd.f32 0.0, %v5060
        %v5062 = vpop.f32.mrf.mxu0
        %5063 = vmatprep.mubr.bf16.mxu0 0
        %5064 = vmatmul.mubr.bf16.gmra.mxu0 %v4934
        %v5065 = vpop.f32.mrf.mxu0
        %v5066 = vadd.f32 0.0, %v5065
        %v5067 = vpop.f32.mrf.mxu0
        %v5068 = vpop.f32.mrf.mxu0
        %v5069 = vadd.f32 0.0, %v5068
        %v5070 = vpop.f32.mrf.mxu0
        %5071 = vmatprep.mubr.bf16.mxu0 0
        %5072 = vmatmul.mubr.bf16.gmra.mxu0 %v4937
        %v5073 = vpop.f32.mrf.mxu0
        %v5074 = vadd.f32 0.0, %v5073
        %v5075 = vpop.f32.mrf.mxu0
        %v5076 = vpop.f32.mrf.mxu0
        %v5077 = vadd.f32 0.0, %v5076
        %v5078 = vpop.f32.mrf.mxu0
        %5079 = vmatprep.mubr.bf16.mxu0 0
        %5080 = vmatmul.mubr.bf16.gmra.mxu0 %v4940
        %v5081 = vpop.f32.mrf.mxu0
        %v5082 = vadd.f32 0.0, %v5081
        %v5083 = vpop.f32.mrf.mxu0
        %v5084 = vpop.f32.mrf.mxu0
        %v5085 = vadd.f32 0.0, %v5084
        %v5086 = vpop.f32.mrf.mxu0
        %5087 = vmatprep.mubr.bf16.mxu0 0
        %5088 = vmatmul.mubr.bf16.gmra.mxu0 %v4943
        %v5089 = vpop.f32.mrf.mxu0
        %v5090 = vadd.f32 0.0, %v5089
        %v5091 = vpop.f32.mrf.mxu0
        %v5092 = vpop.f32.mrf.mxu0
        %v5093 = vadd.f32 0.0, %v5092
        %v5094 = vpop.f32.mrf.mxu0
        %5095 = vmatprep.mubr.bf16.mxu0 0
        %5096 = vmatmul.mubr.bf16.gmra.mxu0 %v4946
        %v5097 = vpop.f32.mrf.mxu0
        %v5098 = vadd.f32 0.0, %v5097
        %v5099 = vpop.f32.mrf.mxu0
        %v5100 = vpop.f32.mrf.mxu0
        %v5101 = vadd.f32 0.0, %v5100
        %v5102 = vpop.f32.mrf.mxu0
        %5103 = vmatprep.mubr.bf16.mxu0 0
        %5104 = vmatmul.mubr.bf16.gmra.mxu0 %v4949
        %v5105 = vpop.f32.mrf.mxu0
        %v5106 = vadd.f32 0.0, %v5105
        %v5107 = vpop.f32.mrf.mxu0
        %v5108 = vpop.f32.mrf.mxu0
        %v5109 = vadd.f32 0.0, %v5108
        %v5110 = vpop.f32.mrf.mxu0
        %5111 = vdwg.mxu0
        %v5112 = vadd.f32 %v3605, %v4986
        %v5113 = vadd.f32 %v3608, %v4989
        %v5114 = vadd.f32 %v3613, %v4994
        %v5115 = vadd.f32 %v3616, %v4997
        %v5116 = vadd.f32 %v3621, %v5002
        %v5117 = vadd.f32 %v3624, %v5005
        %v5118 = vadd.f32 %v3629, %v5010
        %v5119 = vadd.f32 %v3632, %v5013
        %v5120 = vadd.f32 %v3637, %v5018
        %v5121 = vadd.f32 %v3640, %v5021
        %v5122 = vadd.f32 %v3645, %v5026
        %v5123 = vadd.f32 %v3648, %v5029
        %v5124 = vadd.f32 %v3653, %v5034
        %v5125 = vadd.f32 %v3656, %v5037
        %v5126 = vadd.f32 %v3661, %v5042
        %v5127 = vadd.f32 %v3664, %v5045
        %v5128 = vadd.f32 %v3669, %v5050
        %v5129 = vadd.f32 %v3672, %v5053
        %v5130 = vadd.f32 %v3677, %v5058
        %v5131 = vadd.f32 %v3680, %v5061
        %v5132 = vadd.f32 %v3685, %v5066
        %v5133 = vadd.f32 %v3688, %v5069
        %v5134 = vadd.f32 %v3693, %v5074
        %v5135 = vadd.f32 %v3696, %v5077
        %v5136 = vadd.f32 %v3701, %v5082
        %v5137 = vadd.f32 %v3704, %v5085
        %v5138 = vadd.f32 %v3709, %v5090
        %v5139 = vadd.f32 %v3712, %v5093
        %v5140 = vadd.f32 %v3717, %v5098
        %v5141 = vadd.f32 %v3720, %v5101
        %v5142 = vadd.f32 %v3725, %v5106
        %v5143 = vadd.f32 %v3728, %v5109
        %5144 = vrot.lane.b32.xlu0 %v983, 32
        %v5145 = vpop.permute.xlu0 %5144
        %5146 = vrot.lane.b32.xlu0 %v984, 32
        %v5147 = vpop.permute.xlu0 %5146
        %5148 = vrot.lane.b32.xlu0 %v985, 32
        %v5149 = vpop.permute.xlu0 %5148
        %5150 = vrot.lane.b32.xlu0 %v986, 32
        %v5151 = vpop.permute.xlu0 %5150
        %5152 = vrot.lane.b32.xlu0 %v999, 32
        %v5153 = vpop.permute.xlu0 %5152
        %5154 = vrot.lane.b32.xlu0 %v1000, 32
        %v5155 = vpop.permute.xlu0 %5154
        %5156 = vrot.lane.b32.xlu0 %v1001, 32
        %v5157 = vpop.permute.xlu0 %5156
        %5158 = vrot.lane.b32.xlu0 %v1002, 32
        %v5159 = vpop.permute.xlu0 %5158
        %v5161 = vsel %vm1031, %v5145, 0
        %v5164 = vsel %vm1031, %v5147, 0
        %v5167 = vsel %vm1031, %v5149, 0
        %v5170 = vsel %vm1031, %v5151, 0
        %v5173 = vsel %vm1031, %v5153, 0
        %v5176 = vsel %vm1031, %v5155, 0
        %v5179 = vsel %vm1031, %v5157, 0
        %v5182 = vsel %vm1031, %v5159, 0
        %5184 = vmatprep.subr.bf16.mxu0 0
        %5185 = vmatpush1.bf16.xpose.msra.mxu0 0
        %5186 = vmatprep.subr.bf16.mxu0 0
        %5187 = vmatpush1.bf16.xpose.msra.mxu0 0
        %5188 = vmatprep.subr.bf16.mxu0 0
        %5189 = vmatpush1.bf16.xpose.msra.mxu0 0
        %5190 = vmatprep.subr.bf16.mxu0 0
        %5191 = vmatpush1.bf16.xpose.msra.mxu0 0
        %5192 = vmatprep.subr.bf16.mxu0 0
        %5193 = vmatpush1.bf16.xpose.msra.mxu0 %v5182
        %5194 = vmatprep.subr.bf16.mxu0 0
        %5195 = vmatpush1.bf16.xpose.msra.mxu0 %v5179
        %5196 = vmatprep.subr.bf16.mxu0 0
        %5197 = vmatpush1.bf16.xpose.msra.mxu0 %v5176
        %5198 = vmatprep.subr.bf16.mxu0 0
        %5199 = vmatpush1.bf16.xpose.msra.mxu0 %v5173
        %5200 = vmatprep.subr.bf16.mxu0 0
        %5201 = vmatpush2.bf16.xpose.msra.mxu0 0
        %5202 = vmatprep.subr.bf16.mxu0 0
        %5203 = vmatpush2.bf16.xpose.msra.mxu0 0
        %5204 = vmatprep.subr.bf16.mxu0 0
        %5205 = vmatpush2.bf16.xpose.msra.mxu0 0
        %5206 = vmatprep.subr.bf16.mxu0 0
        %5207 = vmatpush2.bf16.xpose.msra.mxu0 0
        %5208 = vmatprep.subr.bf16.mxu0 0
        %5209 = vmatpush2.bf16.xpose.msra.mxu0 0
        %5210 = vmatprep.subr.bf16.mxu0 0
        %5211 = vmatpush2.bf16.xpose.msra.mxu0 0
        %5212 = vmatprep.subr.bf16.mxu0 0
        %5213 = vmatpush2.bf16.xpose.msra.mxu0 0
        %5214 = vmatprep.subr.bf16.mxu0 0
        %5215 = vmatpush2.bf16.xpose.msra.mxu0 0
        %5216 = vmatprep.mubr.bf16.mxu0 0
        %5217 = vmatmul.mubr.bf16.gmra.mxu0 %v5161
        %v5218 = vpop.f32.mrf.mxu0
        %v5219 = vadd.f32 0.0, %v5218
        %v5220 = vpop.f32.mrf.mxu0
        %v5221 = vpop.f32.mrf.mxu0
        %v5222 = vadd.f32 0.0, %v5221
        %v5223 = vpop.f32.mrf.mxu0
        %5224 = vmatprep.mubr.bf16.mxu0 0
        %5225 = vmatmul.mubr.bf16.gmra.mxu0 %v5164
        %v5226 = vpop.f32.mrf.mxu0
        %v5227 = vadd.f32 0.0, %v5226
        %v5228 = vpop.f32.mrf.mxu0
        %v5229 = vpop.f32.mrf.mxu0
        %v5230 = vadd.f32 0.0, %v5229
        %v5231 = vpop.f32.mrf.mxu0
        %5232 = vmatprep.mubr.bf16.mxu0 0
        %5233 = vmatmul.mubr.bf16.gmra.mxu0 %v5167
        %v5234 = vpop.f32.mrf.mxu0
        %v5235 = vadd.f32 0.0, %v5234
        %v5236 = vpop.f32.mrf.mxu0
        %v5237 = vpop.f32.mrf.mxu0
        %v5238 = vadd.f32 0.0, %v5237
        %v5239 = vpop.f32.mrf.mxu0
        %5240 = vmatprep.mubr.bf16.mxu0 0
        %5241 = vmatmul.mubr.bf16.gmra.mxu0 %v5170
        %v5242 = vpop.f32.mrf.mxu0
        %v5243 = vadd.f32 0.0, %v5242
        %v5244 = vpop.f32.mrf.mxu0
        %v5245 = vpop.f32.mrf.mxu0
        %v5246 = vadd.f32 0.0, %v5245
        %v5247 = vpop.f32.mrf.mxu0
        %5248 = vdwg.mxu0
        %5249 = vrot.lane.b32.xlu0 %v987, 32
        %v5250 = vpop.permute.xlu0 %5249
        %5251 = vrot.lane.b32.xlu0 %v988, 32
        %v5252 = vpop.permute.xlu0 %5251
        %5253 = vrot.lane.b32.xlu0 %v989, 32
        %v5254 = vpop.permute.xlu0 %5253
        %5255 = vrot.lane.b32.xlu0 %v990, 32
        %v5256 = vpop.permute.xlu0 %5255
        %5257 = vrot.lane.b32.xlu0 %v1003, 32
        %v5258 = vpop.permute.xlu0 %5257
        %5259 = vrot.lane.b32.xlu0 %v1004, 32
        %v5260 = vpop.permute.xlu0 %5259
        %5261 = vrot.lane.b32.xlu0 %v1005, 32
        %v5262 = vpop.permute.xlu0 %5261
        %5263 = vrot.lane.b32.xlu0 %v1006, 32
        %v5264 = vpop.permute.xlu0 %5263
        %v5266 = vsel %vm1031, %v5250, 0
        %v5269 = vsel %vm1031, %v5252, 0
        %v5272 = vsel %vm1031, %v5254, 0
        %v5275 = vsel %vm1031, %v5256, 0
        %v5278 = vsel %vm1031, %v5258, 0
        %v5281 = vsel %vm1031, %v5260, 0
        %v5284 = vsel %vm1031, %v5262, 0
        %v5287 = vsel %vm1031, %v5264, 0
        %5289 = vmatprep.subr.bf16.mxu0 0
        %5290 = vmatpush1.bf16.xpose.msra.mxu0 0
        %5291 = vmatprep.subr.bf16.mxu0 0
        %5292 = vmatpush1.bf16.xpose.msra.mxu0 0
        %5293 = vmatprep.subr.bf16.mxu0 0
        %5294 = vmatpush1.bf16.xpose.msra.mxu0 0
        %5295 = vmatprep.subr.bf16.mxu0 0
        %5296 = vmatpush1.bf16.xpose.msra.mxu0 0
        %5297 = vmatprep.subr.bf16.mxu0 0
        %5298 = vmatpush1.bf16.xpose.msra.mxu0 %v5287
        %5299 = vmatprep.subr.bf16.mxu0 0
        %5300 = vmatpush1.bf16.xpose.msra.mxu0 %v5284
        %5301 = vmatprep.subr.bf16.mxu0 0
        %5302 = vmatpush1.bf16.xpose.msra.mxu0 %v5281
        %5303 = vmatprep.subr.bf16.mxu0 0
        %5304 = vmatpush1.bf16.xpose.msra.mxu0 %v5278
        %5305 = vmatprep.subr.bf16.mxu0 0
        %5306 = vmatpush2.bf16.xpose.msra.mxu0 0
        %5307 = vmatprep.subr.bf16.mxu0 0
        %5308 = vmatpush2.bf16.xpose.msra.mxu0 0
        %5309 = vmatprep.subr.bf16.mxu0 0
        %5310 = vmatpush2.bf16.xpose.msra.mxu0 0
        %5311 = vmatprep.subr.bf16.mxu0 0
        %5312 = vmatpush2.bf16.xpose.msra.mxu0 0
        %5313 = vmatprep.subr.bf16.mxu0 0
        %5314 = vmatpush2.bf16.xpose.msra.mxu0 0
        %5315 = vmatprep.subr.bf16.mxu0 0
        %5316 = vmatpush2.bf16.xpose.msra.mxu0 0
        %5317 = vmatprep.subr.bf16.mxu0 0
        %5318 = vmatpush2.bf16.xpose.msra.mxu0 0
        %5319 = vmatprep.subr.bf16.mxu0 0
        %5320 = vmatpush2.bf16.xpose.msra.mxu0 0
        %5321 = vmatprep.mubr.bf16.mxu0 0
        %5322 = vmatmul.mubr.bf16.gmra.mxu0 %v5266
        %v5323 = vpop.f32.mrf.mxu0
        %v5324 = vadd.f32 0.0, %v5323
        %v5325 = vpop.f32.mrf.mxu0
        %v5326 = vpop.f32.mrf.mxu0
        %v5327 = vadd.f32 0.0, %v5326
        %v5328 = vpop.f32.mrf.mxu0
        %5329 = vmatprep.mubr.bf16.mxu0 0
        %5330 = vmatmul.mubr.bf16.gmra.mxu0 %v5269
        %v5331 = vpop.f32.mrf.mxu0
        %v5332 = vadd.f32 0.0, %v5331
        %v5333 = vpop.f32.mrf.mxu0
        %v5334 = vpop.f32.mrf.mxu0
        %v5335 = vadd.f32 0.0, %v5334
        %v5336 = vpop.f32.mrf.mxu0
        %5337 = vmatprep.mubr.bf16.mxu0 0
        %5338 = vmatmul.mubr.bf16.gmra.mxu0 %v5272
        %v5339 = vpop.f32.mrf.mxu0
        %v5340 = vadd.f32 0.0, %v5339
        %v5341 = vpop.f32.mrf.mxu0
        %v5342 = vpop.f32.mrf.mxu0
        %v5343 = vadd.f32 0.0, %v5342
        %v5344 = vpop.f32.mrf.mxu0
        %5345 = vmatprep.mubr.bf16.mxu0 0
        %5346 = vmatmul.mubr.bf16.gmra.mxu0 %v5275
        %v5347 = vpop.f32.mrf.mxu0
        %v5348 = vadd.f32 0.0, %v5347
        %v5349 = vpop.f32.mrf.mxu0
        %v5350 = vpop.f32.mrf.mxu0
        %v5351 = vadd.f32 0.0, %v5350
        %v5352 = vpop.f32.mrf.mxu0
        %5353 = vdwg.mxu0
        %5354 = vrot.lane.b32.xlu0 %v991, 32
        %v5355 = vpop.permute.xlu0 %5354
        %5356 = vrot.lane.b32.xlu0 %v992, 32
        %v5357 = vpop.permute.xlu0 %5356
        %5358 = vrot.lane.b32.xlu0 %v993, 32
        %v5359 = vpop.permute.xlu0 %5358
        %5360 = vrot.lane.b32.xlu0 %v994, 32
        %v5361 = vpop.permute.xlu0 %5360
        %5362 = vrot.lane.b32.xlu0 %v1007, 32
        %v5363 = vpop.permute.xlu0 %5362
        %5364 = vrot.lane.b32.xlu0 %v1008, 32
        %v5365 = vpop.permute.xlu0 %5364
        %5366 = vrot.lane.b32.xlu0 %v1009, 32
        %v5367 = vpop.permute.xlu0 %5366
        %5368 = vrot.lane.b32.xlu0 %v1010, 32
        %v5369 = vpop.permute.xlu0 %5368
        %v5371 = vsel %vm1031, %v5355, 0
        %v5374 = vsel %vm1031, %v5357, 0
        %v5377 = vsel %vm1031, %v5359, 0
        %v5380 = vsel %vm1031, %v5361, 0
        %v5383 = vsel %vm1031, %v5363, 0
        %v5386 = vsel %vm1031, %v5365, 0
        %v5389 = vsel %vm1031, %v5367, 0
        %v5392 = vsel %vm1031, %v5369, 0
        %5394 = vmatprep.subr.bf16.mxu0 0
        %5395 = vmatpush1.bf16.xpose.msra.mxu0 0
        %5396 = vmatprep.subr.bf16.mxu0 0
        %5397 = vmatpush1.bf16.xpose.msra.mxu0 0
        %5398 = vmatprep.subr.bf16.mxu0 0
        %5399 = vmatpush1.bf16.xpose.msra.mxu0 0
        %5400 = vmatprep.subr.bf16.mxu0 0
        %5401 = vmatpush1.bf16.xpose.msra.mxu0 0
        %5402 = vmatprep.subr.bf16.mxu0 0
        %5403 = vmatpush1.bf16.xpose.msra.mxu0 %v5392
        %5404 = vmatprep.subr.bf16.mxu0 0
        %5405 = vmatpush1.bf16.xpose.msra.mxu0 %v5389
        %5406 = vmatprep.subr.bf16.mxu0 0
        %5407 = vmatpush1.bf16.xpose.msra.mxu0 %v5386
        %5408 = vmatprep.subr.bf16.mxu0 0
        %5409 = vmatpush1.bf16.xpose.msra.mxu0 %v5383
        %5410 = vmatprep.subr.bf16.mxu0 0
        %5411 = vmatpush2.bf16.xpose.msra.mxu0 0
        %5412 = vmatprep.subr.bf16.mxu0 0
        %5413 = vmatpush2.bf16.xpose.msra.mxu0 0
        %5414 = vmatprep.subr.bf16.mxu0 0
        %5415 = vmatpush2.bf16.xpose.msra.mxu0 0
        %5416 = vmatprep.subr.bf16.mxu0 0
        %5417 = vmatpush2.bf16.xpose.msra.mxu0 0
        %5418 = vmatprep.subr.bf16.mxu0 0
        %5419 = vmatpush2.bf16.xpose.msra.mxu0 0
        %5420 = vmatprep.subr.bf16.mxu0 0
        %5421 = vmatpush2.bf16.xpose.msra.mxu0 0
        %5422 = vmatprep.subr.bf16.mxu0 0
        %5423 = vmatpush2.bf16.xpose.msra.mxu0 0
        %5424 = vmatprep.subr.bf16.mxu0 0
        %5425 = vmatpush2.bf16.xpose.msra.mxu0 0
        %5426 = vmatprep.mubr.bf16.mxu0 0
        %5427 = vmatmul.mubr.bf16.gmra.mxu0 %v5371
        %v5428 = vpop.f32.mrf.mxu0
        %v5429 = vadd.f32 0.0, %v5428
        %v5430 = vpop.f32.mrf.mxu0
        %v5431 = vpop.f32.mrf.mxu0
        %v5432 = vadd.f32 0.0, %v5431
        %v5433 = vpop.f32.mrf.mxu0
        %5434 = vmatprep.mubr.bf16.mxu0 0
        %5435 = vmatmul.mubr.bf16.gmra.mxu0 %v5374
        %v5436 = vpop.f32.mrf.mxu0
        %v5437 = vadd.f32 0.0, %v5436
        %v5438 = vpop.f32.mrf.mxu0
        %v5439 = vpop.f32.mrf.mxu0
        %v5440 = vadd.f32 0.0, %v5439
        %v5441 = vpop.f32.mrf.mxu0
        %5442 = vmatprep.mubr.bf16.mxu0 0
        %5443 = vmatmul.mubr.bf16.gmra.mxu0 %v5377
        %v5444 = vpop.f32.mrf.mxu0
        %v5445 = vadd.f32 0.0, %v5444
        %v5446 = vpop.f32.mrf.mxu0
        %v5447 = vpop.f32.mrf.mxu0
        %v5448 = vadd.f32 0.0, %v5447
        %v5449 = vpop.f32.mrf.mxu0
        %5450 = vmatprep.mubr.bf16.mxu0 0
        %5451 = vmatmul.mubr.bf16.gmra.mxu0 %v5380
        %v5452 = vpop.f32.mrf.mxu0
        %v5453 = vadd.f32 0.0, %v5452
        %v5454 = vpop.f32.mrf.mxu0
        %v5455 = vpop.f32.mrf.mxu0
        %v5456 = vadd.f32 0.0, %v5455
        %v5457 = vpop.f32.mrf.mxu0
        %5458 = vdwg.mxu0
        %5459 = vrot.lane.b32.xlu0 %v995, 32
        %v5460 = vpop.permute.xlu0 %5459
        %5461 = vrot.lane.b32.xlu0 %v996, 32
        %v5462 = vpop.permute.xlu0 %5461
        %5463 = vrot.lane.b32.xlu0 %v997, 32
        %v5464 = vpop.permute.xlu0 %5463
        %5465 = vrot.lane.b32.xlu0 %v998, 32
        %v5466 = vpop.permute.xlu0 %5465
        %5467 = vrot.lane.b32.xlu0 %v1011, 32
        %v5468 = vpop.permute.xlu0 %5467
        %5469 = vrot.lane.b32.xlu0 %v1012, 32
        %v5470 = vpop.permute.xlu0 %5469
        %5471 = vrot.lane.b32.xlu0 %v1013, 32
        %v5472 = vpop.permute.xlu0 %5471
        %5473 = vrot.lane.b32.xlu0 %v1014, 32
        %v5474 = vpop.permute.xlu0 %5473
        %v5476 = vsel %vm1031, %v5460, 0
        %v5479 = vsel %vm1031, %v5462, 0
        %v5482 = vsel %vm1031, %v5464, 0
        %v5485 = vsel %vm1031, %v5466, 0
        %v5488 = vsel %vm1031, %v5468, 0
        %v5491 = vsel %vm1031, %v5470, 0
        %v5494 = vsel %vm1031, %v5472, 0
        %v5497 = vsel %vm1031, %v5474, 0
        %5499 = vmatprep.subr.bf16.mxu0 0
        %5500 = vmatpush1.bf16.xpose.msra.mxu0 0
        %5501 = vmatprep.subr.bf16.mxu0 0
        %5502 = vmatpush1.bf16.xpose.msra.mxu0 0
        %5503 = vmatprep.subr.bf16.mxu0 0
        %5504 = vmatpush1.bf16.xpose.msra.mxu0 0
        %5505 = vmatprep.subr.bf16.mxu0 0
        %5506 = vmatpush1.bf16.xpose.msra.mxu0 0
        %5507 = vmatprep.subr.bf16.mxu0 0
        %5508 = vmatpush1.bf16.xpose.msra.mxu0 %v5497
        %5509 = vmatprep.subr.bf16.mxu0 0
        %5510 = vmatpush1.bf16.xpose.msra.mxu0 %v5494
        %5511 = vmatprep.subr.bf16.mxu0 0
        %5512 = vmatpush1.bf16.xpose.msra.mxu0 %v5491
        %5513 = vmatprep.subr.bf16.mxu0 0
        %5514 = vmatpush1.bf16.xpose.msra.mxu0 %v5488
        %5515 = vmatprep.subr.bf16.mxu0 0
        %5516 = vmatpush2.bf16.xpose.msra.mxu0 0
        %5517 = vmatprep.subr.bf16.mxu0 0
        %5518 = vmatpush2.bf16.xpose.msra.mxu0 0
        %5519 = vmatprep.subr.bf16.mxu0 0
        %5520 = vmatpush2.bf16.xpose.msra.mxu0 0
        %5521 = vmatprep.subr.bf16.mxu0 0
        %5522 = vmatpush2.bf16.xpose.msra.mxu0 0
        %5523 = vmatprep.subr.bf16.mxu0 0
        %5524 = vmatpush2.bf16.xpose.msra.mxu0 0
        %5525 = vmatprep.subr.bf16.mxu0 0
        %5526 = vmatpush2.bf16.xpose.msra.mxu0 0
        %5527 = vmatprep.subr.bf16.mxu0 0
        %5528 = vmatpush2.bf16.xpose.msra.mxu0 0
        %5529 = vmatprep.subr.bf16.mxu0 0
        %5530 = vmatpush2.bf16.xpose.msra.mxu0 0
        %5531 = vmatprep.mubr.bf16.mxu0 0
        %5532 = vmatmul.mubr.bf16.gmra.mxu0 %v5476
        %v5533 = vpop.f32.mrf.mxu0
        %v5534 = vadd.f32 0.0, %v5533
        %v5535 = vpop.f32.mrf.mxu0
        %v5536 = vpop.f32.mrf.mxu0
        %v5537 = vadd.f32 0.0, %v5536
        %v5538 = vpop.f32.mrf.mxu0
        %5539 = vmatprep.mubr.bf16.mxu0 0
        %5540 = vmatmul.mubr.bf16.gmra.mxu0 %v5479
        %v5541 = vpop.f32.mrf.mxu0
        %v5542 = vadd.f32 0.0, %v5541
        %v5543 = vpop.f32.mrf.mxu0
        %v5544 = vpop.f32.mrf.mxu0
        %v5545 = vadd.f32 0.0, %v5544
        %v5546 = vpop.f32.mrf.mxu0
        %5547 = vmatprep.mubr.bf16.mxu0 0
        %5548 = vmatmul.mubr.bf16.gmra.mxu0 %v5482
        %v5549 = vpop.f32.mrf.mxu0
        %v5550 = vadd.f32 0.0, %v5549
        %v5551 = vpop.f32.mrf.mxu0
        %v5552 = vpop.f32.mrf.mxu0
        %v5553 = vadd.f32 0.0, %v5552
        %v5554 = vpop.f32.mrf.mxu0
        %5555 = vmatprep.mubr.bf16.mxu0 0
        %5556 = vmatmul.mubr.bf16.gmra.mxu0 %v5485
        %v5557 = vpop.f32.mrf.mxu0
        %v5558 = vadd.f32 0.0, %v5557
        %v5559 = vpop.f32.mrf.mxu0
        %v5560 = vpop.f32.mrf.mxu0
        %v5561 = vadd.f32 0.0, %v5560
        %v5562 = vpop.f32.mrf.mxu0
        %5563 = vdwg.mxu0
        %v5564 = vsel %vm1388, %v5219, -inf
        %5565 = vmax.xlane.f32.xlu0 %v5564
        %v5566 = vpop.xlane.xlu0 %5565
        %v5567 = vsel %vm1388, %v5222, -inf
        %5568 = vmax.xlane.f32.xlu0 %v5567
        %v5569 = vpop.xlane.xlu0 %5568
        %v5570 = vsel %vm1388, %v5227, -inf
        %5571 = vmax.xlane.f32.xlu0 %v5570
        %v5572 = vpop.xlane.xlu0 %5571
        %v5573 = vsel %vm1388, %v5230, -inf
        %5574 = vmax.xlane.f32.xlu0 %v5573
        %v5575 = vpop.xlane.xlu0 %5574
        %v5576 = vsel %vm1388, %v5235, -inf
        %5577 = vmax.xlane.f32.xlu0 %v5576
        %v5578 = vpop.xlane.xlu0 %5577
        %v5579 = vsel %vm1388, %v5238, -inf
        %5580 = vmax.xlane.f32.xlu0 %v5579
        %v5581 = vpop.xlane.xlu0 %5580
        %v5582 = vsel %vm1388, %v5243, -inf
        %5583 = vmax.xlane.f32.xlu0 %v5582
        %v5584 = vpop.xlane.xlu0 %5583
        %v5585 = vsel %vm1388, %v5246, -inf
        %5586 = vmax.xlane.f32.xlu0 %v5585
        %v5587 = vpop.xlane.xlu0 %5586
        %v5588 = vsel %vm1388, %v5324, -inf
        %5589 = vmax.xlane.f32.xlu0 %v5588
        %v5590 = vpop.xlane.xlu0 %5589
        %v5591 = vsel %vm1388, %v5327, -inf
        %5592 = vmax.xlane.f32.xlu0 %v5591
        %v5593 = vpop.xlane.xlu0 %5592
        %v5594 = vsel %vm1388, %v5332, -inf
        %5595 = vmax.xlane.f32.xlu0 %v5594
        %v5596 = vpop.xlane.xlu0 %5595
        %v5597 = vsel %vm1388, %v5335, -inf
        %5598 = vmax.xlane.f32.xlu0 %v5597
        %v5599 = vpop.xlane.xlu0 %5598
        %v5600 = vsel %vm1388, %v5340, -inf
        %5601 = vmax.xlane.f32.xlu0 %v5600
        %v5602 = vpop.xlane.xlu0 %5601
        %v5603 = vsel %vm1388, %v5343, -inf
        %5604 = vmax.xlane.f32.xlu0 %v5603
        %v5605 = vpop.xlane.xlu0 %5604
        %v5606 = vsel %vm1388, %v5348, -inf
        %5607 = vmax.xlane.f32.xlu0 %v5606
        %v5608 = vpop.xlane.xlu0 %5607
        %v5609 = vsel %vm1388, %v5351, -inf
        %5610 = vmax.xlane.f32.xlu0 %v5609
        %v5611 = vpop.xlane.xlu0 %5610
        %v5612 = vsel %vm1388, %v5429, -inf
        %5613 = vmax.xlane.f32.xlu0 %v5612
        %v5614 = vpop.xlane.xlu0 %5613
        %v5615 = vsel %vm1388, %v5432, -inf
        %5616 = vmax.xlane.f32.xlu0 %v5615
        %v5617 = vpop.xlane.xlu0 %5616
        %v5618 = vsel %vm1388, %v5437, -inf
        %5619 = vmax.xlane.f32.xlu0 %v5618
        %v5620 = vpop.xlane.xlu0 %5619
        %v5621 = vsel %vm1388, %v5440, -inf
        %5622 = vmax.xlane.f32.xlu0 %v5621
        %v5623 = vpop.xlane.xlu0 %5622
        %v5624 = vsel %vm1388, %v5445, -inf
        %5625 = vmax.xlane.f32.xlu0 %v5624
        %v5626 = vpop.xlane.xlu0 %5625
        %v5627 = vsel %vm1388, %v5448, -inf
        %5628 = vmax.xlane.f32.xlu0 %v5627
        %v5629 = vpop.xlane.xlu0 %5628
        %v5630 = vsel %vm1388, %v5453, -inf
        %5631 = vmax.xlane.f32.xlu0 %v5630
        %v5632 = vpop.xlane.xlu0 %5631
        %v5633 = vsel %vm1388, %v5456, -inf
        %5634 = vmax.xlane.f32.xlu0 %v5633
        %v5635 = vpop.xlane.xlu0 %5634
        %v5636 = vsel %vm1388, %v5534, -inf
        %5637 = vmax.xlane.f32.xlu0 %v5636
        %v5638 = vpop.xlane.xlu0 %5637
        %v5639 = vsel %vm1388, %v5537, -inf
        %5640 = vmax.xlane.f32.xlu0 %v5639
        %v5641 = vpop.xlane.xlu0 %5640
        %v5642 = vsel %vm1388, %v5542, -inf
        %5643 = vmax.xlane.f32.xlu0 %v5642
        %v5644 = vpop.xlane.xlu0 %5643
        %v5645 = vsel %vm1388, %v5545, -inf
        %5646 = vmax.xlane.f32.xlu0 %v5645
        %v5647 = vpop.xlane.xlu0 %5646
        %v5648 = vsel %vm1388, %v5550, -inf
        %5649 = vmax.xlane.f32.xlu0 %v5648
        %v5650 = vpop.xlane.xlu0 %5649
        %v5651 = vsel %vm1388, %v5553, -inf
        %5652 = vmax.xlane.f32.xlu0 %v5651
        %v5653 = vpop.xlane.xlu0 %5652
        %v5654 = vsel %vm1388, %v5558, -inf
        %5655 = vmax.xlane.f32.xlu0 %v5654
        %v5656 = vpop.xlane.xlu0 %5655
        %v5657 = vsel %vm1388, %v5561, -inf
        %5658 = vmax.xlane.f32.xlu0 %v5657
        %v5659 = vpop.xlane.xlu0 %5658
        %v5660 = vsub.f32 %v5219, %v5566
        %v5661 = vsub.f32 %v5222, %v5569
        %v5662 = vsub.f32 %v5227, %v5572
        %v5663 = vsub.f32 %v5230, %v5575
        %v5664 = vsub.f32 %v5235, %v5578
        %v5665 = vsub.f32 %v5238, %v5581
        %v5666 = vsub.f32 %v5243, %v5584
        %v5667 = vsub.f32 %v5246, %v5587
        %v5668 = vsub.f32 %v5324, %v5590
        %v5669 = vsub.f32 %v5327, %v5593
        %v5670 = vsub.f32 %v5332, %v5596
        %v5671 = vsub.f32 %v5335, %v5599
        %v5672 = vsub.f32 %v5340, %v5602
        %v5673 = vsub.f32 %v5343, %v5605
        %v5674 = vsub.f32 %v5348, %v5608
        %v5675 = vsub.f32 %v5351, %v5611
        %v5676 = vsub.f32 %v5429, %v5614
        %v5677 = vsub.f32 %v5432, %v5617
        %v5678 = vsub.f32 %v5437, %v5620
        %v5679 = vsub.f32 %v5440, %v5623
        %v5680 = vsub.f32 %v5445, %v5626
        %v5681 = vsub.f32 %v5448, %v5629
        %v5682 = vsub.f32 %v5453, %v5632
        %v5683 = vsub.f32 %v5456, %v5635
        %v5684 = vsub.f32 %v5534, %v5638
        %v5685 = vsub.f32 %v5537, %v5641
        %v5686 = vsub.f32 %v5542, %v5644
        %v5687 = vsub.f32 %v5545, %v5647
        %v5688 = vsub.f32 %v5550, %v5650
        %v5689 = vsub.f32 %v5553, %v5653
        %v5690 = vsub.f32 %v5558, %v5656
        %v5691 = vsub.f32 %v5561, %v5659
        %v5692 = vmul.f32 %v5660, 1.442695
        %v5693 = vpow.pop %v5692
        %v5694 = vmul.f32 %v5661, 1.442695
        %v5695 = vpow.pop %v5694
        %v5696 = vmul.f32 %v5662, 1.442695
        %v5697 = vpow.pop %v5696
        %v5698 = vmul.f32 %v5663, 1.442695
        %v5699 = vpow.pop %v5698
        %v5700 = vmul.f32 %v5664, 1.442695
        %v5701 = vpow.pop %v5700
        %v5702 = vmul.f32 %v5665, 1.442695
        %v5703 = vpow.pop %v5702
        %v5704 = vmul.f32 %v5666, 1.442695
        %v5705 = vpow.pop %v5704
        %v5706 = vmul.f32 %v5667, 1.442695
        %v5707 = vpow.pop %v5706
        %v5708 = vmul.f32 %v5668, 1.442695
        %v5709 = vpow.pop %v5708
        %v5710 = vmul.f32 %v5669, 1.442695
        %v5711 = vpow.pop %v5710
        %v5712 = vmul.f32 %v5670, 1.442695
        %v5713 = vpow.pop %v5712
        %v5714 = vmul.f32 %v5671, 1.442695
        %v5715 = vpow.pop %v5714
        %v5716 = vmul.f32 %v5672, 1.442695
        %v5717 = vpow.pop %v5716
        %v5718 = vmul.f32 %v5673, 1.442695
        %v5719 = vpow.pop %v5718
        %v5720 = vmul.f32 %v5674, 1.442695
        %v5721 = vpow.pop %v5720
        %v5722 = vmul.f32 %v5675, 1.442695
        %v5723 = vpow.pop %v5722
        %v5724 = vmul.f32 %v5676, 1.442695
        %v5725 = vpow.pop %v5724
        %v5726 = vmul.f32 %v5677, 1.442695
        %v5727 = vpow.pop %v5726
        %v5728 = vmul.f32 %v5678, 1.442695
        %v5729 = vpow.pop %v5728
        %v5730 = vmul.f32 %v5679, 1.442695
        %v5731 = vpow.pop %v5730
        %v5732 = vmul.f32 %v5680, 1.442695
        %v5733 = vpow.pop %v5732
        %v5734 = vmul.f32 %v5681, 1.442695
        %v5735 = vpow.pop %v5734
        %v5736 = vmul.f32 %v5682, 1.442695
        %v5737 = vpow.pop %v5736
        %v5738 = vmul.f32 %v5683, 1.442695
        %v5739 = vpow.pop %v5738
        %v5740 = vmul.f32 %v5684, 1.442695
        %v5741 = vpow.pop %v5740
        %v5742 = vmul.f32 %v5685, 1.442695
        %v5743 = vpow.pop %v5742
        %v5744 = vmul.f32 %v5686, 1.442695
        %v5745 = vpow.pop %v5744
        %v5746 = vmul.f32 %v5687, 1.442695
        %v5747 = vpow.pop %v5746
        %v5748 = vmul.f32 %v5688, 1.442695
        %v5749 = vpow.pop %v5748
        %v5750 = vmul.f32 %v5689, 1.442695
        %v5751 = vpow.pop %v5750
        %v5752 = vmul.f32 %v5690, 1.442695
        %v5753 = vpow.pop %v5752
        %v5754 = vmul.f32 %v5691, 1.442695
        %v5755 = vpow.pop %v5754
        %v5756 = vsel %vm1388, %v5693, 0.0
        %5757 = vadd.xlane.f32.xlu0 %v5756
        %v5758 = vpop.xlane.xlu0 %5757
        %v5759 = vsel %vm1388, %v5695, 0.0
        %5760 = vadd.xlane.f32.xlu0 %v5759
        %v5761 = vpop.xlane.xlu0 %5760
        %v5762 = vsel %vm1388, %v5697, 0.0
        %5763 = vadd.xlane.f32.xlu0 %v5762
        %v5764 = vpop.xlane.xlu0 %5763
        %v5765 = vsel %vm1388, %v5699, 0.0
        %5766 = vadd.xlane.f32.xlu0 %v5765
        %v5767 = vpop.xlane.xlu0 %5766
        %v5768 = vsel %vm1388, %v5701, 0.0
        %5769 = vadd.xlane.f32.xlu0 %v5768
        %v5770 = vpop.xlane.xlu0 %5769
        %v5771 = vsel %vm1388, %v5703, 0.0
        %5772 = vadd.xlane.f32.xlu0 %v5771
        %v5773 = vpop.xlane.xlu0 %5772
        %v5774 = vsel %vm1388, %v5705, 0.0
        %5775 = vadd.xlane.f32.xlu0 %v5774
        %v5776 = vpop.xlane.xlu0 %5775
        %v5777 = vsel %vm1388, %v5707, 0.0
        %5778 = vadd.xlane.f32.xlu0 %v5777
        %v5779 = vpop.xlane.xlu0 %5778
        %v5780 = vsel %vm1388, %v5709, 0.0
        %5781 = vadd.xlane.f32.xlu0 %v5780
        %v5782 = vpop.xlane.xlu0 %5781
        %v5783 = vsel %vm1388, %v5711, 0.0
        %5784 = vadd.xlane.f32.xlu0 %v5783
        %v5785 = vpop.xlane.xlu0 %5784
        %v5786 = vsel %vm1388, %v5713, 0.0
        %5787 = vadd.xlane.f32.xlu0 %v5786
        %v5788 = vpop.xlane.xlu0 %5787
        %v5789 = vsel %vm1388, %v5715, 0.0
        %5790 = vadd.xlane.f32.xlu0 %v5789
        %v5791 = vpop.xlane.xlu0 %5790
        %v5792 = vsel %vm1388, %v5717, 0.0
        %5793 = vadd.xlane.f32.xlu0 %v5792
        %v5794 = vpop.xlane.xlu0 %5793
        %v5795 = vsel %vm1388, %v5719, 0.0
        %5796 = vadd.xlane.f32.xlu0 %v5795
        %v5797 = vpop.xlane.xlu0 %5796
        %v5798 = vsel %vm1388, %v5721, 0.0
        %5799 = vadd.xlane.f32.xlu0 %v5798
        %v5800 = vpop.xlane.xlu0 %5799
        %v5801 = vsel %vm1388, %v5723, 0.0
        %5802 = vadd.xlane.f32.xlu0 %v5801
        %v5803 = vpop.xlane.xlu0 %5802
        %v5804 = vsel %vm1388, %v5725, 0.0
        %5805 = vadd.xlane.f32.xlu0 %v5804
        %v5806 = vpop.xlane.xlu0 %5805
        %v5807 = vsel %vm1388, %v5727, 0.0
        %5808 = vadd.xlane.f32.xlu0 %v5807
        %v5809 = vpop.xlane.xlu0 %5808
        %v5810 = vsel %vm1388, %v5729, 0.0
        %5811 = vadd.xlane.f32.xlu0 %v5810
        %v5812 = vpop.xlane.xlu0 %5811
        %v5813 = vsel %vm1388, %v5731, 0.0
        %5814 = vadd.xlane.f32.xlu0 %v5813
        %v5815 = vpop.xlane.xlu0 %5814
        %v5816 = vsel %vm1388, %v5733, 0.0
        %5817 = vadd.xlane.f32.xlu0 %v5816
        %v5818 = vpop.xlane.xlu0 %5817
        %v5819 = vsel %vm1388, %v5735, 0.0
        %5820 = vadd.xlane.f32.xlu0 %v5819
        %v5821 = vpop.xlane.xlu0 %5820
        %v5822 = vsel %vm1388, %v5737, 0.0
        %5823 = vadd.xlane.f32.xlu0 %v5822
        %v5824 = vpop.xlane.xlu0 %5823
        %v5825 = vsel %vm1388, %v5739, 0.0
        %5826 = vadd.xlane.f32.xlu0 %v5825
        %v5827 = vpop.xlane.xlu0 %5826
        %v5828 = vsel %vm1388, %v5741, 0.0
        %5829 = vadd.xlane.f32.xlu0 %v5828
        %v5830 = vpop.xlane.xlu0 %5829
        %v5831 = vsel %vm1388, %v5743, 0.0
        %5832 = vadd.xlane.f32.xlu0 %v5831
        %v5833 = vpop.xlane.xlu0 %5832
        %v5834 = vsel %vm1388, %v5745, 0.0
        %5835 = vadd.xlane.f32.xlu0 %v5834
        %v5836 = vpop.xlane.xlu0 %5835
        %v5837 = vsel %vm1388, %v5747, 0.0
        %5838 = vadd.xlane.f32.xlu0 %v5837
        %v5839 = vpop.xlane.xlu0 %5838
        %v5840 = vsel %vm1388, %v5749, 0.0
        %5841 = vadd.xlane.f32.xlu0 %v5840
        %v5842 = vpop.xlane.xlu0 %5841
        %v5843 = vsel %vm1388, %v5751, 0.0
        %5844 = vadd.xlane.f32.xlu0 %v5843
        %v5845 = vpop.xlane.xlu0 %5844
        %v5846 = vsel %vm1388, %v5753, 0.0
        %5847 = vadd.xlane.f32.xlu0 %v5846
        %v5848 = vpop.xlane.xlu0 %5847
        %v5849 = vsel %vm1388, %v5755, 0.0
        %5850 = vadd.xlane.f32.xlu0 %v5849
        %v5851 = vpop.xlane.xlu0 %5850
        %v5852 = vrcp.pop %v5758
        %v5853 = vmul.f32 %v5693, %v5852
        %v5854 = vrcp.pop %v5761
        %v5855 = vmul.f32 %v5695, %v5854
        %v5856 = vrcp.pop %v5764
        %v5857 = vmul.f32 %v5697, %v5856
        %v5858 = vrcp.pop %v5767
        %v5859 = vmul.f32 %v5699, %v5858
        %v5860 = vrcp.pop %v5770
        %v5861 = vmul.f32 %v5701, %v5860
        %v5862 = vrcp.pop %v5773
        %v5863 = vmul.f32 %v5703, %v5862
        %v5864 = vrcp.pop %v5776
        %v5865 = vmul.f32 %v5705, %v5864
        %v5866 = vrcp.pop %v5779
        %v5867 = vmul.f32 %v5707, %v5866
        %v5868 = vrcp.pop %v5782
        %v5869 = vmul.f32 %v5709, %v5868
        %v5870 = vrcp.pop %v5785
        %v5871 = vmul.f32 %v5711, %v5870
        %v5872 = vrcp.pop %v5788
        %v5873 = vmul.f32 %v5713, %v5872
        %v5874 = vrcp.pop %v5791
        %v5875 = vmul.f32 %v5715, %v5874
        %v5876 = vrcp.pop %v5794
        %v5877 = vmul.f32 %v5717, %v5876
        %v5878 = vrcp.pop %v5797
        %v5879 = vmul.f32 %v5719, %v5878
        %v5880 = vrcp.pop %v5800
        %v5881 = vmul.f32 %v5721, %v5880
        %v5882 = vrcp.pop %v5803
        %v5883 = vmul.f32 %v5723, %v5882
        %v5884 = vrcp.pop %v5806
        %v5885 = vmul.f32 %v5725, %v5884
        %v5886 = vrcp.pop %v5809
        %v5887 = vmul.f32 %v5727, %v5886
        %v5888 = vrcp.pop %v5812
        %v5889 = vmul.f32 %v5729, %v5888
        %v5890 = vrcp.pop %v5815
        %v5891 = vmul.f32 %v5731, %v5890
        %v5892 = vrcp.pop %v5818
        %v5893 = vmul.f32 %v5733, %v5892
        %v5894 = vrcp.pop %v5821
        %v5895 = vmul.f32 %v5735, %v5894
        %v5896 = vrcp.pop %v5824
        %v5897 = vmul.f32 %v5737, %v5896
        %v5898 = vrcp.pop %v5827
        %v5899 = vmul.f32 %v5739, %v5898
        %v5900 = vrcp.pop %v5830
        %v5901 = vmul.f32 %v5741, %v5900
        %v5902 = vrcp.pop %v5833
        %v5903 = vmul.f32 %v5743, %v5902
        %v5904 = vrcp.pop %v5836
        %v5905 = vmul.f32 %v5745, %v5904
        %v5906 = vrcp.pop %v5839
        %v5907 = vmul.f32 %v5747, %v5906
        %v5908 = vrcp.pop %v5842
        %v5909 = vmul.f32 %v5749, %v5908
        %v5910 = vrcp.pop %v5845
        %v5911 = vmul.f32 %v5751, %v5910
        %v5912 = vrcp.pop %v5848
        %v5913 = vmul.f32 %v5753, %v5912
        %v5914 = vrcp.pop %v5851
        %v5915 = vmul.f32 %v5755, %v5914
        %v5916 = vpack.c.bf16 %v5855, %v5853
        %v5917 = vpack.c.bf16 %v5859, %v5857
        %v5918 = vpack.c.bf16 %v5863, %v5861
        %v5919 = vpack.c.bf16 %v5867, %v5865
        %v5920 = vpack.c.bf16 %v5871, %v5869
        %v5921 = vpack.c.bf16 %v5875, %v5873
        %v5922 = vpack.c.bf16 %v5879, %v5877
        %v5923 = vpack.c.bf16 %v5883, %v5881
        %v5924 = vpack.c.bf16 %v5887, %v5885
        %v5925 = vpack.c.bf16 %v5891, %v5889
        %v5926 = vpack.c.bf16 %v5895, %v5893
        %v5927 = vpack.c.bf16 %v5899, %v5897
        %v5928 = vpack.c.bf16 %v5903, %v5901
        %v5929 = vpack.c.bf16 %v5907, %v5905
        %v5930 = vpack.c.bf16 %v5911, %v5909
        %v5931 = vpack.c.bf16 %v5915, %v5913
        %5932 = vrot.lane.b32.xlu0 %v1015, 32
        %v5933 = vpop.permute.xlu0 %5932
        %5934 = vrot.lane.b32.xlu0 %v1016, 32
        %v5935 = vpop.permute.xlu0 %5934
        %5936 = vrot.lane.b32.xlu0 %v1017, 32
        %v5937 = vpop.permute.xlu0 %5936
        %5938 = vrot.lane.b32.xlu0 %v1018, 32
        %v5939 = vpop.permute.xlu0 %5938
        %v5945 = vsel %vm1388, %v5916, 0
        %v5948 = vsel %vm1388, %v5917, 0
        %v5951 = vsel %vm1388, %v5918, 0
        %v5954 = vsel %vm1388, %v5919, 0
        %5956 = vmatprep.subr.bf16.mxu0 0
        %5957 = vmatpush1.bf16.msra.mxu0 0
        %5958 = vmatprep.subr.bf16.mxu0 0
        %5959 = vmatpush1.bf16.msra.mxu0 0
        %5960 = vmatprep.subr.bf16.mxu0 0
        %5961 = vmatpush1.bf16.msra.mxu0 0
        %5962 = vmatprep.subr.bf16.mxu0 0
        %5963 = vmatpush1.bf16.msra.mxu0 0
        %5964 = vmatprep.subr.bf16.mxu0 0
        %5965 = vmatpush1.bf16.msra.mxu0 %v5939
        %5966 = vmatprep.subr.bf16.mxu0 0
        %5967 = vmatpush1.bf16.msra.mxu0 %v5937
        %5968 = vmatprep.subr.bf16.mxu0 0
        %5969 = vmatpush1.bf16.msra.mxu0 %v5935
        %5970 = vmatprep.subr.bf16.mxu0 0
        %5971 = vmatpush1.bf16.msra.mxu0 %v5933
        %5972 = vmatprep.subr.bf16.mxu0 0
        %5973 = vmatpush2.bf16.msra.mxu0 0
        %5974 = vmatprep.subr.bf16.mxu0 0
        %5975 = vmatpush2.bf16.msra.mxu0 0
        %5976 = vmatprep.subr.bf16.mxu0 0
        %5977 = vmatpush2.bf16.msra.mxu0 0
        %5978 = vmatprep.subr.bf16.mxu0 0
        %5979 = vmatpush2.bf16.msra.mxu0 0
        %5980 = vmatprep.subr.bf16.mxu0 0
        %5981 = vmatpush2.bf16.msra.mxu0 0
        %5982 = vmatprep.subr.bf16.mxu0 0
        %5983 = vmatpush2.bf16.msra.mxu0 0
        %5984 = vmatprep.subr.bf16.mxu0 0
        %5985 = vmatpush2.bf16.msra.mxu0 0
        %5986 = vmatprep.subr.bf16.mxu0 0
        %5987 = vmatpush2.bf16.msra.mxu0 0
        %5988 = vmatprep.mubr.bf16.mxu0 0
        %5989 = vmatmul.mubr.bf16.gmra.mxu0 %v5945
        %v5990 = vpop.f32.mrf.mxu0
        %v5991 = vadd.f32 0.0, %v5990
        %v5992 = vpop.f32.mrf.mxu0
        %v5993 = vpop.f32.mrf.mxu0
        %v5994 = vadd.f32 0.0, %v5993
        %v5995 = vpop.f32.mrf.mxu0
        %5996 = vmatprep.mubr.bf16.mxu0 0
        %5997 = vmatmul.mubr.bf16.gmra.mxu0 %v5948
        %v5998 = vpop.f32.mrf.mxu0
        %v5999 = vadd.f32 0.0, %v5998
        %v6000 = vpop.f32.mrf.mxu0
        %v6001 = vpop.f32.mrf.mxu0
        %v6002 = vadd.f32 0.0, %v6001
        %v6003 = vpop.f32.mrf.mxu0
        %6004 = vmatprep.mubr.bf16.mxu0 0
        %6005 = vmatmul.mubr.bf16.gmra.mxu0 %v5951
        %v6006 = vpop.f32.mrf.mxu0
        %v6007 = vadd.f32 0.0, %v6006
        %v6008 = vpop.f32.mrf.mxu0
        %v6009 = vpop.f32.mrf.mxu0
        %v6010 = vadd.f32 0.0, %v6009
        %v6011 = vpop.f32.mrf.mxu0
        %6012 = vmatprep.mubr.bf16.mxu0 0
        %6013 = vmatmul.mubr.bf16.gmra.mxu0 %v5954
        %v6014 = vpop.f32.mrf.mxu0
        %v6015 = vadd.f32 0.0, %v6014
        %v6016 = vpop.f32.mrf.mxu0
        %v6017 = vpop.f32.mrf.mxu0
        %v6018 = vadd.f32 0.0, %v6017
        %v6019 = vpop.f32.mrf.mxu0
        %6020 = vdwg.mxu0
        %6021 = vrot.lane.b32.xlu0 %v1019, 32
        %v6022 = vpop.permute.xlu0 %6021
        %6023 = vrot.lane.b32.xlu0 %v1020, 32
        %v6024 = vpop.permute.xlu0 %6023
        %6025 = vrot.lane.b32.xlu0 %v1021, 32
        %v6026 = vpop.permute.xlu0 %6025
        %6027 = vrot.lane.b32.xlu0 %v1022, 32
        %v6028 = vpop.permute.xlu0 %6027
        %v6034 = vsel %vm1388, %v5920, 0
        %v6037 = vsel %vm1388, %v5921, 0
        %v6040 = vsel %vm1388, %v5922, 0
        %v6043 = vsel %vm1388, %v5923, 0
        %6045 = vmatprep.subr.bf16.mxu0 0
        %6046 = vmatpush1.bf16.msra.mxu0 0
        %6047 = vmatprep.subr.bf16.mxu0 0
        %6048 = vmatpush1.bf16.msra.mxu0 0
        %6049 = vmatprep.subr.bf16.mxu0 0
        %6050 = vmatpush1.bf16.msra.mxu0 0
        %6051 = vmatprep.subr.bf16.mxu0 0
        %6052 = vmatpush1.bf16.msra.mxu0 0
        %6053 = vmatprep.subr.bf16.mxu0 0
        %6054 = vmatpush1.bf16.msra.mxu0 %v6028
        %6055 = vmatprep.subr.bf16.mxu0 0
        %6056 = vmatpush1.bf16.msra.mxu0 %v6026
        %6057 = vmatprep.subr.bf16.mxu0 0
        %6058 = vmatpush1.bf16.msra.mxu0 %v6024
        %6059 = vmatprep.subr.bf16.mxu0 0
        %6060 = vmatpush1.bf16.msra.mxu0 %v6022
        %6061 = vmatprep.subr.bf16.mxu0 0
        %6062 = vmatpush2.bf16.msra.mxu0 0
        %6063 = vmatprep.subr.bf16.mxu0 0
        %6064 = vmatpush2.bf16.msra.mxu0 0
        %6065 = vmatprep.subr.bf16.mxu0 0
        %6066 = vmatpush2.bf16.msra.mxu0 0
        %6067 = vmatprep.subr.bf16.mxu0 0
        %6068 = vmatpush2.bf16.msra.mxu0 0
        %6069 = vmatprep.subr.bf16.mxu0 0
        %6070 = vmatpush2.bf16.msra.mxu0 0
        %6071 = vmatprep.subr.bf16.mxu0 0
        %6072 = vmatpush2.bf16.msra.mxu0 0
        %6073 = vmatprep.subr.bf16.mxu0 0
        %6074 = vmatpush2.bf16.msra.mxu0 0
        %6075 = vmatprep.subr.bf16.mxu0 0
        %6076 = vmatpush2.bf16.msra.mxu0 0
        %6077 = vmatprep.mubr.bf16.mxu0 0
        %6078 = vmatmul.mubr.bf16.gmra.mxu0 %v6034
        %v6079 = vpop.f32.mrf.mxu0
        %v6080 = vadd.f32 0.0, %v6079
        %v6081 = vpop.f32.mrf.mxu0
        %v6082 = vpop.f32.mrf.mxu0
        %v6083 = vadd.f32 0.0, %v6082
        %v6084 = vpop.f32.mrf.mxu0
        %6085 = vmatprep.mubr.bf16.mxu0 0
        %6086 = vmatmul.mubr.bf16.gmra.mxu0 %v6037
        %v6087 = vpop.f32.mrf.mxu0
        %v6088 = vadd.f32 0.0, %v6087
        %v6089 = vpop.f32.mrf.mxu0
        %v6090 = vpop.f32.mrf.mxu0
        %v6091 = vadd.f32 0.0, %v6090
        %v6092 = vpop.f32.mrf.mxu0
        %6093 = vmatprep.mubr.bf16.mxu0 0
        %6094 = vmatmul.mubr.bf16.gmra.mxu0 %v6040
        %v6095 = vpop.f32.mrf.mxu0
        %v6096 = vadd.f32 0.0, %v6095
        %v6097 = vpop.f32.mrf.mxu0
        %v6098 = vpop.f32.mrf.mxu0
        %v6099 = vadd.f32 0.0, %v6098
        %v6100 = vpop.f32.mrf.mxu0
        %6101 = vmatprep.mubr.bf16.mxu0 0
        %6102 = vmatmul.mubr.bf16.gmra.mxu0 %v6043
        %v6103 = vpop.f32.mrf.mxu0
        %v6104 = vadd.f32 0.0, %v6103
        %v6105 = vpop.f32.mrf.mxu0
        %v6106 = vpop.f32.mrf.mxu0
        %v6107 = vadd.f32 0.0, %v6106
        %v6108 = vpop.f32.mrf.mxu0
        %6109 = vdwg.mxu0
        %6110 = vrot.lane.b32.xlu0 %v1023, 32
        %v6111 = vpop.permute.xlu0 %6110
        %6112 = vrot.lane.b32.xlu0 %v1024, 32
        %v6113 = vpop.permute.xlu0 %6112
        %6114 = vrot.lane.b32.xlu0 %v1025, 32
        %v6115 = vpop.permute.xlu0 %6114
        %6116 = vrot.lane.b32.xlu0 %v1026, 32
        %v6117 = vpop.permute.xlu0 %6116
        %v6123 = vsel %vm1388, %v5924, 0
        %v6126 = vsel %vm1388, %v5925, 0
        %v6129 = vsel %vm1388, %v5926, 0
        %v6132 = vsel %vm1388, %v5927, 0
        %6134 = vmatprep.subr.bf16.mxu0 0
        %6135 = vmatpush1.bf16.msra.mxu0 0
        %6136 = vmatprep.subr.bf16.mxu0 0
        %6137 = vmatpush1.bf16.msra.mxu0 0
        %6138 = vmatprep.subr.bf16.mxu0 0
        %6139 = vmatpush1.bf16.msra.mxu0 0
        %6140 = vmatprep.subr.bf16.mxu0 0
        %6141 = vmatpush1.bf16.msra.mxu0 0
        %6142 = vmatprep.subr.bf16.mxu0 0
        %6143 = vmatpush1.bf16.msra.mxu0 %v6117
        %6144 = vmatprep.subr.bf16.mxu0 0
        %6145 = vmatpush1.bf16.msra.mxu0 %v6115
        %6146 = vmatprep.subr.bf16.mxu0 0
        %6147 = vmatpush1.bf16.msra.mxu0 %v6113
        %6148 = vmatprep.subr.bf16.mxu0 0
        %6149 = vmatpush1.bf16.msra.mxu0 %v6111
        %6150 = vmatprep.subr.bf16.mxu0 0
        %6151 = vmatpush2.bf16.msra.mxu0 0
        %6152 = vmatprep.subr.bf16.mxu0 0
        %6153 = vmatpush2.bf16.msra.mxu0 0
        %6154 = vmatprep.subr.bf16.mxu0 0
        %6155 = vmatpush2.bf16.msra.mxu0 0
        %6156 = vmatprep.subr.bf16.mxu0 0
        %6157 = vmatpush2.bf16.msra.mxu0 0
        %6158 = vmatprep.subr.bf16.mxu0 0
        %6159 = vmatpush2.bf16.msra.mxu0 0
        %6160 = vmatprep.subr.bf16.mxu0 0
        %6161 = vmatpush2.bf16.msra.mxu0 0
        %6162 = vmatprep.subr.bf16.mxu0 0
        %6163 = vmatpush2.bf16.msra.mxu0 0
        %6164 = vmatprep.subr.bf16.mxu0 0
        %6165 = vmatpush2.bf16.msra.mxu0 0
        %6166 = vmatprep.mubr.bf16.mxu0 0
        %6167 = vmatmul.mubr.bf16.gmra.mxu0 %v6123
        %v6168 = vpop.f32.mrf.mxu0
        %v6169 = vadd.f32 0.0, %v6168
        %v6170 = vpop.f32.mrf.mxu0
        %v6171 = vpop.f32.mrf.mxu0
        %v6172 = vadd.f32 0.0, %v6171
        %v6173 = vpop.f32.mrf.mxu0
        %6174 = vmatprep.mubr.bf16.mxu0 0
        %6175 = vmatmul.mubr.bf16.gmra.mxu0 %v6126
        %v6176 = vpop.f32.mrf.mxu0
        %v6177 = vadd.f32 0.0, %v6176
        %v6178 = vpop.f32.mrf.mxu0
        %v6179 = vpop.f32.mrf.mxu0
        %v6180 = vadd.f32 0.0, %v6179
        %v6181 = vpop.f32.mrf.mxu0
        %6182 = vmatprep.mubr.bf16.mxu0 0
        %6183 = vmatmul.mubr.bf16.gmra.mxu0 %v6129
        %v6184 = vpop.f32.mrf.mxu0
        %v6185 = vadd.f32 0.0, %v6184
        %v6186 = vpop.f32.mrf.mxu0
        %v6187 = vpop.f32.mrf.mxu0
        %v6188 = vadd.f32 0.0, %v6187
        %v6189 = vpop.f32.mrf.mxu0
        %6190 = vmatprep.mubr.bf16.mxu0 0
        %6191 = vmatmul.mubr.bf16.gmra.mxu0 %v6132
        %v6192 = vpop.f32.mrf.mxu0
        %v6193 = vadd.f32 0.0, %v6192
        %v6194 = vpop.f32.mrf.mxu0
        %v6195 = vpop.f32.mrf.mxu0
        %v6196 = vadd.f32 0.0, %v6195
        %v6197 = vpop.f32.mrf.mxu0
        %6198 = vdwg.mxu0
        %6199 = vrot.lane.b32.xlu0 %v1027, 32
        %v6200 = vpop.permute.xlu0 %6199
        %6201 = vrot.lane.b32.xlu0 %v1028, 32
        %v6202 = vpop.permute.xlu0 %6201
        %6203 = vrot.lane.b32.xlu0 %v1029, 32
        %v6204 = vpop.permute.xlu0 %6203
        %6205 = vrot.lane.b32.xlu0 %v1030, 32
        %v6206 = vpop.permute.xlu0 %6205
        %v6212 = vsel %vm1388, %v5928, 0
        %v6215 = vsel %vm1388, %v5929, 0
        %v6218 = vsel %vm1388, %v5930, 0
        %v6221 = vsel %vm1388, %v5931, 0
        %6223 = vmatprep.subr.bf16.mxu0 0
        %6224 = vmatpush1.bf16.msra.mxu0 0
        %6225 = vmatprep.subr.bf16.mxu0 0
        %6226 = vmatpush1.bf16.msra.mxu0 0
        %6227 = vmatprep.subr.bf16.mxu0 0
        %6228 = vmatpush1.bf16.msra.mxu0 0
        %6229 = vmatprep.subr.bf16.mxu0 0
        %6230 = vmatpush1.bf16.msra.mxu0 0
        %6231 = vmatprep.subr.bf16.mxu0 0
        %6232 = vmatpush1.bf16.msra.mxu0 %v6206
        %6233 = vmatprep.subr.bf16.mxu0 0
        %6234 = vmatpush1.bf16.msra.mxu0 %v6204
        %6235 = vmatprep.subr.bf16.mxu0 0
        %6236 = vmatpush1.bf16.msra.mxu0 %v6202
        %6237 = vmatprep.subr.bf16.mxu0 0
        %6238 = vmatpush1.bf16.msra.mxu0 %v6200
        %6239 = vmatprep.subr.bf16.mxu0 0
        %6240 = vmatpush2.bf16.msra.mxu0 0
        %6241 = vmatprep.subr.bf16.mxu0 0
        %6242 = vmatpush2.bf16.msra.mxu0 0
        %6243 = vmatprep.subr.bf16.mxu0 0
        %6244 = vmatpush2.bf16.msra.mxu0 0
        %6245 = vmatprep.subr.bf16.mxu0 0
        %6246 = vmatpush2.bf16.msra.mxu0 0
        %6247 = vmatprep.subr.bf16.mxu0 0
        %6248 = vmatpush2.bf16.msra.mxu0 0
        %6249 = vmatprep.subr.bf16.mxu0 0
        %6250 = vmatpush2.bf16.msra.mxu0 0
        %6251 = vmatprep.subr.bf16.mxu0 0
        %6252 = vmatpush2.bf16.msra.mxu0 0
        %6253 = vmatprep.subr.bf16.mxu0 0
        %6254 = vmatpush2.bf16.msra.mxu0 0
        %6255 = vmatprep.mubr.bf16.mxu0 0
        %6256 = vmatmul.mubr.bf16.gmra.mxu0 %v6212
        %v6257 = vpop.f32.mrf.mxu0
        %v6258 = vadd.f32 0.0, %v6257
        %v6259 = vpop.f32.mrf.mxu0
        %v6260 = vpop.f32.mrf.mxu0
        %v6261 = vadd.f32 0.0, %v6260
        %v6262 = vpop.f32.mrf.mxu0
        %6263 = vmatprep.mubr.bf16.mxu0 0
        %6264 = vmatmul.mubr.bf16.gmra.mxu0 %v6215
        %v6265 = vpop.f32.mrf.mxu0
        %v6266 = vadd.f32 0.0, %v6265
        %v6267 = vpop.f32.mrf.mxu0
        %v6268 = vpop.f32.mrf.mxu0
        %v6269 = vadd.f32 0.0, %v6268
        %v6270 = vpop.f32.mrf.mxu0
        %6271 = vmatprep.mubr.bf16.mxu0 0
        %6272 = vmatmul.mubr.bf16.gmra.mxu0 %v6218
        %v6273 = vpop.f32.mrf.mxu0
        %v6274 = vadd.f32 0.0, %v6273
        %v6275 = vpop.f32.mrf.mxu0
        %v6276 = vpop.f32.mrf.mxu0
        %v6277 = vadd.f32 0.0, %v6276
        %v6278 = vpop.f32.mrf.mxu0
        %6279 = vmatprep.mubr.bf16.mxu0 0
        %6280 = vmatmul.mubr.bf16.gmra.mxu0 %v6221
        %v6281 = vpop.f32.mrf.mxu0
        %v6282 = vadd.f32 0.0, %v6281
        %v6283 = vpop.f32.mrf.mxu0
        %v6284 = vpop.f32.mrf.mxu0
        %v6285 = vadd.f32 0.0, %v6284
        %v6286 = vpop.f32.mrf.mxu0
        %6287 = vdwg.mxu0
        %v6288 = vpack.c.bf16 %v5994, %v5991
        %v6289 = vpack.c.bf16 %v6002, %v5999
        %v6290 = vpack.c.bf16 %v6010, %v6007
        %v6291 = vpack.c.bf16 %v6018, %v6015
        %v6292 = vpack.c.bf16 %v6083, %v6080
        %v6293 = vpack.c.bf16 %v6091, %v6088
        %v6294 = vpack.c.bf16 %v6099, %v6096
        %v6295 = vpack.c.bf16 %v6107, %v6104
        %v6296 = vpack.c.bf16 %v6172, %v6169
        %v6297 = vpack.c.bf16 %v6180, %v6177
        %v6298 = vpack.c.bf16 %v6188, %v6185
        %v6299 = vpack.c.bf16 %v6196, %v6193
        %v6300 = vpack.c.bf16 %v6261, %v6258
        %v6301 = vpack.c.bf16 %v6269, %v6266
        %v6302 = vpack.c.bf16 %v6277, %v6274
        %v6303 = vpack.c.bf16 %v6285, %v6282
        %v6308 = vunpack.c.l.b16 %v947
        %v6309 = vunpack.c.l.b16 %v948
        %v6310 = vunpack.c.l.b16 %v949
        %v6311 = vunpack.c.l.b16 %v950
        %v6312 = vpack.c.b16 %v6309, %v6308
        %v6313 = vpack.c.b16 %v6311, %v6310
        %v6317 = vsel %vm1031, %v6288, 0
        %v6320 = vsel %vm1031, %v6289, 0
        %v6323 = vsel %vm1031, %v6290, 0
        %v6326 = vsel %vm1031, %v6291, 0
        %v6329 = vsel %vm1031, %v6292, 0
        %v6332 = vsel %vm1031, %v6293, 0
        %v6335 = vsel %vm1031, %v6294, 0
        %v6338 = vsel %vm1031, %v6295, 0
        %v6341 = vsel %vm1031, %v6296, 0
        %v6344 = vsel %vm1031, %v6297, 0
        %v6347 = vsel %vm1031, %v6298, 0
        %v6350 = vsel %vm1031, %v6299, 0
        %v6353 = vsel %vm1031, %v6300, 0
        %v6356 = vsel %vm1031, %v6301, 0
        %v6359 = vsel %vm1031, %v6302, 0
        %v6362 = vsel %vm1031, %v6303, 0
        %6364 = vmatprep.subr.bf16.mxu0 0
        %6365 = vmatpush1.bf16.msra.mxu0 0
        %6366 = vmatprep.subr.bf16.mxu0 0
        %6367 = vmatpush1.bf16.msra.mxu0 0
        %6368 = vmatprep.subr.bf16.mxu0 0
        %6369 = vmatpush1.bf16.msra.mxu0 0
        %6370 = vmatprep.subr.bf16.mxu0 0
        %6371 = vmatpush1.bf16.msra.mxu0 0
        %6372 = vmatprep.subr.bf16.mxu0 0
        %6373 = vmatpush1.bf16.msra.mxu0 0
        %6374 = vmatprep.subr.bf16.mxu0 0
        %6375 = vmatpush1.bf16.msra.mxu0 0
        %6376 = vmatprep.subr.bf16.mxu0 0
        %6377 = vmatpush1.bf16.msra.mxu0 %v6313
        %6378 = vmatprep.subr.bf16.mxu0 0
        %6379 = vmatpush1.bf16.msra.mxu0 %v6312
        %6380 = vmatprep.subr.bf16.mxu0 0
        %6381 = vmatpush2.bf16.msra.mxu0 0
        %6382 = vmatprep.subr.bf16.mxu0 0
        %6383 = vmatpush2.bf16.msra.mxu0 0
        %6384 = vmatprep.subr.bf16.mxu0 0
        %6385 = vmatpush2.bf16.msra.mxu0 0
        %6386 = vmatprep.subr.bf16.mxu0 0
        %6387 = vmatpush2.bf16.msra.mxu0 0
        %6388 = vmatprep.subr.bf16.mxu0 0
        %6389 = vmatpush2.bf16.msra.mxu0 0
        %6390 = vmatprep.subr.bf16.mxu0 0
        %6391 = vmatpush2.bf16.msra.mxu0 0
        %6392 = vmatprep.subr.bf16.mxu0 0
        %6393 = vmatpush2.bf16.msra.mxu0 0
        %6394 = vmatprep.subr.bf16.mxu0 0
        %6395 = vmatpush2.bf16.msra.mxu0 0
        %6396 = vmatprep.mubr.bf16.mxu0 0
        %6397 = vmatmul.mubr.bf16.gmra.mxu0 %v6317
        %v6398 = vpop.f32.mrf.mxu0
        %v6399 = vadd.f32 0.0, %v6398
        %v6400 = vpop.f32.mrf.mxu0
        %v6401 = vpop.f32.mrf.mxu0
        %v6402 = vadd.f32 0.0, %v6401
        %v6403 = vpop.f32.mrf.mxu0
        %6404 = vmatprep.mubr.bf16.mxu0 0
        %6405 = vmatmul.mubr.bf16.gmra.mxu0 %v6320
        %v6406 = vpop.f32.mrf.mxu0
        %v6407 = vadd.f32 0.0, %v6406
        %v6408 = vpop.f32.mrf.mxu0
        %v6409 = vpop.f32.mrf.mxu0
        %v6410 = vadd.f32 0.0, %v6409
        %v6411 = vpop.f32.mrf.mxu0
        %6412 = vmatprep.mubr.bf16.mxu0 0
        %6413 = vmatmul.mubr.bf16.gmra.mxu0 %v6323
        %v6414 = vpop.f32.mrf.mxu0
        %v6415 = vadd.f32 0.0, %v6414
        %v6416 = vpop.f32.mrf.mxu0
        %v6417 = vpop.f32.mrf.mxu0
        %v6418 = vadd.f32 0.0, %v6417
        %v6419 = vpop.f32.mrf.mxu0
        %6420 = vmatprep.mubr.bf16.mxu0 0
        %6421 = vmatmul.mubr.bf16.gmra.mxu0 %v6326
        %v6422 = vpop.f32.mrf.mxu0
        %v6423 = vadd.f32 0.0, %v6422
        %v6424 = vpop.f32.mrf.mxu0
        %v6425 = vpop.f32.mrf.mxu0
        %v6426 = vadd.f32 0.0, %v6425
        %v6427 = vpop.f32.mrf.mxu0
        %6428 = vmatprep.mubr.bf16.mxu0 0
        %6429 = vmatmul.mubr.bf16.gmra.mxu0 %v6329
        %v6430 = vpop.f32.mrf.mxu0
        %v6431 = vadd.f32 0.0, %v6430
        %v6432 = vpop.f32.mrf.mxu0
        %v6433 = vpop.f32.mrf.mxu0
        %v6434 = vadd.f32 0.0, %v6433
        %v6435 = vpop.f32.mrf.mxu0
        %6436 = vmatprep.mubr.bf16.mxu0 0
        %6437 = vmatmul.mubr.bf16.gmra.mxu0 %v6332
        %v6438 = vpop.f32.mrf.mxu0
        %v6439 = vadd.f32 0.0, %v6438
        %v6440 = vpop.f32.mrf.mxu0
        %v6441 = vpop.f32.mrf.mxu0
        %v6442 = vadd.f32 0.0, %v6441
        %v6443 = vpop.f32.mrf.mxu0
        %6444 = vmatprep.mubr.bf16.mxu0 0
        %6445 = vmatmul.mubr.bf16.gmra.mxu0 %v6335
        %v6446 = vpop.f32.mrf.mxu0
        %v6447 = vadd.f32 0.0, %v6446
        %v6448 = vpop.f32.mrf.mxu0
        %v6449 = vpop.f32.mrf.mxu0
        %v6450 = vadd.f32 0.0, %v6449
        %v6451 = vpop.f32.mrf.mxu0
        %6452 = vmatprep.mubr.bf16.mxu0 0
        %6453 = vmatmul.mubr.bf16.gmra.mxu0 %v6338
        %v6454 = vpop.f32.mrf.mxu0
        %v6455 = vadd.f32 0.0, %v6454
        %v6456 = vpop.f32.mrf.mxu0
        %v6457 = vpop.f32.mrf.mxu0
        %v6458 = vadd.f32 0.0, %v6457
        %v6459 = vpop.f32.mrf.mxu0
        %6460 = vmatprep.mubr.bf16.mxu0 0
        %6461 = vmatmul.mubr.bf16.gmra.mxu0 %v6341
        %v6462 = vpop.f32.mrf.mxu0
        %v6463 = vadd.f32 0.0, %v6462
        %v6464 = vpop.f32.mrf.mxu0
        %v6465 = vpop.f32.mrf.mxu0
        %v6466 = vadd.f32 0.0, %v6465
        %v6467 = vpop.f32.mrf.mxu0
        %6468 = vmatprep.mubr.bf16.mxu0 0
        %6469 = vmatmul.mubr.bf16.gmra.mxu0 %v6344
        %v6470 = vpop.f32.mrf.mxu0
        %v6471 = vadd.f32 0.0, %v6470
        %v6472 = vpop.f32.mrf.mxu0
        %v6473 = vpop.f32.mrf.mxu0
        %v6474 = vadd.f32 0.0, %v6473
        %v6475 = vpop.f32.mrf.mxu0
        %6476 = vmatprep.mubr.bf16.mxu0 0
        %6477 = vmatmul.mubr.bf16.gmra.mxu0 %v6347
        %v6478 = vpop.f32.mrf.mxu0
        %v6479 = vadd.f32 0.0, %v6478
        %v6480 = vpop.f32.mrf.mxu0
        %v6481 = vpop.f32.mrf.mxu0
        %v6482 = vadd.f32 0.0, %v6481
        %v6483 = vpop.f32.mrf.mxu0
        %6484 = vmatprep.mubr.bf16.mxu0 0
        %6485 = vmatmul.mubr.bf16.gmra.mxu0 %v6350
        %v6486 = vpop.f32.mrf.mxu0
        %v6487 = vadd.f32 0.0, %v6486
        %v6488 = vpop.f32.mrf.mxu0
        %v6489 = vpop.f32.mrf.mxu0
        %v6490 = vadd.f32 0.0, %v6489
        %v6491 = vpop.f32.mrf.mxu0
        %6492 = vmatprep.mubr.bf16.mxu0 0
        %6493 = vmatmul.mubr.bf16.gmra.mxu0 %v6353
        %v6494 = vpop.f32.mrf.mxu0
        %v6495 = vadd.f32 0.0, %v6494
        %v6496 = vpop.f32.mrf.mxu0
        %v6497 = vpop.f32.mrf.mxu0
        %v6498 = vadd.f32 0.0, %v6497
        %v6499 = vpop.f32.mrf.mxu0
        %6500 = vmatprep.mubr.bf16.mxu0 0
        %6501 = vmatmul.mubr.bf16.gmra.mxu0 %v6356
        %v6502 = vpop.f32.mrf.mxu0
        %v6503 = vadd.f32 0.0, %v6502
        %v6504 = vpop.f32.mrf.mxu0
        %v6505 = vpop.f32.mrf.mxu0
        %v6506 = vadd.f32 0.0, %v6505
        %v6507 = vpop.f32.mrf.mxu0
        %6508 = vmatprep.mubr.bf16.mxu0 0
        %6509 = vmatmul.mubr.bf16.gmra.mxu0 %v6359
        %v6510 = vpop.f32.mrf.mxu0
        %v6511 = vadd.f32 0.0, %v6510
        %v6512 = vpop.f32.mrf.mxu0
        %v6513 = vpop.f32.mrf.mxu0
        %v6514 = vadd.f32 0.0, %v6513
        %v6515 = vpop.f32.mrf.mxu0
        %6516 = vmatprep.mubr.bf16.mxu0 0
        %6517 = vmatmul.mubr.bf16.gmra.mxu0 %v6362
        %v6518 = vpop.f32.mrf.mxu0
        %v6519 = vadd.f32 0.0, %v6518
        %v6520 = vpop.f32.mrf.mxu0
        %v6521 = vpop.f32.mrf.mxu0
        %v6522 = vadd.f32 0.0, %v6521
        %v6523 = vpop.f32.mrf.mxu0
        %6524 = vdwg.mxu0
        %v6525 = vadd.f32 %v5112, %v6399
        %v6526 = vadd.f32 %v5113, %v6402
        %v6527 = vadd.f32 %v5114, %v6407
        %v6528 = vadd.f32 %v5115, %v6410
        %v6529 = vadd.f32 %v5116, %v6415
        %v6530 = vadd.f32 %v5117, %v6418
        %v6531 = vadd.f32 %v5118, %v6423
        %v6532 = vadd.f32 %v5119, %v6426
        %v6533 = vadd.f32 %v5120, %v6431
        %v6534 = vadd.f32 %v5121, %v6434
        %v6535 = vadd.f32 %v5122, %v6439
        %v6536 = vadd.f32 %v5123, %v6442
        %v6537 = vadd.f32 %v5124, %v6447
        %v6538 = vadd.f32 %v5125, %v6450
        %v6539 = vadd.f32 %v5126, %v6455
        %v6540 = vadd.f32 %v5127, %v6458
        %v6541 = vadd.f32 %v5128, %v6463
        %v6542 = vadd.f32 %v5129, %v6466
        %v6543 = vadd.f32 %v5130, %v6471
        %v6544 = vadd.f32 %v5131, %v6474
        %v6545 = vadd.f32 %v5132, %v6479
        %v6546 = vadd.f32 %v5133, %v6482
        %v6547 = vadd.f32 %v5134, %v6487
        %v6548 = vadd.f32 %v5135, %v6490
        %v6549 = vadd.f32 %v5136, %v6495
        %v6550 = vadd.f32 %v5137, %v6498
        %v6551 = vadd.f32 %v5138, %v6503
        %v6552 = vadd.f32 %v5139, %v6506
        %v6553 = vadd.f32 %v5140, %v6511
        %v6554 = vadd.f32 %v5141, %v6514
        %v6555 = vadd.f32 %v5142, %v6519
        %v6556 = vadd.f32 %v5143, %v6522
        %v6557 = vld [vmem:[%s4] sm:$0x1]
        %v6559 = vlaneseq
        %v6560 = vshrl.u32 %v6559, 7
        %v6561 = vsub.s32 0, %v6560
        %v6562 = vrot.slane %v6557, %v6561
        %v6564 = vadd.f32 %v6525, %v6562
        %v6565 = vadd.f32 %v6526, %v6562
        %v6566 = vadd.f32 %v6527, %v6562
        %v6567 = vadd.f32 %v6528, %v6562
        %v6568 = vadd.f32 %v6529, %v6562
        %v6569 = vadd.f32 %v6530, %v6562
        %v6570 = vadd.f32 %v6531, %v6562
        %v6571 = vadd.f32 %v6532, %v6562
        %v6572 = vadd.f32 %v6533, %v6562
        %v6573 = vadd.f32 %v6534, %v6562
        %v6574 = vadd.f32 %v6535, %v6562
        %v6575 = vadd.f32 %v6536, %v6562
        %v6576 = vadd.f32 %v6537, %v6562
        %v6577 = vadd.f32 %v6538, %v6562
        %v6578 = vadd.f32 %v6539, %v6562
        %v6579 = vadd.f32 %v6540, %v6562
        %v6580 = vadd.f32 %v6541, %v6562
        %v6581 = vadd.f32 %v6542, %v6562
        %v6582 = vadd.f32 %v6543, %v6562
        %v6583 = vadd.f32 %v6544, %v6562
        %v6584 = vadd.f32 %v6545, %v6562
        %v6585 = vadd.f32 %v6546, %v6562
        %v6586 = vadd.f32 %v6547, %v6562
        %v6587 = vadd.f32 %v6548, %v6562
        %v6588 = vadd.f32 %v6549, %v6562
        %v6589 = vadd.f32 %v6550, %v6562
        %v6590 = vadd.f32 %v6551, %v6562
        %v6591 = vadd.f32 %v6552, %v6562
        %v6592 = vadd.f32 %v6553, %v6562
        %v6593 = vadd.f32 %v6554, %v6562
        %v6594 = vadd.f32 %v6555, %v6562
        %v6595 = vadd.f32 %v6556, %v6562
        %6596 = vst [vmem:[%s272] sm:$0xff] %v6564
        %6597 = vst [vmem:[%s272 + $0x8] sm:$0xff] %v6565
        %6598 = vst [vmem:[%s272 + $0x10] sm:$0xff] %v6566
        %6599 = vst [vmem:[%s272 + $0x18] sm:$0xff] %v6567
        %6600 = vst [vmem:[%s272 + $0x20] sm:$0xff] %v6568
        %6601 = vst [vmem:[%s272 + $0x28] sm:$0xff] %v6569
        %6602 = vst [vmem:[%s272 + $0x30] sm:$0xff] %v6570
        %6603 = vst [vmem:[%s272 + $0x38] sm:$0xff] %v6571
        %6604 = vst [vmem:[%s272 + $0x40] sm:$0xff] %v6572
        %6605 = vst [vmem:[%s272 + $0x48] sm:$0xff] %v6573
        %6606 = vst [vmem:[%s272 + $0x50] sm:$0xff] %v6574
        %6607 = vst [vmem:[%s272 + $0x58] sm:$0xff] %v6575
        %6608 = vst [vmem:[%s272 + $0x60] sm:$0xff] %v6576
        %6609 = vst [vmem:[%s272 + $0x68] sm:$0xff] %v6577
        %6610 = vst [vmem:[%s272 + $0x70] sm:$0xff] %v6578
        %6611 = vst [vmem:[%s272 + $0x78] sm:$0xff] %v6579
        %6612 = vst [vmem:[%s272 + $0x80] sm:$0xff] %v6580
        %6613 = vst [vmem:[%s272 + $0x88] sm:$0xff] %v6581
        %6614 = vst [vmem:[%s272 + $0x90] sm:$0xff] %v6582
        %6615 = vst [vmem:[%s272 + $0x98] sm:$0xff] %v6583
        %6616 = vst [vmem:[%s272 + $0xa0] sm:$0xff] %v6584
        %6617 = vst [vmem:[%s272 + $0xa8] sm:$0xff] %v6585
        %6618 = vst [vmem:[%s272 + $0xb0] sm:$0xff] %v6586
        %6619 = vst [vmem:[%s272 + $0xb8] sm:$0xff] %v6587
        %6620 = vst [vmem:[%s272 + $0xc0] sm:$0xff] %v6588
        %6621 = vst [vmem:[%s272 + $0xc8] sm:$0xff] %v6589
        %6622 = vst [vmem:[%s272 + $0xd0] sm:$0xff] %v6590
        %6623 = vst [vmem:[%s272 + $0xd8] sm:$0xff] %v6591
        %6624 = vst [vmem:[%s272 + $0xe0] sm:$0xff] %v6592
        %6625 = vst [vmem:[%s272 + $0xe8] sm:$0xff] %v6593
        %6626 = vst [vmem:[%s272 + $0xf0] sm:$0xff] %v6594
        %6627 = vst [vmem:[%s272 + $0xf8] sm:$0xff] %v6595
        %s6628 = sand.u32 %s141, 1
        %s6629 = scalar_lea.sflag [#allocation4], %s6628
        %s6630 = sand.u32 %s141, 1
        %s6631 = smul.addr %s6630, 256
        %s6632 = scalar_lea.vmem [#allocation8], %s6631
        // Predicated region
        $region53: #{tpu_custom_call.1} parent=39 // pred_check
          %p6633 = pneg %p151
        $region54: #{tpu_custom_call.1} parent=39 // pred_check_branch
          %6635 = sbr.rel (%p6633) target = $region56
        $region55: #{tpu_custom_call.1} parent=39 // pred_region
          %s6636 = smul.u32 4, %s23
          %s6638 = ssub.s32 4096, 4096
          %6639 = vsyncadd %s6629, %s6638
          %s6640 = smul.addr %s6636, 8
          %s6641 = smul.addr %s6640, 128
          %s6642 = scalar_lea.hbm %s5, %s6641
          %s6643 = sshll.u32 %s6632, 4
          %s6644 = int_to_ptr.vmem [resolvable:$true] %s6643
          %6649 = dma.vmem_to_hbm [thread:$0]  %s6644, 4096, %s6642, %s6629, 128, 128, 8
        $region56: #{tpu_custom_call.1} parent=39 // pred_fallthru
          _
      $region40: #{tpu_custom_call.1} parent=5 // pred_fallthru
        _
      %p6650 = scmp.le.s32.totalorder 2, %s18
      // Predicated region
      $region57: #{tpu_custom_call.1} parent=5 // pred_check
        %p6651 = pneg %p6650
      $region58: #{tpu_custom_call.1} parent=5 // pred_check_branch
        %6653 = sbr.rel (%p6651) target = $region60
      $region59: #{tpu_custom_call.1} parent=5 // pred_region
        %s6654 = ssub.s32 %s18, 2
        // Predicated region
        $region61: #{tpu_custom_call.1} parent=59 // pred_check
          %p6655 = pneg %p157
        $region62: #{tpu_custom_call.1} parent=59 // pred_check_branch
          %6657 = sbr.rel (%p6655) target = $region64
        $region63: #{tpu_custom_call.1} parent=59 // pred_region
          %s6658 = sand.u32 %s142, 1
          %s6659 = scalar_lea.sflag [#allocation4], %s6658
          %s6660 = sand.u32 %s142, 1
          %s6661 = smul.addr %s6660, 256
          %s6662 = scalar_lea.vmem [#allocation8], %s6661
          %6663 = dma.done %s6659, 4096
        $region64: #{tpu_custom_call.1} parent=59 // pred_fallthru
          _
      $region60: #{tpu_custom_call.1} parent=5 // pred_fallthru
        _
    $region6: #{tpu_custom_call.1} parent=1 // loop_footer
      %s22 = sadd.s32 1, %s18
    $region7: #{tpu_custom_call.1} parent=1 // loop_footer_branch
      %17 = sbr.rel target = $region3
    $region8: #{tpu_custom_call.1} parent=1 // loop_exit
      _
    %6664 = vsyncpa [#allocation3], 1
    %s6665 = scalar_lea.sflag [#allocation3], 1
    %6666 = vsyncpa %s6665, 1
    %6667 = vsyncpa [#allocation6], 1
    %6668 = vsyncpa [#allocation4], 1
    %s6669 = scalar_lea.sflag [#allocation4], 1
    %6670 = vsyncpa %s6669, 1

</llo_original>
